<compile_context>
chip_gen: v7x
topology: tpu7x:2x2x1
jax: 0.10.0
libtpu: 0.0.40
codegen_flags: <defaults>
</compile_context>

<pallas_src>
import math
import functools

import jax
import jax.numpy as jnp
from jax.experimental import pallas as pl
from jax.experimental.pallas import tpu as pltpu


# ----------------------------- kernel helpers ------------------------------

def _layernorm(x, g, b, eps=1e-5):
    mu = jnp.mean(x, axis=-1, keepdims=True)
    var = jnp.mean((x - mu) ** 2, axis=-1, keepdims=True)
    return (x - mu) * jax.lax.rsqrt(var + eps) * g + b


# ------------------------------ fused kernel -------------------------------

def fused_decoder_kernel(x_ref,
                         ln1_g_ref, ln1_b_ref, w_in_ref, b_in_ref,
                         w_out_ref, b_out_ref,
                         ln2_g_ref, ln2_b_ref, w1_ref, b1_ref, w2_ref, b2_ref,
                         lnf_g_ref, lnf_b_ref, wc_ref, bc_ref,
                         o_ref,
                         resid_ref,
                         *, nhead):
    """One decoder layer per grid step; final LN + classify on the last step.

    x_ref:     (N, L, E) f32 embeddings (read only at layer 0)
    *_ref:     current layer's weights (pre-transposed, big ones bf16)
    lnf/wc/bc: final LayerNorm + classifier params
    o_ref:     (N, L, V) f32 logits (written only on the last layer step)
    resid_ref: (N*L, E) f32 VMEM scratch carrying the residual stream
    """
    layer = pl.program_id(0)
    N, L, E = x_ref.shape
    NL = N * L
    dh = E // nhead
    V = wc_ref.shape[1]

    @pl.when(layer == 0)
    def _():
        resid_ref[...] = x_ref[...].reshape(NL, E)

    x = resid_ref[...]                                           # (NL, E) f32

    # ---- pre-LN multi-head self-attention (eval: dropout = identity) ----
    nx = _layernorm(x, ln1_g_ref[...], ln1_b_ref[...])
    # one big QKV projection for the whole flattened batch (bf16 MXU, f32 acc);
    # 1/sqrt(dh) is already folded into the Q columns of w_in / b_in.
    qkv = (jnp.dot(nx.astype(jnp.bfloat16), w_in_ref[...],
                   preferred_element_type=jnp.float32) + b_in_ref[...])  # (NL, 3E)

    # causal mask built in-kernel (row >= col)
    row = jax.lax.broadcasted_iota(jnp.int32, (L, L), 0)
    col = jax.lax.broadcasted_iota(jnp.int32, (L, L), 1)
    causal = (row >= col)[None]                                  # (1, L, L)

    attn = jnp.zeros((NL, E), jnp.float32)
    for h in range(nhead):                                       # static, small
        q = qkv[:, 0 * E + h * dh: 0 * E + (h + 1) * dh].reshape(N, L, dh)
        k = qkv[:, 1 * E + h * dh: 1 * E + (h + 1) * dh].reshape(N, L, dh)
        v = qkv[:, 2 * E + h * dh: 2 * E + (h + 1) * dh].reshape(N, L, dh)

        s = jnp.einsum('bqd,bkd->bqk',
                       q.astype(jnp.bfloat16), k.astype(jnp.bfloat16),
                       preferred_element_type=jnp.float32)       # (N, L, L)
        s = jnp.where(causal, s, jnp.float32(-1e30))
        m = jnp.max(s, axis=-1, keepdims=True)
        p = jnp.exp(s - m)
        p = p * pl.reciprocal(jnp.sum(p, axis=-1, keepdims=True), approx=True)

        ctx = jnp.einsum('bqk,bkd->bqd',
                         p.astype(jnp.bfloat16), v.astype(jnp.bfloat16),
                         preferred_element_type=jnp.float32)     # (N, L, dh)
        # fold the output projection per head (no lane-dim concat); f32 matmul
        # over a tiny K=dh keeps full precision on the attention output.
        attn = attn + jnp.dot(ctx.reshape(NL, dh),
                              w_out_ref[h * dh:(h + 1) * dh, :],
                              preferred_element_type=jnp.float32)
    x = x + attn + b_out_ref[...]

    # ---- pre-LN feed-forward (eval: dropout = identity) ----
    nx = _layernorm(x, ln2_g_ref[...], ln2_b_ref[...])
    h1 = jnp.maximum(
        jnp.dot(nx.astype(jnp.bfloat16), w1_ref[...],
                preferred_element_type=jnp.float32) + b1_ref[...], 0.0)
    ffn = (jnp.dot(h1.astype(jnp.bfloat16), w2_ref[...],
                   preferred_element_type=jnp.float32) + b2_ref[...])
    x = x + ffn
    resid_ref[...] = x

    # ---- final LayerNorm + classifier on the last layer step ----
    @pl.when(layer == pl.num_programs(0) - 1)
    def _():
        nxf = _layernorm(x, lnf_g_ref[...], lnf_b_ref[...])
        logits = (jnp.dot(nxf.astype(jnp.bfloat16), wc_ref[...],
                          preferred_element_type=jnp.float32) + bc_ref[...])
        o_ref[...] = logits.reshape(N, L, V)


# -------------------------------- wrapper -----------------------------------

def fused_forward(x_nle, p, nhead):
    N, L, E = x_nle.shape
    num_layers = p["w_in"].shape[0]
    V = p["wc"].shape[1]

    def stacked_spec(a):
        # per-layer slice of a (num_layers, r, c) stacked array; kernel sees (r, c)
        return pl.BlockSpec((None,) + tuple(a.shape[1:]), lambda l: (l, 0, 0))

    def full_spec(a):
        return pl.BlockSpec(tuple(a.shape), lambda l: (0,) * a.ndim)

    layer_args = (p["ln1_g"], p["ln1_b"], p["w_in"], p["b_in"],
                  p["w_out"], p["b_out"],
                  p["ln2_g"], p["ln2_b"], p["w1"], p["b1"], p["w2"], p["b2"])
    head_args = (p["lnf_g"], p["lnf_b"], p["wc"], p["bc"])

    in_specs = ([pl.BlockSpec((N, L, E), lambda l: (0, 0, 0))]
                + [stacked_spec(a) for a in layer_args]
                + [full_spec(a) for a in head_args])

    return pl.pallas_call(
        functools.partial(fused_decoder_kernel, nhead=nhead),
        out_shape=jax.ShapeDtypeStruct((N, L, V), jnp.float32),
        grid=(num_layers,),
        in_specs=in_specs,
        out_specs=pl.BlockSpec((N, L, V), lambda l: (0, 0, 0)),
        scratch_shapes=[pltpu.VMEM((N * L, E), jnp.float32)],
        compiler_params=pltpu.CompilerParams(
            dimension_semantics=("arbitrary",)),
    )(x_nle, *layer_args, *head_args)


def transformer_decoder_only_forward(tokens_ln, prepared, nhead):
    """tokens_ln: (L, N) int32 token ids -> logits (L, N, vocab) float32."""
    emb = prepared["embedding"]
    E = emb.shape[1]
    x = emb[tokens_ln] * math.sqrt(E)          # (L, N, E) embedding + scale (glue)
    x = jnp.transpose(x, (1, 0, 2))            # -> (N, L, E) kernel layout
    logits = fused_forward(x, prepared, nhead)  # (N, L, V)
    return jnp.transpose(logits, (1, 0, 2))    # (L, N, V) PyTorch order


# --------------------------- parameter creation -----------------------------

def _xavier_uniform(key, shape):
    fan_out, fan_in = shape
    a = math.sqrt(6.0 / (fan_in + fan_out))
    return jax.random.uniform(key, shape, jnp.float32, -a, a)


def make_params(key, vocab_size, hidden_size, nhead, num_layers, ffn_hidden_size):
    """PyTorch-layout parameters ((out, in) weights), matching the module."""
    E, F, V = hidden_size, ffn_hidden_size, vocab_size
    keys = jax.random.split(key, 2 + 4 * num_layers)
    ki = iter(keys)
    params = {
        "embedding": _xavier_uniform(next(ki), (V, E)),
        "ln_g": jnp.ones((1, E), jnp.float32),
        "ln_b": jnp.zeros((1, E), jnp.float32),
        "wc": _xavier_uniform(next(ki), (V, E)),
        "bc": jnp.zeros((1, V), jnp.float32),
        "layers": [],
    }
    for _ in range(num_layers):
        params["layers"].append({
            "ln1_g": jnp.ones((1, E), jnp.float32),
            "ln1_b": jnp.zeros((1, E), jnp.float32),
            "w_in": _xavier_uniform(next(ki), (3 * E, E)),
            "b_in": jnp.zeros((1, 3 * E), jnp.float32),
            "w_out": _xavier_uniform(next(ki), (E, E)),
            "b_out": jnp.zeros((1, E), jnp.float32),
            "ln2_g": jnp.ones((1, E), jnp.float32),
            "ln2_b": jnp.zeros((1, E), jnp.float32),
            "w1": _xavier_uniform(next(ki), (F, E)),
            "b1": jnp.zeros((1, F), jnp.float32),
            "w2": _xavier_uniform(next(ki), (E, F)),
            "b2": jnp.zeros((1, E), jnp.float32),
        })
    return params


def prepare_params(raw, nhead):
    """Host-side prep: stack layers, pre-transpose to (in, out), fold the
    1/sqrt(dh) attention scale into Q, cast big matmul operands to bf16."""
    E = raw["embedding"].shape[1]
    dh = E // nhead
    scale = 1.0 / math.sqrt(dh)
    layers = raw["layers"]

    def stack(name):
        return jnp.stack([lp[name] for lp in layers], axis=0)

    w_in = jnp.stack([lp["w_in"].T for lp in layers], axis=0)       # (Ly, E, 3E)
    w_in = w_in.at[:, :, :E].multiply(scale)                        # fold scale into Q
    b_in = stack("b_in")                                            # (Ly, 1, 3E)
    b_in = b_in.at[:, :, :E].multiply(scale)

    return {
        "embedding": raw["embedding"],
        "ln1_g": stack("ln1_g"), "ln1_b": stack("ln1_b"),
        "w_in": w_in.astype(jnp.bfloat16), "b_in": b_in,
        "w_out": jnp.stack([lp["w_out"].T for lp in layers], axis=0),  # f32 (row-sliced per head)
        "b_out": stack("b_out"),
        "ln2_g": stack("ln2_g"), "ln2_b": stack("ln2_b"),
        "w1": jnp.stack([lp["w1"].T for lp in layers], axis=0).astype(jnp.bfloat16),
        "b1": stack("b1"),
        "w2": jnp.stack([lp["w2"].T for lp in layers], axis=0).astype(jnp.bfloat16),
        "b2": stack("b2"),
        "lnf_g": raw["ln_g"], "lnf_b": raw["ln_b"],
        "wc": raw["wc"].T.astype(jnp.bfloat16),                     # (E, V)
        "bc": raw["bc"],
    }


# --------------------------- pure-JAX f32 reference --------------------------

def reference_forward(tokens_ln, raw, nhead):
    emb = raw["embedding"]
    E = emb.shape[1]
    dh = E // nhead
    L = tokens_ln.shape[0]
    x = emb[tokens_ln] * math.sqrt(E)                               # (L, N, E)
    mask = jnp.where(jnp.tril(jnp.ones((L, L), bool)),
                     jnp.float32(0.0), -jnp.inf).astype(jnp.float32)

    def ln(v, g, b):
        mu = jnp.mean(v, -1, keepdims=True)
        var = jnp.mean((v - mu) ** 2, -1, keepdims=True)
        return (v - mu) * jax.lax.rsqrt(var + 1e-5) * g + b

    for lp in raw["layers"]:
        nx = ln(x, lp["ln1_g"], lp["ln1_b"])
        qkv = nx @ lp["w_in"].T + lp["b_in"]                        # (L, N, 3E)
        q, k, v = qkv[..., :E], qkv[..., E:2 * E], qkv[..., 2 * E:]
        heads = []
        for h in range(nhead):
            sl = slice(h * dh, (h + 1) * dh)
            s = jnp.einsum('lnd,mnd->nlm', q[..., sl] / math.sqrt(dh),
                           k[..., sl]) + mask
            p = jax.nn.softmax(s, axis=-1)
            heads.append(jnp.einsum('nlm,mnd->lnd', p, v[..., sl]))
        attn = jnp.concatenate(heads, -1) @ lp["w_out"].T + lp["b_out"]
        x = x + attn
        nx = ln(x, lp["ln2_g"], lp["ln2_b"])
        ffn = (jnp.maximum(nx @ lp["w1"].T + lp["b1"], 0.0)
               @ lp["w2"].T + lp["b2"])
        x = x + ffn
    x = ln(x, raw["ln_g"], raw["ln_b"])
    return x @ raw["wc"].T + raw["bc"]                              # (L, N, V)


# ---------------------------------- main ------------------------------------

if __name__ == "__main__":
    vocab_size = 64
    hidden_size = 32
    nhead = 4
    num_layers = 2
    ffn_hidden_size = 64
    seq_len = 8
    batch = 2

    key = jax.random.PRNGKey(0)
    k_tok, k_par = jax.random.split(key)

    raw_params = make_params(k_par, vocab_size, hidden_size, nhead,
                             num_layers, ffn_hidden_size)
    tokens = jax.random.randint(k_tok, (seq_len, batch), 0, vocab_size,
                                dtype=jnp.int32)     # (L, N), PyTorch seq-first

    prepared = prepare_params(raw_params, nhead)

    # TODO(synk): dropout layers are intentionally identity (eval-mode
    # semantics); training-mode stochastic dropout is not implemented.
    logits = transformer_decoder_only_forward(tokens, prepared, nhead)
    logits = jax.block_until_ready(logits)

    assert logits.shape == (seq_len, batch, vocab_size)
    assert bool(jnp.all(jnp.isfinite(logits)))

    ref = reference_forward(tokens, raw_params, nhead)
    max_err = float(jnp.max(jnp.abs(logits - ref)))
    assert max_err < 0.25, f"max abs error vs f32 reference: {max_err}"

    print("KERNEL_OK")
</pallas_src>

<mosaic_0001>
module attributes {stable_mosaic.version = 11 : i64} {
  func.func @fused_decoder_kernel(%arg0: i32, %arg1: memref<2x8x32xf32, #tpu.memory_space<vmem>>, %arg2: memref<1x1x32xf32, #tpu.memory_space<vmem>>, %arg3: memref<1x1x32xf32, #tpu.memory_space<vmem>>, %arg4: memref<1x32x96xbf16, #tpu.memory_space<vmem>>, %arg5: memref<1x1x96xf32, #tpu.memory_space<vmem>>, %arg6: memref<1x32x32xf32, #tpu.memory_space<vmem>>, %arg7: memref<1x1x32xf32, #tpu.memory_space<vmem>>, %arg8: memref<1x1x32xf32, #tpu.memory_space<vmem>>, %arg9: memref<1x1x32xf32, #tpu.memory_space<vmem>>, %arg10: memref<1x32x64xbf16, #tpu.memory_space<vmem>>, %arg11: memref<1x1x64xf32, #tpu.memory_space<vmem>>, %arg12: memref<1x64x32xbf16, #tpu.memory_space<vmem>>, %arg13: memref<1x1x32xf32, #tpu.memory_space<vmem>>, %arg14: memref<1x32xf32, #tpu.memory_space<vmem>>, %arg15: memref<1x32xf32, #tpu.memory_space<vmem>>, %arg16: memref<32x64xbf16, #tpu.memory_space<vmem>>, %arg17: memref<1x64xf32, #tpu.memory_space<vmem>>, %arg18: memref<2x8x64xf32, #tpu.memory_space<vmem>>, %arg19: memref<16x32xf32, #tpu.memory_space<vmem>>) attributes {dimension_semantics = [#tpu.dimension_semantics<arbitrary>], iteration_bounds = array<i64: 2>, scalar_prefetch = 0 : i64, scratch_operands = 1 : i64, tpu.core_type = #tpu.core_type<tc>, window_params = [{pipeline_mode = #tpu.pipeline_mode<synchronous>, transform_indices = @transform_0, window_bounds = array<i64: 2, 8, 32>}, {transform_indices = @transform_1, window_bounds = array<i64: 1, 1, 32>}, {transform_indices = @transform_2, window_bounds = array<i64: 1, 1, 32>}, {transform_indices = @transform_3, window_bounds = array<i64: 1, 32, 96>}, {transform_indices = @transform_4, window_bounds = array<i64: 1, 1, 96>}, {transform_indices = @transform_5, window_bounds = array<i64: 1, 32, 32>}, {transform_indices = @transform_6, window_bounds = array<i64: 1, 1, 32>}, {transform_indices = @transform_7, window_bounds = array<i64: 1, 1, 32>}, {transform_indices = @transform_8, window_bounds = array<i64: 1, 1, 32>}, {transform_indices = @transform_9, window_bounds = array<i64: 1, 32, 64>}, {transform_indices = @transform_10, window_bounds = array<i64: 1, 1, 64>}, {transform_indices = @transform_11, window_bounds = array<i64: 1, 64, 32>}, {transform_indices = @transform_12, window_bounds = array<i64: 1, 1, 32>}, {pipeline_mode = #tpu.pipeline_mode<synchronous>, transform_indices = @transform_13, window_bounds = array<i64: 1, 32>}, {pipeline_mode = #tpu.pipeline_mode<synchronous>, transform_indices = @transform_14, window_bounds = array<i64: 1, 32>}, {pipeline_mode = #tpu.pipeline_mode<synchronous>, transform_indices = @transform_15, window_bounds = array<i64: 32, 64>}, {pipeline_mode = #tpu.pipeline_mode<synchronous>, transform_indices = @transform_16, window_bounds = array<i64: 1, 64>}, {pipeline_mode = #tpu.pipeline_mode<synchronous>, transform_indices = @transform_17, window_bounds = array<i64: 2, 8, 64>}]} {
    %c0_i32 = arith.constant 0 : i32
    %0 = arith.cmpi eq, %arg0, %c0_i32 : i32
    %1 = arith.extui %0 : i1 to i32
    %c0_i32_0 = arith.constant 0 : i32
    %2 = arith.cmpi ne, %1, %c0_i32_0 : i32
    scf.if %2 {
      %c0_85 = arith.constant 0 : index
      %c0_86 = arith.constant 0 : index
      %c0_87 = arith.constant 0 : index
      %221 = vector.load %arg1[%c0_85, %c0_86, %c0_87] : memref<2x8x32xf32, #tpu.memory_space<vmem>>, vector<2x8x32xf32>
      %222 = vector.shape_cast %221 : vector<2x8x32xf32> to vector<16x32xf32>
      %c0_88 = arith.constant 0 : index
      %c0_89 = arith.constant 0 : index
      %223 = vector.load %arg19[%c0_88, %c0_89] : memref<16x32xf32, #tpu.memory_space<vmem>>, vector<16x32xf32>
      tpu.vector_store %arg19[%c0_88, %c0_89], %222 {strides = array<i32>} : memref<16x32xf32, #tpu.memory_space<vmem>>, vector<16x32xf32>,
    } else {
    }
    %c0 = arith.constant 0 : index
    %c0_1 = arith.constant 0 : index
    %3 = vector.load %arg19[%c0, %c0_1] : memref<16x32xf32, #tpu.memory_space<vmem>>, vector<16x32xf32>
    %c0_2 = arith.constant 0 : index
    %c0_3 = arith.constant 0 : index
    %c0_4 = arith.constant 0 : index
    %4 = vector.load %arg2[%c0_2, %c0_3, %c0_4] : memref<1x1x32xf32, #tpu.memory_space<vmem>>, vector<1x1x32xf32>
    %5 = vector.shape_cast %4 : vector<1x1x32xf32> to vector<1x32xf32>
    %c0_5 = arith.constant 0 : index
    %c0_6 = arith.constant 0 : index
    %c0_7 = arith.constant 0 : index
    %6 = vector.load %arg3[%c0_5, %c0_6, %c0_7] : memref<1x1x32xf32, #tpu.memory_space<vmem>>, vector<1x1x32xf32>
    %7 = vector.shape_cast %6 : vector<1x1x32xf32> to vector<1x32xf32>
    %cst = arith.constant dense<0.000000e+00> : vector<16xf32>
    %8 = vector.multi_reduction <add>, %3, %cst [1] : vector<16x32xf32> to vector<16xf32>
    %9 = vector.shape_cast %8 : vector<16xf32> to vector<16x1xf32>
    %cst_8 = arith.constant 3.200000e+01 : f32
    %10 = vector.broadcast %cst_8 : f32 to vector<16x1xf32>
    %11 = arith.divf %9, %10 : vector<16x1xf32>
    %12 = vector.broadcast %11 : vector<16x1xf32> to vector<16x32xf32>
    %13 = arith.subf %3, %12 : vector<16x32xf32>
    %14 = arith.mulf %13, %13 : vector<16x32xf32>
    %cst_9 = arith.constant dense<0.000000e+00> : vector<16xf32>
    %15 = vector.multi_reduction <add>, %14, %cst_9 [1] : vector<16x32xf32> to vector<16xf32>
    %16 = vector.shape_cast %15 : vector<16xf32> to vector<16x1xf32>
    %cst_10 = arith.constant 3.200000e+01 : f32
    %17 = vector.broadcast %cst_10 : f32 to vector<16x1xf32>
    %18 = arith.divf %16, %17 : vector<16x1xf32>
    %19 = vector.broadcast %11 : vector<16x1xf32> to vector<16x32xf32>
    %20 = arith.subf %3, %19 : vector<16x32xf32>
    %cst_11 = arith.constant 9.99999974E-6 : f32
    %21 = vector.broadcast %cst_11 : f32 to vector<16x1xf32>
    %22 = arith.addf %18, %21 : vector<16x1xf32>
    %23 = math.rsqrt %22 : vector<16x1xf32>
    %24 = vector.broadcast %23 : vector<16x1xf32> to vector<16x32xf32>
    %25 = arith.mulf %20, %24 : vector<16x32xf32>
    %26 = vector.broadcast %5 : vector<1x32xf32> to vector<16x32xf32>
    %27 = arith.mulf %25, %26 : vector<16x32xf32>
    %28 = vector.broadcast %7 : vector<1x32xf32> to vector<16x32xf32>
    %29 = arith.addf %27, %28 : vector<16x32xf32>
    %30 = arith.truncf %29 : vector<16x32xf32> to vector<16x32xbf16>
    %c0_12 = arith.constant 0 : index
    %c0_13 = arith.constant 0 : index
    %c0_14 = arith.constant 0 : index
    %31 = vector.load %arg4[%c0_12, %c0_13, %c0_14] : memref<1x32x96xbf16, #tpu.memory_space<vmem>>, vector<1x32x96xbf16>
    %32 = vector.shape_cast %31 : vector<1x32x96xbf16> to vector<32x96xbf16>
    %cst_15 = arith.constant dense<0.000000e+00> : vector<16x96xf32>
    %33 = tpu.matmul %30, %32, %cst_15 {dimension_numbers = #tpu.dot_dimension_numbers<[1], [0], [0], [1], [0, 0, 1, 1], [], []>} : vector<16x32xbf16>, vector<32x96xbf16>, vector<16x96xf32> -> vector<16x96xf32>
    %c0_16 = arith.constant 0 : index
    %c0_17 = arith.constant 0 : index
    %c0_18 = arith.constant 0 : index
    %34 = vector.load %arg5[%c0_16, %c0_17, %c0_18] : memref<1x1x96xf32, #tpu.memory_space<vmem>>, vector<1x1x96xf32>
    %35 = vector.shape_cast %34 : vector<1x1x96xf32> to vector<1x96xf32>
    %36 = vector.broadcast %35 : vector<1x96xf32> to vector<16x96xf32>
    %37 = arith.addf %33, %36 : vector<16x96xf32>
    %38 = tpu.iota {dimensions = array<i32: 0>} : vector<8x8xi32>
    %39 = tpu.iota {dimensions = array<i32: 1>} : vector<8x8xi32>
    %40 = arith.cmpi sge, %38, %39 : vector<8x8xi32>
    %41 = vector.shape_cast %40 : vector<8x8xi1> to vector<1x8x8xi1>
    %cst_19 = arith.constant 0.000000e+00 : f32
    %42 = vector.broadcast %cst_19 : f32 to vector<16x32xf32>
    %43 = vector.extract_strided_slice %37 {offsets = [0, 0], sizes = [16, 8], strides = [1, 1]} : vector<16x96xf32> to vector<16x8xf32>
    %44 = vector.shape_cast %43 : vector<16x8xf32> to vector<2x8x8xf32>
    %45 = vector.extract_strided_slice %37 {offsets = [0, 32], sizes = [16, 8], strides = [1, 1]} : vector<16x96xf32> to vector<16x8xf32>
    %46 = vector.shape_cast %45 : vector<16x8xf32> to vector<2x8x8xf32>
    %47 = vector.extract_strided_slice %37 {offsets = [0, 64], sizes = [16, 8], strides = [1, 1]} : vector<16x96xf32> to vector<16x8xf32>
    %48 = vector.shape_cast %47 : vector<16x8xf32> to vector<2x8x8xf32>
    %49 = arith.truncf %44 : vector<2x8x8xf32> to vector<2x8x8xbf16>
    %50 = arith.truncf %46 : vector<2x8x8xf32> to vector<2x8x8xbf16>
    "tpu.trace_start"() <{level = 10 : i32, message = "bqd,bkd->bqk"}> : () -> ()
    %cst_20 = arith.constant dense<0.000000e+00> : vector<2x8x8xf32>
    %51 = tpu.matmul %49, %50, %cst_20 {dimension_numbers = #tpu.dot_dimension_numbers<[2], [2], [1], [1], [0, 0, 0, 1, 1, 1], [0], [0]>} : vector<2x8x8xbf16>, vector<2x8x8xbf16>, vector<2x8x8xf32> -> vector<2x8x8xf32>
    %cst_21 = arith.constant -1.000000e+30 : f32
    "tpu.trace_stop"() : () -> ()
    %52 = vector.shape_cast %41 : vector<1x8x8xi1> to vector<1x8x8xi1>
    %53 = vector.broadcast %52 : vector<1x8x8xi1> to vector<2x8x8xi1>
    %54 = vector.broadcast %cst_21 : f32 to vector<2x8x8xf32>
    %55 = arith.select %53, %51, %54 : vector<2x8x8xi1>, vector<2x8x8xf32>
    %cst_22 = arith.constant dense<0xFF800000> : vector<2x8xf32>
    %56 = vector.multi_reduction <maximumf>, %55, %cst_22 [2] : vector<2x8x8xf32> to vector<2x8xf32>
    %57 = vector.shape_cast %56 : vector<2x8xf32> to vector<2x8x1xf32>
    %58 = vector.broadcast %57 : vector<2x8x1xf32> to vector<2x8x8xf32>
    %59 = arith.subf %55, %58 : vector<2x8x8xf32>
    %60 = math.exp %59 : vector<2x8x8xf32>
    %cst_23 = arith.constant dense<0.000000e+00> : vector<2x8xf32>
    %61 = vector.multi_reduction <add>, %60, %cst_23 [2] : vector<2x8x8xf32> to vector<2x8xf32>
    %62 = vector.shape_cast %61 : vector<2x8xf32> to vector<2x8x1xf32>
    %63 = tpu.reciprocal %62 {approx = true} : vector<2x8x1xf32> -> vector<2x8x1xf32>
    %64 = vector.broadcast %63 : vector<2x8x1xf32> to vector<2x8x8xf32>
    %65 = arith.mulf %60, %64 : vector<2x8x8xf32>
    %66 = arith.truncf %65 : vector<2x8x8xf32> to vector<2x8x8xbf16>
    %67 = arith.truncf %48 : vector<2x8x8xf32> to vector<2x8x8xbf16>
    "tpu.trace_start"() <{level = 10 : i32, message = "bqk,bkd->bqd"}> : () -> ()
    %cst_24 = arith.constant dense<0.000000e+00> : vector<2x8x8xf32>
    %68 = tpu.matmul %66, %67, %cst_24 {dimension_numbers = #tpu.dot_dimension_numbers<[2], [1], [1], [2], [0, 0, 0, 1, 1, 2], [0], [0]>} : vector<2x8x8xbf16>, vector<2x8x8xbf16>, vector<2x8x8xf32> -> vector<2x8x8xf32>
    "tpu.trace_stop"() : () -> ()
    %69 = vector.shape_cast %68 : vector<2x8x8xf32> to vector<16x8xf32>
    %c0_25 = arith.constant 0 : index
    %c0_26 = arith.constant 0 : index
    %c0_27 = arith.constant 0 : index
    %70 = vector.load %arg6[%c0_25, %c0_26, %c0_27] : memref<1x32x32xf32, #tpu.memory_space<vmem>>, vector<1x8x32xf32>
    %71 = vector.shape_cast %70 : vector<1x8x32xf32> to vector<8x32xf32>
    %cst_28 = arith.constant dense<0.000000e+00> : vector<16x32xf32>
    %72 = tpu.matmul %69, %71, %cst_28 {dimension_numbers = #tpu.dot_dimension_numbers<[1], [0], [0], [1], [0, 0, 1, 1], [], []>} : vector<16x8xf32>, vector<8x32xf32>, vector<16x32xf32> -> vector<16x32xf32>
    %73 = arith.addf %42, %72 : vector<16x32xf32>
    %74 = vector.extract_strided_slice %37 {offsets = [0, 8], sizes = [16, 8], strides = [1, 1]} : vector<16x96xf32> to vector<16x8xf32>
    %75 = vector.shape_cast %74 : vector<16x8xf32> to vector<2x8x8xf32>
    %76 = vector.extract_strided_slice %37 {offsets = [0, 40], sizes = [16, 8], strides = [1, 1]} : vector<16x96xf32> to vector<16x8xf32>
    %77 = vector.shape_cast %76 : vector<16x8xf32> to vector<2x8x8xf32>
    %78 = vector.extract_strided_slice %37 {offsets = [0, 72], sizes = [16, 8], strides = [1, 1]} : vector<16x96xf32> to vector<16x8xf32>
    %79 = vector.shape_cast %78 : vector<16x8xf32> to vector<2x8x8xf32>
    %80 = arith.truncf %75 : vector<2x8x8xf32> to vector<2x8x8xbf16>
    %81 = arith.truncf %77 : vector<2x8x8xf32> to vector<2x8x8xbf16>
    "tpu.trace_start"() <{level = 10 : i32, message = "bqd,bkd->bqk"}> : () -> ()
    %cst_29 = arith.constant dense<0.000000e+00> : vector<2x8x8xf32>
    %82 = tpu.matmul %80, %81, %cst_29 {dimension_numbers = #tpu.dot_dimension_numbers<[2], [2], [1], [1], [0, 0, 0, 1, 1, 1], [0], [0]>} : vector<2x8x8xbf16>, vector<2x8x8xbf16>, vector<2x8x8xf32> -> vector<2x8x8xf32>
    %cst_30 = arith.constant -1.000000e+30 : f32
    "tpu.trace_stop"() : () -> ()
    %83 = vector.shape_cast %41 : vector<1x8x8xi1> to vector<1x8x8xi1>
    %84 = vector.broadcast %83 : vector<1x8x8xi1> to vector<2x8x8xi1>
    %85 = vector.broadcast %cst_30 : f32 to vector<2x8x8xf32>
    %86 = arith.select %84, %82, %85 : vector<2x8x8xi1>, vector<2x8x8xf32>
    %cst_31 = arith.constant dense<0xFF800000> : vector<2x8xf32>
    %87 = vector.multi_reduction <maximumf>, %86, %cst_31 [2] : vector<2x8x8xf32> to vector<2x8xf32>
    %88 = vector.shape_cast %87 : vector<2x8xf32> to vector<2x8x1xf32>
    %89 = vector.broadcast %88 : vector<2x8x1xf32> to vector<2x8x8xf32>
    %90 = arith.subf %86, %89 : vector<2x8x8xf32>
    %91 = math.exp %90 : vector<2x8x8xf32>
    %cst_32 = arith.constant dense<0.000000e+00> : vector<2x8xf32>
    %92 = vector.multi_reduction <add>, %91, %cst_32 [2] : vector<2x8x8xf32> to vector<2x8xf32>
    %93 = vector.shape_cast %92 : vector<2x8xf32> to vector<2x8x1xf32>
    %94 = tpu.reciprocal %93 {approx = true} : vector<2x8x1xf32> -> vector<2x8x1xf32>
    %95 = vector.broadcast %94 : vector<2x8x1xf32> to vector<2x8x8xf32>
    %96 = arith.mulf %91, %95 : vector<2x8x8xf32>
    %97 = arith.truncf %96 : vector<2x8x8xf32> to vector<2x8x8xbf16>
    %98 = arith.truncf %79 : vector<2x8x8xf32> to vector<2x8x8xbf16>
    "tpu.trace_start"() <{level = 10 : i32, message = "bqk,bkd->bqd"}> : () -> ()
    %cst_33 = arith.constant dense<0.000000e+00> : vector<2x8x8xf32>
    %99 = tpu.matmul %97, %98, %cst_33 {dimension_numbers = #tpu.dot_dimension_numbers<[2], [1], [1], [2], [0, 0, 0, 1, 1, 2], [0], [0]>} : vector<2x8x8xbf16>, vector<2x8x8xbf16>, vector<2x8x8xf32> -> vector<2x8x8xf32>
    "tpu.trace_stop"() : () -> ()
    %100 = vector.shape_cast %99 : vector<2x8x8xf32> to vector<16x8xf32>
    %c0_34 = arith.constant 0 : index
    %c8 = arith.constant 8 : index
    %c0_35 = arith.constant 0 : index
    %101 = vector.load %arg6[%c0_34, %c8, %c0_35] : memref<1x32x32xf32, #tpu.memory_space<vmem>>, vector<1x8x32xf32>
    %102 = vector.shape_cast %101 : vector<1x8x32xf32> to vector<8x32xf32>
    %cst_36 = arith.constant dense<0.000000e+00> : vector<16x32xf32>
    %103 = tpu.matmul %100, %102, %cst_36 {dimension_numbers = #tpu.dot_dimension_numbers<[1], [0], [0], [1], [0, 0, 1, 1], [], []>} : vector<16x8xf32>, vector<8x32xf32>, vector<16x32xf32> -> vector<16x32xf32>
    %104 = arith.addf %73, %103 : vector<16x32xf32>
    %105 = vector.extract_strided_slice %37 {offsets = [0, 16], sizes = [16, 8], strides = [1, 1]} : vector<16x96xf32> to vector<16x8xf32>
    %106 = vector.shape_cast %105 : vector<16x8xf32> to vector<2x8x8xf32>
    %107 = vector.extract_strided_slice %37 {offsets = [0, 48], sizes = [16, 8], strides = [1, 1]} : vector<16x96xf32> to vector<16x8xf32>
    %108 = vector.shape_cast %107 : vector<16x8xf32> to vector<2x8x8xf32>
    %109 = vector.extract_strided_slice %37 {offsets = [0, 80], sizes = [16, 8], strides = [1, 1]} : vector<16x96xf32> to vector<16x8xf32>
    %110 = vector.shape_cast %109 : vector<16x8xf32> to vector<2x8x8xf32>
    %111 = arith.truncf %106 : vector<2x8x8xf32> to vector<2x8x8xbf16>
    %112 = arith.truncf %108 : vector<2x8x8xf32> to vector<2x8x8xbf16>
    "tpu.trace_start"() <{level = 10 : i32, message = "bqd,bkd->bqk"}> : () -> ()
    %cst_37 = arith.constant dense<0.000000e+00> : vector<2x8x8xf32>
    %113 = tpu.matmul %111, %112, %cst_37 {dimension_numbers = #tpu.dot_dimension_numbers<[2], [2], [1], [1], [0, 0, 0, 1, 1, 1], [0], [0]>} : vector<2x8x8xbf16>, vector<2x8x8xbf16>, vector<2x8x8xf32> -> vector<2x8x8xf32>
    %cst_38 = arith.constant -1.000000e+30 : f32
    "tpu.trace_stop"() : () -> ()
    %114 = vector.shape_cast %41 : vector<1x8x8xi1> to vector<1x8x8xi1>
    %115 = vector.broadcast %114 : vector<1x8x8xi1> to vector<2x8x8xi1>
    %116 = vector.broadcast %cst_38 : f32 to vector<2x8x8xf32>
    %117 = arith.select %115, %113, %116 : vector<2x8x8xi1>, vector<2x8x8xf32>
    %cst_39 = arith.constant dense<0xFF800000> : vector<2x8xf32>
    %118 = vector.multi_reduction <maximumf>, %117, %cst_39 [2] : vector<2x8x8xf32> to vector<2x8xf32>
    %119 = vector.shape_cast %118 : vector<2x8xf32> to vector<2x8x1xf32>
    %120 = vector.broadcast %119 : vector<2x8x1xf32> to vector<2x8x8xf32>
    %121 = arith.subf %117, %120 : vector<2x8x8xf32>
    %122 = math.exp %121 : vector<2x8x8xf32>
    %cst_40 = arith.constant dense<0.000000e+00> : vector<2x8xf32>
    %123 = vector.multi_reduction <add>, %122, %cst_40 [2] : vector<2x8x8xf32> to vector<2x8xf32>
    %124 = vector.shape_cast %123 : vector<2x8xf32> to vector<2x8x1xf32>
    %125 = tpu.reciprocal %124 {approx = true} : vector<2x8x1xf32> -> vector<2x8x1xf32>
    %126 = vector.broadcast %125 : vector<2x8x1xf32> to vector<2x8x8xf32>
    %127 = arith.mulf %122, %126 : vector<2x8x8xf32>
    %128 = arith.truncf %127 : vector<2x8x8xf32> to vector<2x8x8xbf16>
    %129 = arith.truncf %110 : vector<2x8x8xf32> to vector<2x8x8xbf16>
    "tpu.trace_start"() <{level = 10 : i32, message = "bqk,bkd->bqd"}> : () -> ()
    %cst_41 = arith.constant dense<0.000000e+00> : vector<2x8x8xf32>
    %130 = tpu.matmul %128, %129, %cst_41 {dimension_numbers = #tpu.dot_dimension_numbers<[2], [1], [1], [2], [0, 0, 0, 1, 1, 2], [0], [0]>} : vector<2x8x8xbf16>, vector<2x8x8xbf16>, vector<2x8x8xf32> -> vector<2x8x8xf32>
    "tpu.trace_stop"() : () -> ()
    %131 = vector.shape_cast %130 : vector<2x8x8xf32> to vector<16x8xf32>
    %c0_42 = arith.constant 0 : index
    %c16 = arith.constant 16 : index
    %c0_43 = arith.constant 0 : index
    %132 = vector.load %arg6[%c0_42, %c16, %c0_43] : memref<1x32x32xf32, #tpu.memory_space<vmem>>, vector<1x8x32xf32>
    %133 = vector.shape_cast %132 : vector<1x8x32xf32> to vector<8x32xf32>
    %cst_44 = arith.constant dense<0.000000e+00> : vector<16x32xf32>
    %134 = tpu.matmul %131, %133, %cst_44 {dimension_numbers = #tpu.dot_dimension_numbers<[1], [0], [0], [1], [0, 0, 1, 1], [], []>} : vector<16x8xf32>, vector<8x32xf32>, vector<16x32xf32> -> vector<16x32xf32>
    %135 = arith.addf %104, %134 : vector<16x32xf32>
    %136 = vector.extract_strided_slice %37 {offsets = [0, 24], sizes = [16, 8], strides = [1, 1]} : vector<16x96xf32> to vector<16x8xf32>
    %137 = vector.shape_cast %136 : vector<16x8xf32> to vector<2x8x8xf32>
    %138 = vector.extract_strided_slice %37 {offsets = [0, 56], sizes = [16, 8], strides = [1, 1]} : vector<16x96xf32> to vector<16x8xf32>
    %139 = vector.shape_cast %138 : vector<16x8xf32> to vector<2x8x8xf32>
    %140 = vector.extract_strided_slice %37 {offsets = [0, 88], sizes = [16, 8], strides = [1, 1]} : vector<16x96xf32> to vector<16x8xf32>
    %141 = vector.shape_cast %140 : vector<16x8xf32> to vector<2x8x8xf32>
    %142 = arith.truncf %137 : vector<2x8x8xf32> to vector<2x8x8xbf16>
    %143 = arith.truncf %139 : vector<2x8x8xf32> to vector<2x8x8xbf16>
    "tpu.trace_start"() <{level = 10 : i32, message = "bqd,bkd->bqk"}> : () -> ()
    %cst_45 = arith.constant dense<0.000000e+00> : vector<2x8x8xf32>
    %144 = tpu.matmul %142, %143, %cst_45 {dimension_numbers = #tpu.dot_dimension_numbers<[2], [2], [1], [1], [0, 0, 0, 1, 1, 1], [0], [0]>} : vector<2x8x8xbf16>, vector<2x8x8xbf16>, vector<2x8x8xf32> -> vector<2x8x8xf32>
    %cst_46 = arith.constant -1.000000e+30 : f32
    "tpu.trace_stop"() : () -> ()
    %145 = vector.shape_cast %41 : vector<1x8x8xi1> to vector<1x8x8xi1>
    %146 = vector.broadcast %145 : vector<1x8x8xi1> to vector<2x8x8xi1>
    %147 = vector.broadcast %cst_46 : f32 to vector<2x8x8xf32>
    %148 = arith.select %146, %144, %147 : vector<2x8x8xi1>, vector<2x8x8xf32>
    %cst_47 = arith.constant dense<0xFF800000> : vector<2x8xf32>
    %149 = vector.multi_reduction <maximumf>, %148, %cst_47 [2] : vector<2x8x8xf32> to vector<2x8xf32>
    %150 = vector.shape_cast %149 : vector<2x8xf32> to vector<2x8x1xf32>
    %151 = vector.broadcast %150 : vector<2x8x1xf32> to vector<2x8x8xf32>
    %152 = arith.subf %148, %151 : vector<2x8x8xf32>
    %153 = math.exp %152 : vector<2x8x8xf32>
    %cst_48 = arith.constant dense<0.000000e+00> : vector<2x8xf32>
    %154 = vector.multi_reduction <add>, %153, %cst_48 [2] : vector<2x8x8xf32> to vector<2x8xf32>
    %155 = vector.shape_cast %154 : vector<2x8xf32> to vector<2x8x1xf32>
    %156 = tpu.reciprocal %155 {approx = true} : vector<2x8x1xf32> -> vector<2x8x1xf32>
    %157 = vector.broadcast %156 : vector<2x8x1xf32> to vector<2x8x8xf32>
    %158 = arith.mulf %153, %157 : vector<2x8x8xf32>
    %159 = arith.truncf %158 : vector<2x8x8xf32> to vector<2x8x8xbf16>
    %160 = arith.truncf %141 : vector<2x8x8xf32> to vector<2x8x8xbf16>
    "tpu.trace_start"() <{level = 10 : i32, message = "bqk,bkd->bqd"}> : () -> ()
    %cst_49 = arith.constant dense<0.000000e+00> : vector<2x8x8xf32>
    %161 = tpu.matmul %159, %160, %cst_49 {dimension_numbers = #tpu.dot_dimension_numbers<[2], [1], [1], [2], [0, 0, 0, 1, 1, 2], [0], [0]>} : vector<2x8x8xbf16>, vector<2x8x8xbf16>, vector<2x8x8xf32> -> vector<2x8x8xf32>
    "tpu.trace_stop"() : () -> ()
    %162 = vector.shape_cast %161 : vector<2x8x8xf32> to vector<16x8xf32>
    %c0_50 = arith.constant 0 : index
    %c24 = arith.constant 24 : index
    %c0_51 = arith.constant 0 : index
    %163 = vector.load %arg6[%c0_50, %c24, %c0_51] : memref<1x32x32xf32, #tpu.memory_space<vmem>>, vector<1x8x32xf32>
    %164 = vector.shape_cast %163 : vector<1x8x32xf32> to vector<8x32xf32>
    %cst_52 = arith.constant dense<0.000000e+00> : vector<16x32xf32>
    %165 = tpu.matmul %162, %164, %cst_52 {dimension_numbers = #tpu.dot_dimension_numbers<[1], [0], [0], [1], [0, 0, 1, 1], [], []>} : vector<16x8xf32>, vector<8x32xf32>, vector<16x32xf32> -> vector<16x32xf32>
    %166 = arith.addf %135, %165 : vector<16x32xf32>
    %167 = arith.addf %3, %166 : vector<16x32xf32>
    %c0_53 = arith.constant 0 : index
    %c0_54 = arith.constant 0 : index
    %c0_55 = arith.constant 0 : index
    %168 = vector.load %arg7[%c0_53, %c0_54, %c0_55] : memref<1x1x32xf32, #tpu.memory_space<vmem>>, vector<1x1x32xf32>
    %169 = vector.shape_cast %168 : vector<1x1x32xf32> to vector<1x32xf32>
    %170 = vector.broadcast %169 : vector<1x32xf32> to vector<16x32xf32>
    %171 = arith.addf %167, %170 : vector<16x32xf32>
    %c0_56 = arith.constant 0 : index
    %c0_57 = arith.constant 0 : index
    %c0_58 = arith.constant 0 : index
    %172 = vector.load %arg8[%c0_56, %c0_57, %c0_58] : memref<1x1x32xf32, #tpu.memory_space<vmem>>, vector<1x1x32xf32>
    %173 = vector.shape_cast %172 : vector<1x1x32xf32> to vector<1x32xf32>
    %c0_59 = arith.constant 0 : index
    %c0_60 = arith.constant 0 : index
    %c0_61 = arith.constant 0 : index
    %174 = vector.load %arg9[%c0_59, %c0_60, %c0_61] : memref<1x1x32xf32, #tpu.memory_space<vmem>>, vector<1x1x32xf32>
    %175 = vector.shape_cast %174 : vector<1x1x32xf32> to vector<1x32xf32>
    %cst_62 = arith.constant dense<0.000000e+00> : vector<16xf32>
    %176 = vector.multi_reduction <add>, %171, %cst_62 [1] : vector<16x32xf32> to vector<16xf32>
    %177 = vector.shape_cast %176 : vector<16xf32> to vector<16x1xf32>
    %cst_63 = arith.constant 3.200000e+01 : f32
    %178 = vector.broadcast %cst_63 : f32 to vector<16x1xf32>
    %179 = arith.divf %177, %178 : vector<16x1xf32>
    %180 = vector.broadcast %179 : vector<16x1xf32> to vector<16x32xf32>
    %181 = arith.subf %171, %180 : vector<16x32xf32>
    %182 = arith.mulf %181, %181 : vector<16x32xf32>
    %cst_64 = arith.constant dense<0.000000e+00> : vector<16xf32>
    %183 = vector.multi_reduction <add>, %182, %cst_64 [1] : vector<16x32xf32> to vector<16xf32>
    %184 = vector.shape_cast %183 : vector<16xf32> to vector<16x1xf32>
    %cst_65 = arith.constant 3.200000e+01 : f32
    %185 = vector.broadcast %cst_65 : f32 to vector<16x1xf32>
    %186 = arith.divf %184, %185 : vector<16x1xf32>
    %187 = vector.broadcast %179 : vector<16x1xf32> to vector<16x32xf32>
    %188 = arith.subf %171, %187 : vector<16x32xf32>
    %cst_66 = arith.constant 9.99999974E-6 : f32
    %189 = vector.broadcast %cst_66 : f32 to vector<16x1xf32>
    %190 = arith.addf %186, %189 : vector<16x1xf32>
    %191 = math.rsqrt %190 : vector<16x1xf32>
    %192 = vector.broadcast %191 : vector<16x1xf32> to vector<16x32xf32>
    %193 = arith.mulf %188, %192 : vector<16x32xf32>
    %194 = vector.broadcast %173 : vector<1x32xf32> to vector<16x32xf32>
    %195 = arith.mulf %193, %194 : vector<16x32xf32>
    %196 = vector.broadcast %175 : vector<1x32xf32> to vector<16x32xf32>
    %197 = arith.addf %195, %196 : vector<16x32xf32>
    %198 = arith.truncf %197 : vector<16x32xf32> to vector<16x32xbf16>
    %c0_67 = arith.constant 0 : index
    %c0_68 = arith.constant 0 : index
    %c0_69 = arith.constant 0 : index
    %199 = vector.load %arg10[%c0_67, %c0_68, %c0_69] : memref<1x32x64xbf16, #tpu.memory_space<vmem>>, vector<1x32x64xbf16>
    %200 = vector.shape_cast %199 : vector<1x32x64xbf16> to vector<32x64xbf16>
    %cst_70 = arith.constant dense<0.000000e+00> : vector<16x64xf32>
    %201 = tpu.matmul %198, %200, %cst_70 {dimension_numbers = #tpu.dot_dimension_numbers<[1], [0], [0], [1], [0, 0, 1, 1], [], []>} : vector<16x32xbf16>, vector<32x64xbf16>, vector<16x64xf32> -> vector<16x64xf32>
    %c0_71 = arith.constant 0 : index
    %c0_72 = arith.constant 0 : index
    %c0_73 = arith.constant 0 : index
    %202 = vector.load %arg11[%c0_71, %c0_72, %c0_73] : memref<1x1x64xf32, #tpu.memory_space<vmem>>, vector<1x1x64xf32>
    %203 = vector.shape_cast %202 : vector<1x1x64xf32> to vector<1x64xf32>
    %204 = vector.broadcast %203 : vector<1x64xf32> to vector<16x64xf32>
    %205 = arith.addf %201, %204 : vector<16x64xf32>
    %cst_74 = arith.constant 0.000000e+00 : f32
    %206 = vector.broadcast %cst_74 : f32 to vector<16x64xf32>
    %207 = arith.maximumf %205, %206 : vector<16x64xf32>
    %208 = arith.truncf %207 : vector<16x64xf32> to vector<16x64xbf16>
    %c0_75 = arith.constant 0 : index
    %c0_76 = arith.constant 0 : index
    %c0_77 = arith.constant 0 : index
    %209 = vector.load %arg12[%c0_75, %c0_76, %c0_77] : memref<1x64x32xbf16, #tpu.memory_space<vmem>>, vector<1x64x32xbf16>
    %210 = vector.shape_cast %209 : vector<1x64x32xbf16> to vector<64x32xbf16>
    %cst_78 = arith.constant dense<0.000000e+00> : vector<16x32xf32>
    %211 = tpu.matmul %208, %210, %cst_78 {dimension_numbers = #tpu.dot_dimension_numbers<[1], [0], [0], [1], [0, 0, 1, 1], [], []>} : vector<16x64xbf16>, vector<64x32xbf16>, vector<16x32xf32> -> vector<16x32xf32>
    %c0_79 = arith.constant 0 : index
    %c0_80 = arith.constant 0 : index
    %c0_81 = arith.constant 0 : index
    %212 = vector.load %arg13[%c0_79, %c0_80, %c0_81] : memref<1x1x32xf32, #tpu.memory_space<vmem>>, vector<1x1x32xf32>
    %213 = vector.shape_cast %212 : vector<1x1x32xf32> to vector<1x32xf32>
    %214 = vector.broadcast %213 : vector<1x32xf32> to vector<16x32xf32>
    %215 = arith.addf %211, %214 : vector<16x32xf32>
    %216 = arith.addf %171, %215 : vector<16x32xf32>
    %c0_82 = arith.constant 0 : index
    %c0_83 = arith.constant 0 : index
    %217 = vector.load %arg19[%c0_82, %c0_83] : memref<16x32xf32, #tpu.memory_space<vmem>>, vector<16x32xf32>
    tpu.vector_store %arg19[%c0_82, %c0_83], %216 {strides = array<i32>} : memref<16x32xf32, #tpu.memory_space<vmem>>, vector<16x32xf32>,
    %c1_i32 = arith.constant 1 : i32
    %218 = arith.cmpi eq, %arg0, %c1_i32 : i32
    %219 = arith.extui %218 : i1 to i32
    %c0_i32_84 = arith.constant 0 : i32
    %220 = arith.cmpi ne, %219, %c0_i32_84 : i32
    scf.if %220 {
      %c0_85 = arith.constant 0 : index
      %c0_86 = arith.constant 0 : index
      %221 = vector.load %arg14[%c0_85, %c0_86] : memref<1x32xf32, #tpu.memory_space<vmem>>, vector<1x32xf32>
      %c0_87 = arith.constant 0 : index
      %c0_88 = arith.constant 0 : index
      %222 = vector.load %arg15[%c0_87, %c0_88] : memref<1x32xf32, #tpu.memory_space<vmem>>, vector<1x32xf32>
      %cst_89 = arith.constant dense<0.000000e+00> : vector<16xf32>
      %223 = vector.multi_reduction <add>, %216, %cst_89 [1] : vector<16x32xf32> to vector<16xf32>
      %224 = vector.shape_cast %223 : vector<16xf32> to vector<16x1xf32>
      %cst_90 = arith.constant 3.200000e+01 : f32
      %225 = vector.broadcast %cst_90 : f32 to vector<16x1xf32>
      %226 = arith.divf %224, %225 : vector<16x1xf32>
      %227 = vector.broadcast %226 : vector<16x1xf32> to vector<16x32xf32>
      %228 = arith.subf %216, %227 : vector<16x32xf32>
      %229 = arith.mulf %228, %228 : vector<16x32xf32>
      %cst_91 = arith.constant dense<0.000000e+00> : vector<16xf32>
      %230 = vector.multi_reduction <add>, %229, %cst_91 [1] : vector<16x32xf32> to vector<16xf32>
      %231 = vector.shape_cast %230 : vector<16xf32> to vector<16x1xf32>
      %cst_92 = arith.constant 3.200000e+01 : f32
      %232 = vector.broadcast %cst_92 : f32 to vector<16x1xf32>
      %233 = arith.divf %231, %232 : vector<16x1xf32>
      %234 = vector.broadcast %226 : vector<16x1xf32> to vector<16x32xf32>
      %235 = arith.subf %216, %234 : vector<16x32xf32>
      %cst_93 = arith.constant 9.99999974E-6 : f32
      %236 = vector.broadcast %cst_93 : f32 to vector<16x1xf32>
      %237 = arith.addf %233, %236 : vector<16x1xf32>
      %238 = math.rsqrt %237 : vector<16x1xf32>
      %239 = vector.broadcast %238 : vector<16x1xf32> to vector<16x32xf32>
      %240 = arith.mulf %235, %239 : vector<16x32xf32>
      %241 = vector.broadcast %221 : vector<1x32xf32> to vector<16x32xf32>
      %242 = arith.mulf %240, %241 : vector<16x32xf32>
      %243 = vector.broadcast %222 : vector<1x32xf32> to vector<16x32xf32>
      %244 = arith.addf %242, %243 : vector<16x32xf32>
      %245 = arith.truncf %244 : vector<16x32xf32> to vector<16x32xbf16>
      %c0_94 = arith.constant 0 : index
      %c0_95 = arith.constant 0 : index
      %246 = vector.load %arg16[%c0_94, %c0_95] : memref<32x64xbf16, #tpu.memory_space<vmem>>, vector<32x64xbf16>
      %cst_96 = arith.constant dense<0.000000e+00> : vector<16x64xf32>
      %247 = tpu.matmul %245, %246, %cst_96 {dimension_numbers = #tpu.dot_dimension_numbers<[1], [0], [0], [1], [0, 0, 1, 1], [], []>} : vector<16x32xbf16>, vector<32x64xbf16>, vector<16x64xf32> -> vector<16x64xf32>
      %c0_97 = arith.constant 0 : index
      %c0_98 = arith.constant 0 : index
      %248 = vector.load %arg17[%c0_97, %c0_98] : memref<1x64xf32, #tpu.memory_space<vmem>>, vector<1x64xf32>
      %249 = vector.broadcast %248 : vector<1x64xf32> to vector<16x64xf32>
      %250 = arith.addf %247, %249 : vector<16x64xf32>
      %251 = vector.shape_cast %250 : vector<16x64xf32> to vector<2x8x64xf32>
      %c0_99 = arith.constant 0 : index
      %c0_100 = arith.constant 0 : index
      %c0_101 = arith.constant 0 : index
      %252 = vector.load %arg18[%c0_99, %c0_100, %c0_101] : memref<2x8x64xf32, #tpu.memory_space<vmem>>, vector<2x8x64xf32>
      tpu.vector_store %arg18[%c0_99, %c0_100, %c0_101], %251 {strides = array<i32>} : memref<2x8x64xf32, #tpu.memory_space<vmem>>, vector<2x8x64xf32>,
    } else {
    }
    return
  }
  func.func @transform_0(%arg0: i32) -> (i32, i32, i32) {
    %c0_i32 = arith.constant 0 : i32
    %c0_i32_0 = arith.constant 0 : i32
    %c0_i32_1 = arith.constant 0 : i32
    %c0_i32_2 = arith.constant 0 : i32
    return %c0_i32, %c0_i32_0, %c0_i32_1 : i32, i32, i32
  }
  func.func @transform_1(%arg0: i32) -> (i32, i32, i32) {
    %c0_i32 = arith.constant 0 : i32
    %c0_i32_0 = arith.constant 0 : i32
    %c0_i32_1 = arith.constant 0 : i32
    return %arg0, %c0_i32, %c0_i32_0 : i32, i32, i32
  }
  func.func @transform_2(%arg0: i32) -> (i32, i32, i32) {
    %c0_i32 = arith.constant 0 : i32
    %c0_i32_0 = arith.constant 0 : i32
    %c0_i32_1 = arith.constant 0 : i32
    return %arg0, %c0_i32, %c0_i32_0 : i32, i32, i32
  }
  func.func @transform_3(%arg0: i32) -> (i32, i32, i32) {
    %c0_i32 = arith.constant 0 : i32
    %c0_i32_0 = arith.constant 0 : i32
    %c0_i32_1 = arith.constant 0 : i32
    return %arg0, %c0_i32, %c0_i32_0 : i32, i32, i32
  }
  func.func @transform_4(%arg0: i32) -> (i32, i32, i32) {
    %c0_i32 = arith.constant 0 : i32
    %c0_i32_0 = arith.constant 0 : i32
    %c0_i32_1 = arith.constant 0 : i32
    return %arg0, %c0_i32, %c0_i32_0 : i32, i32, i32
  }
  func.func @transform_5(%arg0: i32) -> (i32, i32, i32) {
    %c0_i32 = arith.constant 0 : i32
    %c0_i32_0 = arith.constant 0 : i32
    %c0_i32_1 = arith.constant 0 : i32
    return %arg0, %c0_i32, %c0_i32_0 : i32, i32, i32
  }
  func.func @transform_6(%arg0: i32) -> (i32, i32, i32) {
    %c0_i32 = arith.constant 0 : i32
    %c0_i32_0 = arith.constant 0 : i32
    %c0_i32_1 = arith.constant 0 : i32
    return %arg0, %c0_i32, %c0_i32_0 : i32, i32, i32
  }
  func.func @transform_7(%arg0: i32) -> (i32, i32, i32) {
    %c0_i32 = arith.constant 0 : i32
    %c0_i32_0 = arith.constant 0 : i32
    %c0_i32_1 = arith.constant 0 : i32
    return %arg0, %c0_i32, %c0_i32_0 : i32, i32, i32
  }
  func.func @transform_8(%arg0: i32) -> (i32, i32, i32) {
    %c0_i32 = arith.constant 0 : i32
    %c0_i32_0 = arith.constant 0 : i32
    %c0_i32_1 = arith.constant 0 : i32
    return %arg0, %c0_i32, %c0_i32_0 : i32, i32, i32
  }
  func.func @transform_9(%arg0: i32) -> (i32, i32, i32) {
    %c0_i32 = arith.constant 0 : i32
    %c0_i32_0 = arith.constant 0 : i32
    %c0_i32_1 = arith.constant 0 : i32
    return %arg0, %c0_i32, %c0_i32_0 : i32, i32, i32
  }
  func.func @transform_10(%arg0: i32) -> (i32, i32, i32) {
    %c0_i32 = arith.constant 0 : i32
    %c0_i32_0 = arith.constant 0 : i32
    %c0_i32_1 = arith.constant 0 : i32
    return %arg0, %c0_i32, %c0_i32_0 : i32, i32, i32
  }
  func.func @transform_11(%arg0: i32) -> (i32, i32, i32) {
    %c0_i32 = arith.constant 0 : i32
    %c0_i32_0 = arith.constant 0 : i32
    %c0_i32_1 = arith.constant 0 : i32
    return %arg0, %c0_i32, %c0_i32_0 : i32, i32, i32
  }
  func.func @transform_12(%arg0: i32) -> (i32, i32, i32) {
    %c0_i32 = arith.constant 0 : i32
    %c0_i32_0 = arith.constant 0 : i32
    %c0_i32_1 = arith.constant 0 : i32
    return %arg0, %c0_i32, %c0_i32_0 : i32, i32, i32
  }
  func.func @transform_13(%arg0: i32) -> (i32, i32) {
    %c0_i32 = arith.constant 0 : i32
    %c0_i32_0 = arith.constant 0 : i32
    %c0_i32_1 = arith.constant 0 : i32
    return %c0_i32, %c0_i32_0 : i32, i32
  }
  func.func @transform_14(%arg0: i32) -> (i32, i32) {
    %c0_i32 = arith.constant 0 : i32
    %c0_i32_0 = arith.constant 0 : i32
    %c0_i32_1 = arith.constant 0 : i32
    return %c0_i32, %c0_i32_0 : i32, i32
  }
  func.func @transform_15(%arg0: i32) -> (i32, i32) {
    %c0_i32 = arith.constant 0 : i32
    %c0_i32_0 = arith.constant 0 : i32
    %c0_i32_1 = arith.constant 0 : i32
    return %c0_i32, %c0_i32_0 : i32, i32
  }
  func.func @transform_16(%arg0: i32) -> (i32, i32) {
    %c0_i32 = arith.constant 0 : i32
    %c0_i32_0 = arith.constant 0 : i32
    %c0_i32_1 = arith.constant 0 : i32
    return %c0_i32, %c0_i32_0 : i32, i32
  }
  func.func @transform_17(%arg0: i32) -> (i32, i32, i32) {
    %c0_i32 = arith.constant 0 : i32
    %c0_i32_0 = arith.constant 0 : i32
    %c0_i32_1 = arith.constant 0 : i32
    %c0_i32_2 = arith.constant 0 : i32
    return %c0_i32, %c0_i32_0, %c0_i32_1 : i32, i32, i32
  }
}

</mosaic_0001>

<llo_original>
// kernel: tpu_custom_call.1
$region0: #{tpu_custom_call.1}
  #allocation0 [shape = 'u32[]', space=smem, size = 0x4, offset = 0x4, fixed_abs, tag = 'smem constant byte address 0x4 - core index']
  #allocation1 [shape = 'u32[144,128]{1,0:T(1,128)}', space=vmem, size = 0x12000, scoped, tag = 'internal scratch']
  #allocation2 [shape = 'f32[16,32]{1,0:T(8,128)}', space=vmem, size = 0x2000, scoped, tag = 'scratch operand']
  %s0 = inlined_call_operand.hbm [shape: f32[2,8,32], index: 0, kind: input, shape index: {}]
  %s1 = inlined_call_operand.hbm [shape: f32[2,1,32], index: 1, kind: input, shape index: {}]
  %s2 = inlined_call_operand.hbm [shape: f32[2,1,32], index: 2, kind: input, shape index: {}]
  %s3 = inlined_call_operand.vmem [shape: bf16[2,32,96], index: 3, kind: input, shape index: {}]
  %s4 = inlined_call_operand.hbm [shape: f32[2,1,96], index: 4, kind: input, shape index: {}]
  %s5 = inlined_call_operand.vmem [shape: f32[2,32,32], index: 5, kind: input, shape index: {}]
  %s6 = inlined_call_operand.hbm [shape: f32[2,1,32], index: 6, kind: input, shape index: {}]
  %s7 = inlined_call_operand.hbm [shape: f32[2,1,32], index: 7, kind: input, shape index: {}]
  %s8 = inlined_call_operand.hbm [shape: f32[2,1,32], index: 8, kind: input, shape index: {}]
  %s9 = inlined_call_operand.hbm [shape: bf16[2,32,64], index: 9, kind: input, shape index: {}]
  %s10 = inlined_call_operand.hbm [shape: f32[2,1,64], index: 10, kind: input, shape index: {}]
  %s11 = inlined_call_operand.vmem [shape: bf16[2,64,32], index: 11, kind: input, shape index: {}]
  %s12 = inlined_call_operand.hbm [shape: f32[2,1,32], index: 12, kind: input, shape index: {}]
  %s13 = inlined_call_operand.vmem [shape: f32[1,32], index: 13, kind: input, shape index: {}]
  %s14 = inlined_call_operand.vmem [shape: f32[1,32], index: 14, kind: input, shape index: {}]
  %s15 = inlined_call_operand.vmem [shape: bf16[32,64], index: 15, kind: input, shape index: {}]
  %s16 = inlined_call_operand.vmem [shape: f32[1,64], index: 16, kind: input, shape index: {}]
  %s17 = inlined_call_operand.hbm [shape: f32[2,8,64], index: 17, kind: output, shape index: {}]
  %s18 = sld [smem:[#allocation0]]
  $region149: #{tpu_custom_call.1} parent=0
    _
  %s20 = ssub.s32 1, %s18
  %s21 = scalar_select 0, %s20, %s18
  $region1: #{tpu_custom_call.1} parent=0
    #allocation3 [shape = 'u8[8192]{0}', space=vmem, size = 0x2000, scoped, tag = 'input window, operand 0, single buffered']
    #allocation4 [shape = 's32[2]{0}', space=sflag, size = 0x8, scoped, tag = 'scoped memory for tpu_custom_call.1']
    #allocation5 [shape = 's32[2]{0}', space=sflag, size = 0x8, scoped, tag = 'scoped memory for tpu_custom_call.1']
    #allocation6 [shape = 'u8[1024]{0}', space=vmem, size = 0x400, scoped, tag = 'input window, operand 1']
    #allocation7 [shape = 's32[2]{0}', space=sflag, size = 0x8, scoped, tag = 'scoped memory for tpu_custom_call.1']
    #allocation8 [shape = 'u8[1024]{0}', space=vmem, size = 0x400, scoped, tag = 'input window, operand 2']
    #allocation9 [shape = 'u8[1024]{0}', space=vmem, size = 0x400, scoped, tag = 'input window, operand 4']
    #allocation10 [shape = 's32[2]{0}', space=sflag, size = 0x8, scoped, tag = 'scoped memory for tpu_custom_call.1']
    #allocation11 [shape = 'u8[1024]{0}', space=vmem, size = 0x400, scoped, tag = 'input window, operand 6']
    #allocation12 [shape = 'u8[1024]{0}', space=vmem, size = 0x400, scoped, tag = 'input window, operand 7']
    #allocation13 [shape = 's32[2]{0}', space=sflag, size = 0x8, scoped, tag = 'scoped memory for tpu_custom_call.1']
    #allocation14 [shape = 'u8[1024]{0}', space=vmem, size = 0x400, scoped, tag = 'input window, operand 8']
    #allocation15 [shape = 'u8[16384]{0}', space=vmem, size = 0x4000, scoped, tag = 'input window, operand 9']
    #allocation16 [shape = 's32[2]{0}', space=sflag, size = 0x8, scoped, tag = 'scoped memory for tpu_custom_call.1']
    #allocation17 [shape = 'u8[1024]{0}', space=vmem, size = 0x400, scoped, tag = 'input window, operand 10']
    #allocation18 [shape = 'u8[1024]{0}', space=vmem, size = 0x400, scoped, tag = 'input window, operand 12']
    #allocation19 [shape = 's32[2]{0}', space=sflag, size = 0x8, scoped, tag = 'scoped memory for tpu_custom_call.1']
    #allocation20 [shape = 'u8[8192]{0}', space=vmem, size = 0x2000, scoped, tag = 'output window, operand 0, single buffered']
    %22 = vsyncpa [#allocation4], 0
    %23 = vsyncpa [#allocation7], 0
    %s24 = scalar_lea.sflag [#allocation7], 1
    %25 = vsyncpa %s24, 0
    %26 = vsyncpa [#allocation10], 0
    %s27 = scalar_lea.sflag [#allocation10], 1
    %28 = vsyncpa %s27, 0
    %29 = vsyncpa [#allocation13], 0
    %s30 = scalar_lea.sflag [#allocation13], 1
    %31 = vsyncpa %s30, 0
    %32 = vsyncpa [#allocation16], 0
    %s33 = scalar_lea.sflag [#allocation16], 1
    %34 = vsyncpa %s33, 0
    %35 = vsyncpa [#allocation19], 0
    %s36 = scalar_lea.sflag [#allocation19], 1
    %37 = vsyncpa %s36, 0
    %38 = vsyncpa [#allocation5], 0
    loop: start=0, step=1, limit=4
    $region2: #{tpu_custom_call.1} parent=1 // loop_pre_header
      _
    $region3: #{tpu_custom_call.1} parent=1 // loop_header
      %s40 = sphi 0, %s44
      %p41 = scmp.ge.s32.totalorder %s40, 4
      %s48 = sphi 0, %s48
      %s50 = sphi 0, %s48
      %s51 = sphi 0, %s50
      %s65 = sphi 0, %s51
      %s71 = sphi 0, %s73
      %s74 = sphi 0, %s71
      %s75 = sphi 0, %s74
      %s91 = sphi 0, %s75
      %s97 = sphi 0, %s99
      %s100 = sphi 0, %s97
      %s101 = sphi 0, %s100
      %s117 = sphi 0, %s101
      %s123 = sphi 0, %s125
      %s126 = sphi 0, %s123
      %s127 = sphi 0, %s126
      %s143 = sphi 0, %s127
      %s149 = sphi 0, %s151
      %s152 = sphi 0, %s149
      %s153 = sphi 0, %s152
      %s169 = sphi 0, %s153
      %s175 = sphi 0, %s177
      %s178 = sphi 0, %s175
      %s179 = sphi 0, %s178
      %s195 = sphi 0, %s179
      %s201 = sphi 0, %s203
      %s204 = sphi 0, %s201
      %s205 = sphi 0, %s204
      %s221 = sphi 0, %s205
      %s227 = sphi 0, %s229
      %s230 = sphi 0, %s227
      %s231 = sphi 0, %s230
      %s247 = sphi 0, %s231
      %s253 = sphi 0, %s255
      %s256 = sphi 0, %s253
      %s257 = sphi 0, %s256
      %s273 = sphi 0, %s257
      %s279 = sphi 0, %s281
      %s282 = sphi 0, %s279
      %s283 = sphi 0, %s282
      %s299 = sphi 0, %s283
      %s305 = sphi 0, %s307
      %s308 = sphi 0, %s305
      %s309 = sphi 0, %s308
      %s325 = sphi 0, %s309
      %s331 = sphi 0, %s333
      %s334 = sphi 0, %s331
      %s335 = sphi 0, %s334
      %s351 = sphi 0, %s335
      %s357 = sphi 0, %s359
      %s360 = sphi 0, %s357
      %s361 = sphi 0, %s360
      %s377 = sphi 0, %s361
      %s381 = sphi 0, %s381
      %s383 = sphi 0, %s381
      %s384 = sphi 0, %s383
      %s398 = sphi 0, %s384
      %s402 = sphi 0, %s402
      %s404 = sphi 0, %s402
      %s405 = sphi 0, %s404
      %s419 = sphi 0, %s405
      %s423 = sphi 0, %s423
      %s425 = sphi 0, %s423
      %s426 = sphi 0, %s425
      %s440 = sphi 0, %s426
      %s444 = sphi 0, %s444
      %s446 = sphi 0, %s444
      %s447 = sphi 0, %s446
      %s461 = sphi 0, %s447
      %s465 = sphi 0, %s465
      %s467 = sphi 0, %s465
      %s468 = sphi 0, %s467
      %s482 = sphi 0, %s468
    $region4: #{tpu_custom_call.1} parent=1 // loop_header_branch
      %43 = sbr.rel (%p41) target = $region8
    $region5: #{tpu_custom_call.1} parent=1 // loop_body
      %s45 = ssub.s32 %s40, 1
      %s46 = ssub.s32 %s40, 2
      %s47 = sadd.s32 %s40, 1
      %s49 = sadd.s32 %s48, 1
      %p52 = scmp.eq.s32.totalorder %s40, 1
      %p53 = scmp.ne.s32.totalorder %s48, %s50
      %p54 = scmp.eq.s32.totalorder %s40, 0
      %p55 = por %p53, %p54
      %p56 = scmp.ne.s32.totalorder %s48, %s50
      %p57 = scmp.eq.s32.totalorder %s45, 1
      %p58 = por %p56, %p57
      %p59 = scmp.ne.s32.totalorder %s50, %s51
      %p60 = scmp.eq.s32.totalorder %s45, 0
      %p61 = por %p59, %p60
      %p62 = scmp.ne.s32.totalorder %s50, %s51
      %p63 = scmp.eq.s32.totalorder %s46, 1
      %p64 = por %p62, %p63
      %p66 = scmp.ne.s32.totalorder %s51, %s65
      %p67 = scmp.eq.s32.totalorder %s46, 0
      %p68 = por %p66, %p67
      %s69 = ssub.s32 %s40, %s47
      %p70 = scmp.eq.s32.totalorder %s69, 0
      %s72 = sadd.s32 %s71, 1
      %s73 = scalar_select %p70, %s71, %s72
      %p76 = pneg %p70
      %p77 = scmp.eq.s32.totalorder %s40, 1
      %p78 = por %p76, %p77
      %p79 = scmp.ne.s32.totalorder %s71, %s74
      %p80 = scmp.eq.s32.totalorder %s40, 0
      %p81 = por %p79, %p80
      %p82 = scmp.ne.s32.totalorder %s71, %s74
      %p83 = scmp.eq.s32.totalorder %s45, 1
      %p84 = por %p82, %p83
      %p85 = scmp.ne.s32.totalorder %s74, %s75
      %p86 = scmp.eq.s32.totalorder %s45, 0
      %p87 = por %p85, %p86
      %p88 = scmp.ne.s32.totalorder %s74, %s75
      %p89 = scmp.eq.s32.totalorder %s46, 1
      %p90 = por %p88, %p89
      %p92 = scmp.ne.s32.totalorder %s75, %s91
      %p93 = scmp.eq.s32.totalorder %s46, 0
      %p94 = por %p92, %p93
      %s95 = ssub.s32 %s40, %s47
      %p96 = scmp.eq.s32.totalorder %s95, 0
      %s98 = sadd.s32 %s97, 1
      %s99 = scalar_select %p96, %s97, %s98
      %p102 = pneg %p96
      %p103 = scmp.eq.s32.totalorder %s40, 1
      %p104 = por %p102, %p103
      %p105 = scmp.ne.s32.totalorder %s97, %s100
      %p106 = scmp.eq.s32.totalorder %s40, 0
      %p107 = por %p105, %p106
      %p108 = scmp.ne.s32.totalorder %s97, %s100
      %p109 = scmp.eq.s32.totalorder %s45, 1
      %p110 = por %p108, %p109
      %p111 = scmp.ne.s32.totalorder %s100, %s101
      %p112 = scmp.eq.s32.totalorder %s45, 0
      %p113 = por %p111, %p112
      %p114 = scmp.ne.s32.totalorder %s100, %s101
      %p115 = scmp.eq.s32.totalorder %s46, 1
      %p116 = por %p114, %p115
      %p118 = scmp.ne.s32.totalorder %s101, %s117
      %p119 = scmp.eq.s32.totalorder %s46, 0
      %p120 = por %p118, %p119
      %s121 = ssub.s32 %s40, %s47
      %p122 = scmp.eq.s32.totalorder %s121, 0
      %s124 = sadd.s32 %s123, 1
      %s125 = scalar_select %p122, %s123, %s124
      %p128 = pneg %p122
      %p129 = scmp.eq.s32.totalorder %s40, 1
      %p130 = por %p128, %p129
      %p131 = scmp.ne.s32.totalorder %s123, %s126
      %p132 = scmp.eq.s32.totalorder %s40, 0
      %p133 = por %p131, %p132
      %p134 = scmp.ne.s32.totalorder %s123, %s126
      %p135 = scmp.eq.s32.totalorder %s45, 1
      %p136 = por %p134, %p135
      %p137 = scmp.ne.s32.totalorder %s126, %s127
      %p138 = scmp.eq.s32.totalorder %s45, 0
      %p139 = por %p137, %p138
      %p140 = scmp.ne.s32.totalorder %s126, %s127
      %p141 = scmp.eq.s32.totalorder %s46, 1
      %p142 = por %p140, %p141
      %p144 = scmp.ne.s32.totalorder %s127, %s143
      %p145 = scmp.eq.s32.totalorder %s46, 0
      %p146 = por %p144, %p145
      %s147 = ssub.s32 %s40, %s47
      %p148 = scmp.eq.s32.totalorder %s147, 0
      %s150 = sadd.s32 %s149, 1
      %s151 = scalar_select %p148, %s149, %s150
      %p154 = pneg %p148
      %p155 = scmp.eq.s32.totalorder %s40, 1
      %p156 = por %p154, %p155
      %p157 = scmp.ne.s32.totalorder %s149, %s152
      %p158 = scmp.eq.s32.totalorder %s40, 0
      %p159 = por %p157, %p158
      %p160 = scmp.ne.s32.totalorder %s149, %s152
      %p161 = scmp.eq.s32.totalorder %s45, 1
      %p162 = por %p160, %p161
      %p163 = scmp.ne.s32.totalorder %s152, %s153
      %p164 = scmp.eq.s32.totalorder %s45, 0
      %p165 = por %p163, %p164
      %p166 = scmp.ne.s32.totalorder %s152, %s153
      %p167 = scmp.eq.s32.totalorder %s46, 1
      %p168 = por %p166, %p167
      %p170 = scmp.ne.s32.totalorder %s153, %s169
      %p171 = scmp.eq.s32.totalorder %s46, 0
      %p172 = por %p170, %p171
      %s173 = ssub.s32 %s40, %s47
      %p174 = scmp.eq.s32.totalorder %s173, 0
      %s176 = sadd.s32 %s175, 1
      %s177 = scalar_select %p174, %s175, %s176
      %p180 = pneg %p174
      %p181 = scmp.eq.s32.totalorder %s40, 1
      %p182 = por %p180, %p181
      %p183 = scmp.ne.s32.totalorder %s175, %s178
      %p184 = scmp.eq.s32.totalorder %s40, 0
      %p185 = por %p183, %p184
      %p186 = scmp.ne.s32.totalorder %s175, %s178
      %p187 = scmp.eq.s32.totalorder %s45, 1
      %p188 = por %p186, %p187
      %p189 = scmp.ne.s32.totalorder %s178, %s179
      %p190 = scmp.eq.s32.totalorder %s45, 0
      %p191 = por %p189, %p190
      %p192 = scmp.ne.s32.totalorder %s178, %s179
      %p193 = scmp.eq.s32.totalorder %s46, 1
      %p194 = por %p192, %p193
      %p196 = scmp.ne.s32.totalorder %s179, %s195
      %p197 = scmp.eq.s32.totalorder %s46, 0
      %p198 = por %p196, %p197
      %s199 = ssub.s32 %s40, %s47
      %p200 = scmp.eq.s32.totalorder %s199, 0
      %s202 = sadd.s32 %s201, 1
      %s203 = scalar_select %p200, %s201, %s202
      %p206 = pneg %p200
      %p207 = scmp.eq.s32.totalorder %s40, 1
      %p208 = por %p206, %p207
      %p209 = scmp.ne.s32.totalorder %s201, %s204
      %p210 = scmp.eq.s32.totalorder %s40, 0
      %p211 = por %p209, %p210
      %p212 = scmp.ne.s32.totalorder %s201, %s204
      %p213 = scmp.eq.s32.totalorder %s45, 1
      %p214 = por %p212, %p213
      %p215 = scmp.ne.s32.totalorder %s204, %s205
      %p216 = scmp.eq.s32.totalorder %s45, 0
      %p217 = por %p215, %p216
      %p218 = scmp.ne.s32.totalorder %s204, %s205
      %p219 = scmp.eq.s32.totalorder %s46, 1
      %p220 = por %p218, %p219
      %p222 = scmp.ne.s32.totalorder %s205, %s221
      %p223 = scmp.eq.s32.totalorder %s46, 0
      %p224 = por %p222, %p223
      %s225 = ssub.s32 %s40, %s47
      %p226 = scmp.eq.s32.totalorder %s225, 0
      %s228 = sadd.s32 %s227, 1
      %s229 = scalar_select %p226, %s227, %s228
      %p232 = pneg %p226
      %p233 = scmp.eq.s32.totalorder %s40, 1
      %p234 = por %p232, %p233
      %p235 = scmp.ne.s32.totalorder %s227, %s230
      %p236 = scmp.eq.s32.totalorder %s40, 0
      %p237 = por %p235, %p236
      %p238 = scmp.ne.s32.totalorder %s227, %s230
      %p239 = scmp.eq.s32.totalorder %s45, 1
      %p240 = por %p238, %p239
      %p241 = scmp.ne.s32.totalorder %s230, %s231
      %p242 = scmp.eq.s32.totalorder %s45, 0
      %p243 = por %p241, %p242
      %p244 = scmp.ne.s32.totalorder %s230, %s231
      %p245 = scmp.eq.s32.totalorder %s46, 1
      %p246 = por %p244, %p245
      %p248 = scmp.ne.s32.totalorder %s231, %s247
      %p249 = scmp.eq.s32.totalorder %s46, 0
      %p250 = por %p248, %p249
      %s251 = ssub.s32 %s40, %s47
      %p252 = scmp.eq.s32.totalorder %s251, 0
      %s254 = sadd.s32 %s253, 1
      %s255 = scalar_select %p252, %s253, %s254
      %p258 = pneg %p252
      %p259 = scmp.eq.s32.totalorder %s40, 1
      %p260 = por %p258, %p259
      %p261 = scmp.ne.s32.totalorder %s253, %s256
      %p262 = scmp.eq.s32.totalorder %s40, 0
      %p263 = por %p261, %p262
      %p264 = scmp.ne.s32.totalorder %s253, %s256
      %p265 = scmp.eq.s32.totalorder %s45, 1
      %p266 = por %p264, %p265
      %p267 = scmp.ne.s32.totalorder %s256, %s257
      %p268 = scmp.eq.s32.totalorder %s45, 0
      %p269 = por %p267, %p268
      %p270 = scmp.ne.s32.totalorder %s256, %s257
      %p271 = scmp.eq.s32.totalorder %s46, 1
      %p272 = por %p270, %p271
      %p274 = scmp.ne.s32.totalorder %s257, %s273
      %p275 = scmp.eq.s32.totalorder %s46, 0
      %p276 = por %p274, %p275
      %s277 = ssub.s32 %s40, %s47
      %p278 = scmp.eq.s32.totalorder %s277, 0
      %s280 = sadd.s32 %s279, 1
      %s281 = scalar_select %p278, %s279, %s280
      %p284 = pneg %p278
      %p285 = scmp.eq.s32.totalorder %s40, 1
      %p286 = por %p284, %p285
      %p287 = scmp.ne.s32.totalorder %s279, %s282
      %p288 = scmp.eq.s32.totalorder %s40, 0
      %p289 = por %p287, %p288
      %p290 = scmp.ne.s32.totalorder %s279, %s282
      %p291 = scmp.eq.s32.totalorder %s45, 1
      %p292 = por %p290, %p291
      %p293 = scmp.ne.s32.totalorder %s282, %s283
      %p294 = scmp.eq.s32.totalorder %s45, 0
      %p295 = por %p293, %p294
      %p296 = scmp.ne.s32.totalorder %s282, %s283
      %p297 = scmp.eq.s32.totalorder %s46, 1
      %p298 = por %p296, %p297
      %p300 = scmp.ne.s32.totalorder %s283, %s299
      %p301 = scmp.eq.s32.totalorder %s46, 0
      %p302 = por %p300, %p301
      %s303 = ssub.s32 %s40, %s47
      %p304 = scmp.eq.s32.totalorder %s303, 0
      %s306 = sadd.s32 %s305, 1
      %s307 = scalar_select %p304, %s305, %s306
      %p310 = pneg %p304
      %p311 = scmp.eq.s32.totalorder %s40, 1
      %p312 = por %p310, %p311
      %p313 = scmp.ne.s32.totalorder %s305, %s308
      %p314 = scmp.eq.s32.totalorder %s40, 0
      %p315 = por %p313, %p314
      %p316 = scmp.ne.s32.totalorder %s305, %s308
      %p317 = scmp.eq.s32.totalorder %s45, 1
      %p318 = por %p316, %p317
      %p319 = scmp.ne.s32.totalorder %s308, %s309
      %p320 = scmp.eq.s32.totalorder %s45, 0
      %p321 = por %p319, %p320
      %p322 = scmp.ne.s32.totalorder %s308, %s309
      %p323 = scmp.eq.s32.totalorder %s46, 1
      %p324 = por %p322, %p323
      %p326 = scmp.ne.s32.totalorder %s309, %s325
      %p327 = scmp.eq.s32.totalorder %s46, 0
      %p328 = por %p326, %p327
      %s329 = ssub.s32 %s40, %s47
      %p330 = scmp.eq.s32.totalorder %s329, 0
      %s332 = sadd.s32 %s331, 1
      %s333 = scalar_select %p330, %s331, %s332
      %p336 = pneg %p330
      %p337 = scmp.eq.s32.totalorder %s40, 1
      %p338 = por %p336, %p337
      %p339 = scmp.ne.s32.totalorder %s331, %s334
      %p340 = scmp.eq.s32.totalorder %s40, 0
      %p341 = por %p339, %p340
      %p342 = scmp.ne.s32.totalorder %s331, %s334
      %p343 = scmp.eq.s32.totalorder %s45, 1
      %p344 = por %p342, %p343
      %p345 = scmp.ne.s32.totalorder %s334, %s335
      %p346 = scmp.eq.s32.totalorder %s45, 0
      %p347 = por %p345, %p346
      %p348 = scmp.ne.s32.totalorder %s334, %s335
      %p349 = scmp.eq.s32.totalorder %s46, 1
      %p350 = por %p348, %p349
      %p352 = scmp.ne.s32.totalorder %s335, %s351
      %p353 = scmp.eq.s32.totalorder %s46, 0
      %p354 = por %p352, %p353
      %s355 = ssub.s32 %s40, %s47
      %p356 = scmp.eq.s32.totalorder %s355, 0
      %s358 = sadd.s32 %s357, 1
      %s359 = scalar_select %p356, %s357, %s358
      %p362 = pneg %p356
      %p363 = scmp.eq.s32.totalorder %s40, 1
      %p364 = por %p362, %p363
      %p365 = scmp.ne.s32.totalorder %s357, %s360
      %p366 = scmp.eq.s32.totalorder %s40, 0
      %p367 = por %p365, %p366
      %p368 = scmp.ne.s32.totalorder %s357, %s360
      %p369 = scmp.eq.s32.totalorder %s45, 1
      %p370 = por %p368, %p369
      %p371 = scmp.ne.s32.totalorder %s360, %s361
      %p372 = scmp.eq.s32.totalorder %s45, 0
      %p373 = por %p371, %p372
      %p374 = scmp.ne.s32.totalorder %s360, %s361
      %p375 = scmp.eq.s32.totalorder %s46, 1
      %p376 = por %p374, %p375
      %p378 = scmp.ne.s32.totalorder %s361, %s377
      %p379 = scmp.eq.s32.totalorder %s46, 0
      %p380 = por %p378, %p379
      %s382 = sadd.s32 %s381, 1
      %p385 = scmp.eq.s32.totalorder %s40, 1
      %p386 = scmp.ne.s32.totalorder %s381, %s383
      %p387 = scmp.eq.s32.totalorder %s40, 0
      %p388 = por %p386, %p387
      %p389 = scmp.ne.s32.totalorder %s381, %s383
      %p390 = scmp.eq.s32.totalorder %s45, 1
      %p391 = por %p389, %p390
      %p392 = scmp.ne.s32.totalorder %s383, %s384
      %p393 = scmp.eq.s32.totalorder %s45, 0
      %p394 = por %p392, %p393
      %p395 = scmp.ne.s32.totalorder %s383, %s384
      %p396 = scmp.eq.s32.totalorder %s46, 1
      %p397 = por %p395, %p396
      %p399 = scmp.ne.s32.totalorder %s384, %s398
      %p400 = scmp.eq.s32.totalorder %s46, 0
      %p401 = por %p399, %p400
      %s403 = sadd.s32 %s402, 1
      %p406 = scmp.eq.s32.totalorder %s40, 1
      %p407 = scmp.ne.s32.totalorder %s402, %s404
      %p408 = scmp.eq.s32.totalorder %s40, 0
      %p409 = por %p407, %p408
      %p410 = scmp.ne.s32.totalorder %s402, %s404
      %p411 = scmp.eq.s32.totalorder %s45, 1
      %p412 = por %p410, %p411
      %p413 = scmp.ne.s32.totalorder %s404, %s405
      %p414 = scmp.eq.s32.totalorder %s45, 0
      %p415 = por %p413, %p414
      %p416 = scmp.ne.s32.totalorder %s404, %s405
      %p417 = scmp.eq.s32.totalorder %s46, 1
      %p418 = por %p416, %p417
      %p420 = scmp.ne.s32.totalorder %s405, %s419
      %p421 = scmp.eq.s32.totalorder %s46, 0
      %p422 = por %p420, %p421
      %s424 = sadd.s32 %s423, 1
      %p427 = scmp.eq.s32.totalorder %s40, 1
      %p428 = scmp.ne.s32.totalorder %s423, %s425
      %p429 = scmp.eq.s32.totalorder %s40, 0
      %p430 = por %p428, %p429
      %p431 = scmp.ne.s32.totalorder %s423, %s425
      %p432 = scmp.eq.s32.totalorder %s45, 1
      %p433 = por %p431, %p432
      %p434 = scmp.ne.s32.totalorder %s425, %s426
      %p435 = scmp.eq.s32.totalorder %s45, 0
      %p436 = por %p434, %p435
      %p437 = scmp.ne.s32.totalorder %s425, %s426
      %p438 = scmp.eq.s32.totalorder %s46, 1
      %p439 = por %p437, %p438
      %p441 = scmp.ne.s32.totalorder %s426, %s440
      %p442 = scmp.eq.s32.totalorder %s46, 0
      %p443 = por %p441, %p442
      %s445 = sadd.s32 %s444, 1
      %p448 = scmp.eq.s32.totalorder %s40, 1
      %p449 = scmp.ne.s32.totalorder %s444, %s446
      %p450 = scmp.eq.s32.totalorder %s40, 0
      %p451 = por %p449, %p450
      %p452 = scmp.ne.s32.totalorder %s444, %s446
      %p453 = scmp.eq.s32.totalorder %s45, 1
      %p454 = por %p452, %p453
      %p455 = scmp.ne.s32.totalorder %s446, %s447
      %p456 = scmp.eq.s32.totalorder %s45, 0
      %p457 = por %p455, %p456
      %p458 = scmp.ne.s32.totalorder %s446, %s447
      %p459 = scmp.eq.s32.totalorder %s46, 1
      %p460 = por %p458, %p459
      %p462 = scmp.ne.s32.totalorder %s447, %s461
      %p463 = scmp.eq.s32.totalorder %s46, 0
      %p464 = por %p462, %p463
      %s466 = sadd.s32 %s465, 1
      %p469 = scmp.eq.s32.totalorder %s40, 1
      %p470 = scmp.ne.s32.totalorder %s465, %s467
      %p471 = scmp.eq.s32.totalorder %s40, 0
      %p472 = por %p470, %p471
      %p473 = scmp.ne.s32.totalorder %s465, %s467
      %p474 = scmp.eq.s32.totalorder %s45, 1
      %p475 = por %p473, %p474
      %p476 = scmp.ne.s32.totalorder %s467, %s468
      %p477 = scmp.eq.s32.totalorder %s45, 0
      %p478 = por %p476, %p477
      %p479 = scmp.ne.s32.totalorder %s467, %s468
      %p480 = scmp.eq.s32.totalorder %s46, 1
      %p481 = por %p479, %p480
      %p483 = scmp.ne.s32.totalorder %s468, %s482
      %p484 = scmp.eq.s32.totalorder %s46, 0
      %p485 = por %p483, %p484
      %p486 = scmp.le.s32.totalorder 1, %s40
      %p487 = scmp.lt.s32.totalorder %s40, 3
      %p488 = pnand %p486, %p487
      %p489 = pneg %p488
      // Predicated region
      $region9: #{tpu_custom_call.1} parent=5 // pred_check
        _
      $region10: #{tpu_custom_call.1} parent=5 // pred_check_branch
        %491 = sbr.rel (%p488) target = $region12
      $region11: #{tpu_custom_call.1} parent=5 // pred_region
        %s492 = ssub.s32 %s40, 1
        // Predicated region
        $region13: #{tpu_custom_call.1} parent=11 // pred_check
          %p493 = pneg %p61
        $region14: #{tpu_custom_call.1} parent=11 // pred_check_branch
          %495 = sbr.rel (%p493) target = $region16
        $region15: #{tpu_custom_call.1} parent=11 // pred_region
          %s497 = ssub.s32 256, 256
          %498 = vsyncadd [#allocation4], %s497
          %s499 = sshll.u32 [#allocation3], 4
          %s500 = int_to_ptr.vmem [resolvable:$true] %s499
          %505 = dma.hbm_to_vmem [thread:$0]  %s0, 256, %s500, [#allocation4], 128, 128, 8
        $region16: #{tpu_custom_call.1} parent=11 // pred_fallthru
          _
        // Predicated region
        $region17: #{tpu_custom_call.1} parent=11 // pred_check
          %p506 = pneg %p394
        $region18: #{tpu_custom_call.1} parent=11 // pred_check_branch
          %508 = sbr.rel (%p506) target = $region20
        $region19: #{tpu_custom_call.1} parent=11 // pred_region
          _
        $region20: #{tpu_custom_call.1} parent=11 // pred_fallthru
          _
        // Predicated region
        $region21: #{tpu_custom_call.1} parent=11 // pred_check
          %p509 = pneg %p415
        $region22: #{tpu_custom_call.1} parent=11 // pred_check_branch
          %511 = sbr.rel (%p509) target = $region24
        $region23: #{tpu_custom_call.1} parent=11 // pred_region
          _
        $region24: #{tpu_custom_call.1} parent=11 // pred_fallthru
          _
        // Predicated region
        $region25: #{tpu_custom_call.1} parent=11 // pred_check
          %p512 = pneg %p436
        $region26: #{tpu_custom_call.1} parent=11 // pred_check_branch
          %514 = sbr.rel (%p512) target = $region28
        $region27: #{tpu_custom_call.1} parent=11 // pred_region
          _
        $region28: #{tpu_custom_call.1} parent=11 // pred_fallthru
          _
        // Predicated region
        $region29: #{tpu_custom_call.1} parent=11 // pred_check
          %p515 = pneg %p457
        $region30: #{tpu_custom_call.1} parent=11 // pred_check_branch
          %517 = sbr.rel (%p515) target = $region32
        $region31: #{tpu_custom_call.1} parent=11 // pred_region
          _
        $region32: #{tpu_custom_call.1} parent=11 // pred_fallthru
          _
      $region12: #{tpu_custom_call.1} parent=5 // pred_fallthru
        _
      %p518 = scmp.lt.s32.totalorder %s40, 2
      // Predicated region
      $region33: #{tpu_custom_call.1} parent=5 // pred_check
        %p519 = pneg %p518
      $region34: #{tpu_custom_call.1} parent=5 // pred_check_branch
        %521 = sbr.rel (%p519) target = $region36
      $region35: #{tpu_custom_call.1} parent=5 // pred_region
        // Predicated region
        $region37: #{tpu_custom_call.1} parent=35 // pred_check
          %p522 = pneg %p81
        $region38: #{tpu_custom_call.1} parent=35 // pred_check_branch
          %524 = sbr.rel (%p522) target = $region40
        $region39: #{tpu_custom_call.1} parent=35 // pred_region
          %s525 = sand.u32 %s40, 1
          %s526 = scalar_lea.sflag [#allocation7], %s525
          %s527 = sand.u32 %s71, 1
          %s528 = scalar_lea.vmem [#allocation6], %s527
          %s530 = ssub.s32 16, 16
          %531 = vsyncadd %s526, %s530
          %s532 = smul.addr %s40, 16
          %s533 = scalar_lea.hbm %s1, %s532
          %s535 = sshll.u32 %s528, 4
          %s536 = int_to_ptr.vmem [resolvable:$true] %s535
          %538 = dma.hbm_to_vmem [thread:$0]  %s533, 16, %s536, %s526
        $region40: #{tpu_custom_call.1} parent=35 // pred_fallthru
          _
        // Predicated region
        $region41: #{tpu_custom_call.1} parent=35 // pred_check
          %p539 = pneg %p107
        $region42: #{tpu_custom_call.1} parent=35 // pred_check_branch
          %541 = sbr.rel (%p539) target = $region44
        $region43: #{tpu_custom_call.1} parent=35 // pred_region
          %s542 = sand.u32 %s40, 1
          %s543 = scalar_lea.sflag [#allocation7], %s542
          %s544 = sand.u32 %s97, 1
          %s545 = scalar_lea.vmem [#allocation8], %s544
          %s547 = ssub.s32 16, 16
          %548 = vsyncadd %s543, %s547
          %s549 = smul.addr %s40, 16
          %s550 = scalar_lea.hbm %s2, %s549
          %s552 = sshll.u32 %s545, 4
          %s553 = int_to_ptr.vmem [resolvable:$true] %s552
          %555 = dma.hbm_to_vmem [thread:$0]  %s550, 16, %s553, %s543
        $region44: #{tpu_custom_call.1} parent=35 // pred_fallthru
          _
        // Predicated region
        $region45: #{tpu_custom_call.1} parent=35 // pred_check
          %p556 = pneg %p133
        $region46: #{tpu_custom_call.1} parent=35 // pred_check_branch
          %558 = sbr.rel (%p556) target = $region48
        $region47: #{tpu_custom_call.1} parent=35 // pred_region
          %p559 = scmp.lt.s32.totalorder %s40, 1
          %s560 = scalar_select %p559, %s40, 1
          %s561 = smul.addr %s560, 4
          %s562 = smul.addr %s561, 4
          %s563 = scalar_lea.vmem %s3, %s562
        $region48: #{tpu_custom_call.1} parent=35 // pred_fallthru
          _
        // Predicated region
        $region49: #{tpu_custom_call.1} parent=35 // pred_check
          %p564 = pneg %p159
        $region50: #{tpu_custom_call.1} parent=35 // pred_check_branch
          %566 = sbr.rel (%p564) target = $region52
        $region51: #{tpu_custom_call.1} parent=35 // pred_region
          %s567 = sand.u32 %s40, 1
          %s568 = scalar_lea.sflag [#allocation10], %s567
          %s569 = sand.u32 %s149, 1
          %s570 = scalar_lea.vmem [#allocation9], %s569
          %s572 = ssub.s32 16, 16
          %573 = vsyncadd %s568, %s572
          %s574 = smul.addr %s40, 16
          %s575 = scalar_lea.hbm %s4, %s574
          %s577 = sshll.u32 %s570, 4
          %s578 = int_to_ptr.vmem [resolvable:$true] %s577
          %580 = dma.hbm_to_vmem [thread:$0]  %s575, 16, %s578, %s568
        $region52: #{tpu_custom_call.1} parent=35 // pred_fallthru
          _
        // Predicated region
        $region53: #{tpu_custom_call.1} parent=35 // pred_check
          %p581 = pneg %p185
        $region54: #{tpu_custom_call.1} parent=35 // pred_check_branch
          %583 = sbr.rel (%p581) target = $region56
        $region55: #{tpu_custom_call.1} parent=35 // pred_region
          %p584 = scmp.lt.s32.totalorder %s40, 1
          %s585 = scalar_select %p584, %s40, 1
          %s586 = smul.addr %s585, 4
          %s587 = smul.addr %s586, 8
          %s588 = scalar_lea.vmem %s5, %s587
        $region56: #{tpu_custom_call.1} parent=35 // pred_fallthru
          _
        // Predicated region
        $region57: #{tpu_custom_call.1} parent=35 // pred_check
          %p589 = pneg %p211
        $region58: #{tpu_custom_call.1} parent=35 // pred_check_branch
          %591 = sbr.rel (%p589) target = $region60
        $region59: #{tpu_custom_call.1} parent=35 // pred_region
          %s592 = sand.u32 %s40, 1
          %s593 = scalar_lea.sflag [#allocation10], %s592
          %s594 = sand.u32 %s201, 1
          %s595 = scalar_lea.vmem [#allocation11], %s594
          %s597 = ssub.s32 16, 16
          %598 = vsyncadd %s593, %s597
          %s599 = smul.addr %s40, 16
          %s600 = scalar_lea.hbm %s6, %s599
          %s602 = sshll.u32 %s595, 4
          %s603 = int_to_ptr.vmem [resolvable:$true] %s602
          %605 = dma.hbm_to_vmem [thread:$0]  %s600, 16, %s603, %s593
        $region60: #{tpu_custom_call.1} parent=35 // pred_fallthru
          _
        // Predicated region
        $region61: #{tpu_custom_call.1} parent=35 // pred_check
          %p606 = pneg %p237
        $region62: #{tpu_custom_call.1} parent=35 // pred_check_branch
          %608 = sbr.rel (%p606) target = $region64
        $region63: #{tpu_custom_call.1} parent=35 // pred_region
          %s609 = sand.u32 %s40, 1
          %s610 = scalar_lea.sflag [#allocation13], %s609
          %s611 = sand.u32 %s227, 1
          %s612 = scalar_lea.vmem [#allocation12], %s611
          %s614 = ssub.s32 16, 16
          %615 = vsyncadd %s610, %s614
          %s616 = smul.addr %s40, 16
          %s617 = scalar_lea.hbm %s7, %s616
          %s619 = sshll.u32 %s612, 4
          %s620 = int_to_ptr.vmem [resolvable:$true] %s619
          %622 = dma.hbm_to_vmem [thread:$0]  %s617, 16, %s620, %s610
        $region64: #{tpu_custom_call.1} parent=35 // pred_fallthru
          _
        // Predicated region
        $region65: #{tpu_custom_call.1} parent=35 // pred_check
          %p623 = pneg %p263
        $region66: #{tpu_custom_call.1} parent=35 // pred_check_branch
          %625 = sbr.rel (%p623) target = $region68
        $region67: #{tpu_custom_call.1} parent=35 // pred_region
          %s626 = sand.u32 %s40, 1
          %s627 = scalar_lea.sflag [#allocation13], %s626
          %s628 = sand.u32 %s253, 1
          %s629 = scalar_lea.vmem [#allocation14], %s628
          %s631 = ssub.s32 16, 16
          %632 = vsyncadd %s627, %s631
          %s633 = smul.addr %s40, 16
          %s634 = scalar_lea.hbm %s8, %s633
          %s636 = sshll.u32 %s629, 4
          %s637 = int_to_ptr.vmem [resolvable:$true] %s636
          %639 = dma.hbm_to_vmem [thread:$0]  %s634, 16, %s637, %s627
        $region68: #{tpu_custom_call.1} parent=35 // pred_fallthru
          _
        // Predicated region
        $region69: #{tpu_custom_call.1} parent=35 // pred_check
          %p640 = pneg %p289
        $region70: #{tpu_custom_call.1} parent=35 // pred_check_branch
          %642 = sbr.rel (%p640) target = $region72
        $region71: #{tpu_custom_call.1} parent=35 // pred_region
          %s643 = sand.u32 %s40, 1
          %s644 = scalar_lea.sflag [#allocation16], %s643
          %s645 = sand.u32 %s279, 1
          %s646 = smul.addr %s645, 16
          %s647 = scalar_lea.vmem [#allocation15], %s646
          %s649 = ssub.s32 256, 256
          %650 = vsyncadd %s644, %s649
          %s651 = smul.addr %s40, 4
          %s652 = smul.addr %s651, 64
          %s653 = scalar_lea.hbm %s9, %s652
          %s654 = sshll.u32 %s647, 4
          %s655 = int_to_ptr.vmem [resolvable:$true] %s654
          %660 = dma.hbm_to_vmem [thread:$0]  %s653, 256, %s655, %s644, 64, 64, 4
        $region72: #{tpu_custom_call.1} parent=35 // pred_fallthru
          _
        // Predicated region
        $region73: #{tpu_custom_call.1} parent=35 // pred_check
          %p661 = pneg %p315
        $region74: #{tpu_custom_call.1} parent=35 // pred_check_branch
          %663 = sbr.rel (%p661) target = $region76
        $region75: #{tpu_custom_call.1} parent=35 // pred_region
          %s664 = sand.u32 %s40, 1
          %s665 = scalar_lea.sflag [#allocation16], %s664
          %s666 = sand.u32 %s305, 1
          %s667 = scalar_lea.vmem [#allocation17], %s666
          %s669 = ssub.s32 16, 16
          %670 = vsyncadd %s665, %s669
          %s671 = smul.addr %s40, 16
          %s672 = scalar_lea.hbm %s10, %s671
          %s674 = sshll.u32 %s667, 4
          %s675 = int_to_ptr.vmem [resolvable:$true] %s674
          %677 = dma.hbm_to_vmem [thread:$0]  %s672, 16, %s675, %s665
        $region76: #{tpu_custom_call.1} parent=35 // pred_fallthru
          _
        // Predicated region
        $region77: #{tpu_custom_call.1} parent=35 // pred_check
          %p678 = pneg %p341
        $region78: #{tpu_custom_call.1} parent=35 // pred_check_branch
          %680 = sbr.rel (%p678) target = $region80
        $region79: #{tpu_custom_call.1} parent=35 // pred_region
          %p681 = scmp.lt.s32.totalorder %s40, 1
          %s682 = scalar_select %p681, %s40, 1
          %s683 = smul.addr %s682, 8
          %s684 = smul.addr %s683, 4
          %s685 = scalar_lea.vmem %s11, %s684
        $region80: #{tpu_custom_call.1} parent=35 // pred_fallthru
          _
        // Predicated region
        $region81: #{tpu_custom_call.1} parent=35 // pred_check
          %p686 = pneg %p367
        $region82: #{tpu_custom_call.1} parent=35 // pred_check_branch
          %688 = sbr.rel (%p686) target = $region84
        $region83: #{tpu_custom_call.1} parent=35 // pred_region
          %s689 = sand.u32 %s357, 1
          %s690 = scalar_lea.sflag [#allocation19], %s689
          %s691 = sand.u32 %s357, 1
          %s692 = scalar_lea.vmem [#allocation18], %s691
          %s694 = ssub.s32 16, 16
          %695 = vsyncadd %s690, %s694
          %s696 = smul.addr %s40, 16
          %s697 = scalar_lea.hbm %s12, %s696
          %s699 = sshll.u32 %s692, 4
          %s700 = int_to_ptr.vmem [resolvable:$true] %s699
          %702 = dma.hbm_to_vmem [thread:$0]  %s697, 16, %s700, %s690
        $region84: #{tpu_custom_call.1} parent=35 // pred_fallthru
          _
      $region36: #{tpu_custom_call.1} parent=5 // pred_fallthru
        _
      %p703 = scmp.le.s32.totalorder 1, %s40
      %p704 = scmp.lt.s32.totalorder %s40, 3
      %p705 = pnand %p703, %p704
      %p706 = pneg %p705
      // Predicated region
      $region85: #{tpu_custom_call.1} parent=5 // pred_check
        _
      $region86: #{tpu_custom_call.1} parent=5 // pred_check_branch
        %708 = sbr.rel (%p705) target = $region88
      $region87: #{tpu_custom_call.1} parent=5 // pred_region
        %s709 = ssub.s32 %s40, 1
        // Predicated region
        $region89: #{tpu_custom_call.1} parent=87 // pred_check
          %p710 = pneg %p61
        $region90: #{tpu_custom_call.1} parent=87 // pred_check_branch
          %712 = sbr.rel (%p710) target = $region92
        $region91: #{tpu_custom_call.1} parent=87 // pred_region
          %713 = dma.done [#allocation4], 256
        $region92: #{tpu_custom_call.1} parent=87 // pred_fallthru
          _
        %s714 = sand.u32 %s45, 1
        %s715 = scalar_lea.sflag [#allocation7], %s714
        %s716 = sand.u32 %s74, 1
        %s717 = scalar_lea.vmem [#allocation6], %s716
        // Predicated region
        $region93: #{tpu_custom_call.1} parent=87 // pred_check
          %p718 = pneg %p87
        $region94: #{tpu_custom_call.1} parent=87 // pred_check_branch
          %720 = sbr.rel (%p718) target = $region96
        $region95: #{tpu_custom_call.1} parent=87 // pred_region
          %721 = dma.done %s715, 16
        $region96: #{tpu_custom_call.1} parent=87 // pred_fallthru
          _
        %s722 = sand.u32 %s45, 1
        %s723 = scalar_lea.sflag [#allocation7], %s722
        %s724 = sand.u32 %s100, 1
        %s725 = scalar_lea.vmem [#allocation8], %s724
        // Predicated region
        $region97: #{tpu_custom_call.1} parent=87 // pred_check
          %p726 = pneg %p113
        $region98: #{tpu_custom_call.1} parent=87 // pred_check_branch
          %728 = sbr.rel (%p726) target = $region100
        $region99: #{tpu_custom_call.1} parent=87 // pred_region
          %729 = dma.done %s723, 16
        $region100: #{tpu_custom_call.1} parent=87 // pred_fallthru
          _
        %s730 = sand.u32 %s45, 1
        %s731 = scalar_lea.sflag [#allocation10], %s730
        %s732 = sand.u32 %s152, 1
        %s733 = scalar_lea.vmem [#allocation9], %s732
        // Predicated region
        $region101: #{tpu_custom_call.1} parent=87 // pred_check
          %p734 = pneg %p165
        $region102: #{tpu_custom_call.1} parent=87 // pred_check_branch
          %736 = sbr.rel (%p734) target = $region104
        $region103: #{tpu_custom_call.1} parent=87 // pred_region
          %737 = dma.done %s731, 16
        $region104: #{tpu_custom_call.1} parent=87 // pred_fallthru
          _
        %s738 = sand.u32 %s45, 1
        %s739 = scalar_lea.sflag [#allocation10], %s738
        %s740 = sand.u32 %s204, 1
        %s741 = scalar_lea.vmem [#allocation11], %s740
        // Predicated region
        $region105: #{tpu_custom_call.1} parent=87 // pred_check
          %p742 = pneg %p217
        $region106: #{tpu_custom_call.1} parent=87 // pred_check_branch
          %744 = sbr.rel (%p742) target = $region108
        $region107: #{tpu_custom_call.1} parent=87 // pred_region
          %745 = dma.done %s739, 16
        $region108: #{tpu_custom_call.1} parent=87 // pred_fallthru
          _
        %s746 = sand.u32 %s45, 1
        %s747 = scalar_lea.sflag [#allocation13], %s746
        %s748 = sand.u32 %s230, 1
        %s749 = scalar_lea.vmem [#allocation12], %s748
        // Predicated region
        $region109: #{tpu_custom_call.1} parent=87 // pred_check
          %p750 = pneg %p243
        $region110: #{tpu_custom_call.1} parent=87 // pred_check_branch
          %752 = sbr.rel (%p750) target = $region112
        $region111: #{tpu_custom_call.1} parent=87 // pred_region
          %753 = dma.done %s747, 16
        $region112: #{tpu_custom_call.1} parent=87 // pred_fallthru
          _
        %s754 = sand.u32 %s45, 1
        %s755 = scalar_lea.sflag [#allocation13], %s754
        %s756 = sand.u32 %s256, 1
        %s757 = scalar_lea.vmem [#allocation14], %s756
        // Predicated region
        $region113: #{tpu_custom_call.1} parent=87 // pred_check
          %p758 = pneg %p269
        $region114: #{tpu_custom_call.1} parent=87 // pred_check_branch
          %760 = sbr.rel (%p758) target = $region116
        $region115: #{tpu_custom_call.1} parent=87 // pred_region
          %761 = dma.done %s755, 16
        $region116: #{tpu_custom_call.1} parent=87 // pred_fallthru
          _
        %s762 = sand.u32 %s45, 1
        %s763 = scalar_lea.sflag [#allocation16], %s762
        %s764 = sand.u32 %s282, 1
        %s765 = smul.addr %s764, 16
        %s766 = scalar_lea.vmem [#allocation15], %s765
        // Predicated region
        $region117: #{tpu_custom_call.1} parent=87 // pred_check
          %p767 = pneg %p295
        $region118: #{tpu_custom_call.1} parent=87 // pred_check_branch
          %769 = sbr.rel (%p767) target = $region120
        $region119: #{tpu_custom_call.1} parent=87 // pred_region
          %770 = dma.done %s763, 256
        $region120: #{tpu_custom_call.1} parent=87 // pred_fallthru
          _
        %s771 = sand.u32 %s45, 1
        %s772 = scalar_lea.sflag [#allocation16], %s771
        %s773 = sand.u32 %s308, 1
        %s774 = scalar_lea.vmem [#allocation17], %s773
        // Predicated region
        $region121: #{tpu_custom_call.1} parent=87 // pred_check
          %p775 = pneg %p321
        $region122: #{tpu_custom_call.1} parent=87 // pred_check_branch
          %777 = sbr.rel (%p775) target = $region124
        $region123: #{tpu_custom_call.1} parent=87 // pred_region
          %778 = dma.done %s772, 16
        $region124: #{tpu_custom_call.1} parent=87 // pred_fallthru
          _
        %s779 = sand.u32 %s360, 1
        %s780 = scalar_lea.sflag [#allocation19], %s779
        %s781 = sand.u32 %s360, 1
        %s782 = scalar_lea.vmem [#allocation18], %s781
        // Predicated region
        $region125: #{tpu_custom_call.1} parent=87 // pred_check
          %p783 = pneg %p373
        $region126: #{tpu_custom_call.1} parent=87 // pred_check_branch
          %785 = sbr.rel (%p783) target = $region128
        $region127: #{tpu_custom_call.1} parent=87 // pred_region
          %786 = dma.done %s780, 16
        $region128: #{tpu_custom_call.1} parent=87 // pred_fallthru
          _
        %p787 = pneg %p61
        %p788 = pneg %p58
        %s789 = sand.u32 %s45, 1
        %s790 = scalar_lea.sflag [#allocation7], %s789
        %s791 = sand.u32 %s74, 1
        %s792 = scalar_lea.vmem [#allocation6], %s791
        %p793 = pneg %p87
        %p794 = pneg %p84
        %s795 = sand.u32 %s45, 1
        %s796 = scalar_lea.sflag [#allocation7], %s795
        %s797 = sand.u32 %s100, 1
        %s798 = scalar_lea.vmem [#allocation8], %s797
        %p799 = pneg %p113
        %p800 = pneg %p110
        %p801 = scmp.lt.s32.totalorder %s45, 1
        %s802 = scalar_select %p801, %s45, 1
        %s803 = smul.addr %s802, 4
        %s804 = smul.addr %s803, 4
        %s805 = scalar_lea.vmem %s3, %s804
        %p806 = pneg %p139
        %p807 = pneg %p136
        %s808 = sand.u32 %s45, 1
        %s809 = scalar_lea.sflag [#allocation10], %s808
        %s810 = sand.u32 %s152, 1
        %s811 = scalar_lea.vmem [#allocation9], %s810
        %p812 = pneg %p165
        %p813 = pneg %p162
        %p814 = scmp.lt.s32.totalorder %s45, 1
        %s815 = scalar_select %p814, %s45, 1
        %s816 = smul.addr %s815, 4
        %s817 = smul.addr %s816, 8
        %s818 = scalar_lea.vmem %s5, %s817
        %p819 = pneg %p191
        %p820 = pneg %p188
        %s821 = sand.u32 %s45, 1
        %s822 = scalar_lea.sflag [#allocation10], %s821
        %s823 = sand.u32 %s204, 1
        %s824 = scalar_lea.vmem [#allocation11], %s823
        %p825 = pneg %p217
        %p826 = pneg %p214
        %s827 = sand.u32 %s45, 1
        %s828 = scalar_lea.sflag [#allocation13], %s827
        %s829 = sand.u32 %s230, 1
        %s830 = scalar_lea.vmem [#allocation12], %s829
        %p831 = pneg %p243
        %p832 = pneg %p240
        %s833 = sand.u32 %s45, 1
        %s834 = scalar_lea.sflag [#allocation13], %s833
        %s835 = sand.u32 %s256, 1
        %s836 = scalar_lea.vmem [#allocation14], %s835
        %p837 = pneg %p269
        %p838 = pneg %p266
        %s839 = sand.u32 %s45, 1
        %s840 = scalar_lea.sflag [#allocation16], %s839
        %s841 = sand.u32 %s282, 1
        %s842 = smul.addr %s841, 16
        %s843 = scalar_lea.vmem [#allocation15], %s842
        %p844 = pneg %p295
        %p845 = pneg %p292
        %s846 = sand.u32 %s45, 1
        %s847 = scalar_lea.sflag [#allocation16], %s846
        %s848 = sand.u32 %s308, 1
        %s849 = scalar_lea.vmem [#allocation17], %s848
        %p850 = pneg %p321
        %p851 = pneg %p318
        %p852 = scmp.lt.s32.totalorder %s45, 1
        %s853 = scalar_select %p852, %s45, 1
        %s854 = smul.addr %s853, 8
        %s855 = smul.addr %s854, 4
        %s856 = scalar_lea.vmem %s11, %s855
        %p857 = pneg %p347
        %p858 = pneg %p344
        %s859 = sand.u32 %s360, 1
        %s860 = scalar_lea.sflag [#allocation19], %s859
        %s861 = sand.u32 %s360, 1
        %s862 = scalar_lea.vmem [#allocation18], %s861
        %p863 = pneg %p373
        %p864 = pneg %p370
        %p865 = pneg %p394
        %p866 = pneg %p391
        %p867 = pneg %p415
        %p868 = pneg %p412
        %p869 = pneg %p436
        %p870 = pneg %p433
        %p871 = pneg %p457
        %p872 = pneg %p454
        %p873 = pneg %p478
        %p874 = pneg %p475
        %p875 = scmp.lt.s32.totalorder %s45, 1
        %s876 = scalar_select %p875, %s45, 1
        %s877 = smul.addr %s876, 4
        %s878 = smul.addr %s877, 4
        %s879 = scalar_lea.vmem %s3, %s878
        %p880 = scmp.lt.s32.totalorder %s45, 1
        %s881 = scalar_select %p880, %s45, 1
        %s882 = smul.addr %s881, 4
        %s883 = smul.addr %s882, 8
        %s884 = scalar_lea.vmem %s5, %s883
        %p885 = scmp.lt.s32.totalorder %s45, 1
        %s886 = scalar_select %p885, %s45, 1
        %s887 = smul.addr %s886, 8
        %s888 = smul.addr %s887, 4
        %s889 = scalar_lea.vmem %s11, %s888
        %p891 = scmp.eq.s32.totalorder %s45, 0
        // Predicated region
        $region129: #{tpu_custom_call.1} parent=87 // pred_check
          %p892 = pneg %p891
        $region130: #{tpu_custom_call.1} parent=87 // pred_check_branch
          %894 = sbr.rel (%p892) target = $region132
        $region131: #{tpu_custom_call.1} parent=87 // pred_region
          %v895 = vld [vmem:[#allocation3] sm:$0xff]
          %v896 = vld [vmem:[#allocation3 + $0x8] sm:$0xff]
          %vm897 = vcmask 261120
          %898 = vst.msk [vmem:[#allocation2] sm:$0xff] %vm897, %v895
          %899 = vst.msk [vmem:[#allocation2 + $0x8] sm:$0xff] %vm897, %v896
        $region132: #{tpu_custom_call.1} parent=87 // pred_fallthru
          _
        %v900 = vld [vmem:[#allocation2] sm:$0xff]
        %v901 = vld [vmem:[#allocation2 + $0x8] sm:$0xff]
        %v902 = vld [vmem:[%s717] sm:$0x1]
        %v903 = vld [vmem:[%s725] sm:$0x1]
        %vm904 = vcmask 261120
        %v905 = vsel %vm904, %v900, 0.0
        %906 = vadd.xlane.f32.xlu0 %v905
        %v907 = vpop.xlane.xlu0 %906
        %v908 = vsel %vm904, %v901, 0.0
        %909 = vadd.xlane.f32.xlu0 %v908
        %v910 = vpop.xlane.xlu0 %909
        %v911 = vrcp.pop 32.0
        %v912 = vmul.f32 %v907, %v911
        %v913 = vmul.f32 %v910, %v911
        %v914 = vsub.f32 %v900, %v912
        %v915 = vsub.f32 %v901, %v913
        %v916 = vmul.f32 %v914, %v914
        %v917 = vmul.f32 %v915, %v915
        %v918 = vsel %vm904, %v916, 0.0
        %919 = vadd.xlane.f32.xlu0 %v918
        %v920 = vpop.xlane.xlu0 %919
        %v921 = vsel %vm904, %v917, 0.0
        %922 = vadd.xlane.f32.xlu0 %v921
        %v923 = vpop.xlane.xlu0 %922
        %v924 = vmul.f32 %v920, %v911
        %v925 = vmul.f32 %v923, %v911
        %v926 = vadd.f32 %v924, 1e-05
        %v927 = vadd.f32 %v925, 1e-05
        %v928 = vrsqrt.pop %v926
        %v929 = vrsqrt.pop %v927
        %v930 = vmul.f32 %v914, %v928
        %v931 = vmul.f32 %v915, %v929
        %v933 = vlaneseq
        %v934 = vshrl.u32 %v933, 7
        %v935 = vsub.s32 0, %v934
        %v936 = vrot.slane %v902, %v935
        %v938 = vmul.f32 %v930, %v936
        %v939 = vmul.f32 %v931, %v936
        %v941 = vlaneseq
        %v942 = vshrl.u32 %v941, 7
        %v943 = vsub.s32 0, %v942
        %v944 = vrot.slane %v903, %v943
        %v946 = vadd.f32 %v938, %v944
        %v947 = vadd.f32 %v939, %v944
        %v948 = vpack.c.bf16 %v947, %v946
        %v949 = vld [vmem:[%s879] sm:$0xf]
        %v950 = vld [vmem:[%s879 + $0x4] sm:$0xf]
        %v951 = vld [vmem:[%s879 + $0x8] sm:$0xf]
        %v952 = vld [vmem:[%s879 + $0xc] sm:$0xf]
        %v953 = vld [vmem:[%s733] sm:$0x1]
        %v955 = vlaneseq
        %v956 = vshrl.u32 %v955, 7
        %v957 = vsub.s32 0, %v956
        %v958 = vrot.slane %v953, %v957
        %v964 = vunpack.c.l.b16 %v949
        %v965 = vunpack.c.l.b16 %v950
        %v966 = vunpack.c.l.b16 %v951
        %v967 = vunpack.c.l.b16 %v952
        %v968 = vpack.c.b16 %v965, %v964
        %v969 = vpack.c.b16 %v967, %v966
        %v973 = vsel %vm904, %v948, 0
        %975 = vmatprep.subr.bf16.mxu0 0
        %976 = vmatpush1.bf16.msra.mxu0 %v968
        %977 = vmatprep.subr.bf16.mxu0 0
        %978 = vmatpush1.bf16.msra.mxu0 %v969
        %979 = vmatprep.subr.bf16.mxu0 0
        %980 = vmatpush1.bf16.msra.mxu0 0
        %981 = vmatprep.subr.bf16.mxu0 0
        %982 = vmatpush1.bf16.msra.mxu0 0
        %983 = vmatprep.subr.bf16.mxu0 0
        %984 = vmatpush1.bf16.msra.mxu0 0
        %985 = vmatprep.subr.bf16.mxu0 0
        %986 = vmatpush1.bf16.msra.mxu0 0
        %987 = vmatprep.subr.bf16.mxu0 0
        %988 = vmatpush1.bf16.msra.mxu0 0
        %989 = vmatprep.subr.bf16.mxu0 0
        %990 = vmatpush1.bf16.msra.mxu0 0
        %991 = vmatprep.subr.bf16.mxu0 0
        %992 = vmatpush1.bf16.msra.mxu0 0
        %993 = vmatprep.subr.bf16.mxu0 0
        %994 = vmatpush1.bf16.msra.mxu0 0
        %995 = vmatprep.subr.bf16.mxu0 0
        %996 = vmatpush1.bf16.msra.mxu0 0
        %997 = vmatprep.subr.bf16.mxu0 0
        %998 = vmatpush1.bf16.msra.mxu0 0
        %999 = vmatprep.subr.bf16.mxu0 0
        %1000 = vmatpush1.bf16.msra.mxu0 0
        %1001 = vmatprep.subr.bf16.mxu0 0
        %1002 = vmatpush1.bf16.msra.mxu0 0
        %1003 = vmatprep.subr.bf16.mxu0 0
        %1004 = vmatpush1.bf16.msra.mxu0 0
        %1005 = vmatprep.subr.bf16.mxu0 0
        %1006 = vmatpush1.bf16.msra.mxu0 0
        %1007 = vmatprep.mubr.bf16.mxu0 0
        %1008 = vmatmul.mubr.bf16.gmra.mrb[0].mxu0 %v973
        %v1009 = vpop.f32.mrb[0].mxu0
        %v1010 = vadd.f32 %v958, %v1009
        %v1011 = vpop.f32.mrb[0].mxu0
        %v1012 = vpop.f32.mrb[0].mxu0
        %v1013 = vadd.f32 %v958, %v1012
        %v1014 = vpop.f32.mrb[0].mxu0
        %1015 = vdwg.mxu0
        %v1016 = vlaneseq
        %v1017 = vshrl.u32 %v1016, 7
        %v1018 = vlaneseq
        %v1019 = vand.u32 %v1018, 127
        %vm1020 = vcmp.ge.s32.totalorder %v1017, %v1019
        %v1021 = vpack.c.bf16 %v1010, %v1010
        %v1022 = vpack.c.bf16 %v1013, %v1013
        %1024 = vrot.lane.b32.xlu0 %v1021, 96
        %v1025 = vpop.permute.xlu0 %1024
        %vm1026 = vcmask 64512
        %v1028 = vsel %vm1026, %v1021, 0
        %v1031 = vsel %vm1026, %v1025, 0
        %1033 = vmatprep.subr.bf16.mxu0 0
        %1034 = vmatpush1.bf16.xpose.msra.mxu0 %v1031
        %1035 = vmatprep.subr.bf16.mxu0 0
        %1036 = vmatpush1.bf16.xpose.msra.mxu0 0
        %1037 = vmatprep.subr.bf16.mxu0 0
        %1038 = vmatpush1.bf16.xpose.msra.mxu0 0
        %1039 = vmatprep.subr.bf16.mxu0 0
        %1040 = vmatpush1.bf16.xpose.msra.mxu0 0
        %1041 = vmatprep.subr.bf16.mxu0 0
        %1042 = vmatpush1.bf16.xpose.msra.mxu0 0
        %1043 = vmatprep.subr.bf16.mxu0 0
        %1044 = vmatpush1.bf16.xpose.msra.mxu0 0
        %1045 = vmatprep.subr.bf16.mxu0 0
        %1046 = vmatpush1.bf16.xpose.msra.mxu0 0
        %1047 = vmatprep.subr.bf16.mxu0 0
        %1048 = vmatpush1.bf16.xpose.msra.mxu0 0
        %1049 = vmatprep.subr.bf16.mxu0 0
        %1050 = vmatpush1.bf16.xpose.msra.mxu0 0
        %1051 = vmatprep.subr.bf16.mxu0 0
        %1052 = vmatpush1.bf16.xpose.msra.mxu0 0
        %1053 = vmatprep.subr.bf16.mxu0 0
        %1054 = vmatpush1.bf16.xpose.msra.mxu0 0
        %1055 = vmatprep.subr.bf16.mxu0 0
        %1056 = vmatpush1.bf16.xpose.msra.mxu0 0
        %1057 = vmatprep.subr.bf16.mxu0 0
        %1058 = vmatpush1.bf16.xpose.msra.mxu0 0
        %1059 = vmatprep.subr.bf16.mxu0 0
        %1060 = vmatpush1.bf16.xpose.msra.mxu0 0
        %1061 = vmatprep.subr.bf16.mxu0 0
        %1062 = vmatpush1.bf16.xpose.msra.mxu0 0
        %1063 = vmatprep.subr.bf16.mxu0 0
        %1064 = vmatpush1.bf16.xpose.msra.mxu0 0
        %1065 = vmatprep.mubr.bf16.mxu0 0
        %1066 = vmatmul.mubr.bf16.gmra.mrb[0].mxu0 %v1028
        %v1067 = vpop.f32.mrb[0].mxu0
        %v1068 = vadd.f32 0.0, %v1067
        %v1069 = vpop.f32.mrb[0].mxu0
        %v1070 = vpop.f32.mrb[0].mxu0
        %v1071 = vpop.f32.mrb[0].mxu0
        %1072 = vdwg.mxu0
        %1074 = vrot.lane.b32.xlu0 %v1022, 96
        %v1075 = vpop.permute.xlu0 %1074
        %v1077 = vsel %vm1026, %v1022, 0
        %v1080 = vsel %vm1026, %v1075, 0
        %1082 = vmatprep.subr.bf16.mxu0 0
        %1083 = vmatpush1.bf16.xpose.msra.mxu0 %v1080
        %1084 = vmatprep.subr.bf16.mxu0 0
        %1085 = vmatpush1.bf16.xpose.msra.mxu0 0
        %1086 = vmatprep.subr.bf16.mxu0 0
        %1087 = vmatpush1.bf16.xpose.msra.mxu0 0
        %1088 = vmatprep.subr.bf16.mxu0 0
        %1089 = vmatpush1.bf16.xpose.msra.mxu0 0
        %1090 = vmatprep.subr.bf16.mxu0 0
        %1091 = vmatpush1.bf16.xpose.msra.mxu0 0
        %1092 = vmatprep.subr.bf16.mxu0 0
        %1093 = vmatpush1.bf16.xpose.msra.mxu0 0
        %1094 = vmatprep.subr.bf16.mxu0 0
        %1095 = vmatpush1.bf16.xpose.msra.mxu0 0
        %1096 = vmatprep.subr.bf16.mxu0 0
        %1097 = vmatpush1.bf16.xpose.msra.mxu0 0
        %1098 = vmatprep.subr.bf16.mxu0 0
        %1099 = vmatpush1.bf16.xpose.msra.mxu0 0
        %1100 = vmatprep.subr.bf16.mxu0 0
        %1101 = vmatpush1.bf16.xpose.msra.mxu0 0
        %1102 = vmatprep.subr.bf16.mxu0 0
        %1103 = vmatpush1.bf16.xpose.msra.mxu0 0
        %1104 = vmatprep.subr.bf16.mxu0 0
        %1105 = vmatpush1.bf16.xpose.msra.mxu0 0
        %1106 = vmatprep.subr.bf16.mxu0 0
        %1107 = vmatpush1.bf16.xpose.msra.mxu0 0
        %1108 = vmatprep.subr.bf16.mxu0 0
        %1109 = vmatpush1.bf16.xpose.msra.mxu0 0
        %1110 = vmatprep.subr.bf16.mxu0 0
        %1111 = vmatpush1.bf16.xpose.msra.mxu0 0
        %1112 = vmatprep.subr.bf16.mxu0 0
        %1113 = vmatpush1.bf16.xpose.msra.mxu0 0
        %1114 = vmatprep.mubr.bf16.mxu0 0
        %1115 = vmatmul.mubr.bf16.gmra.mrb[0].mxu0 %v1077
        %v1116 = vpop.f32.mrb[0].mxu0
        %v1117 = vadd.f32 0.0, %v1116
        %v1118 = vpop.f32.mrb[0].mxu0
        %v1119 = vpop.f32.mrb[0].mxu0
        %v1120 = vpop.f32.mrb[0].mxu0
        %1121 = vdwg.mxu0
        %v1122 = vsel %vm1020, 1, 0
        %vm1123 = vcmp.eq.s32.totalorder %v1122, 1
        %v1124 = vsel %vm1123, %v1068, -1e+30
        %v1125 = vsel %vm1123, %v1117, -1e+30
        %v1126 = vsel %vm1026, %v1124, -inf
        %1127 = vmax.xlane.f32.xlu0 %v1126
        %v1128 = vpop.xlane.xlu0 %1127
        %v1129 = vsel %vm1026, %v1125, -inf
        %1130 = vmax.xlane.f32.xlu0 %v1129
        %v1131 = vpop.xlane.xlu0 %1130
        %v1132 = vsub.f32 %v1124, %v1128
        %v1133 = vsub.f32 %v1125, %v1131
        %v1134 = vmul.f32 %v1132, 1.442695
        %v1135 = vpow.pop %v1134
        %v1136 = vmul.f32 %v1133, 1.442695
        %v1137 = vpow.pop %v1136
        %v1138 = vsel %vm1026, %v1135, 0.0
        %1139 = vadd.xlane.f32.xlu0 %v1138
        %v1140 = vpop.xlane.xlu0 %1139
        %v1141 = vsel %vm1026, %v1137, 0.0
        %1142 = vadd.xlane.f32.xlu0 %v1141
        %v1143 = vpop.xlane.xlu0 %1142
        %v1144 = vrcp.pop %v1140
        %v1145 = vrcp.pop %v1143
        %v1146 = vmul.f32 %v1135, %v1144
        %v1147 = vmul.f32 %v1137, %v1145
        %v1148 = vpack.c.bf16 %v1146, %v1146
        %v1149 = vpack.c.bf16 %v1147, %v1147
        %1150 = vrot.lane.b32.xlu0 %v1021, 64
        %v1151 = vpop.permute.xlu0 %1150
        %v1153 = vsel %vm1026, %v1148, 0
        %vm1155 = vcmask 1043456
        %v1157 = vsel %vm1155, %v1151, 0
        %1159 = vmatprep.subr.bf16.mxu0 0
        %1160 = vmatpush1.bf16.msra.mxu0 %v1157
        %1161 = vmatprep.subr.bf16.mxu0 0
        %1162 = vmatpush1.bf16.msra.mxu0 0
        %1163 = vmatprep.subr.bf16.mxu0 0
        %1164 = vmatpush1.bf16.msra.mxu0 0
        %1165 = vmatprep.subr.bf16.mxu0 0
        %1166 = vmatpush1.bf16.msra.mxu0 0
        %1167 = vmatprep.subr.bf16.mxu0 0
        %1168 = vmatpush1.bf16.msra.mxu0 0
        %1169 = vmatprep.subr.bf16.mxu0 0
        %1170 = vmatpush1.bf16.msra.mxu0 0
        %1171 = vmatprep.subr.bf16.mxu0 0
        %1172 = vmatpush1.bf16.msra.mxu0 0
        %1173 = vmatprep.subr.bf16.mxu0 0
        %1174 = vmatpush1.bf16.msra.mxu0 0
        %1175 = vmatprep.subr.bf16.mxu0 0
        %1176 = vmatpush1.bf16.msra.mxu0 0
        %1177 = vmatprep.subr.bf16.mxu0 0
        %1178 = vmatpush1.bf16.msra.mxu0 0
        %1179 = vmatprep.subr.bf16.mxu0 0
        %1180 = vmatpush1.bf16.msra.mxu0 0
        %1181 = vmatprep.subr.bf16.mxu0 0
        %1182 = vmatpush1.bf16.msra.mxu0 0
        %1183 = vmatprep.subr.bf16.mxu0 0
        %1184 = vmatpush1.bf16.msra.mxu0 0
        %1185 = vmatprep.subr.bf16.mxu0 0
        %1186 = vmatpush1.bf16.msra.mxu0 0
        %1187 = vmatprep.subr.bf16.mxu0 0
        %1188 = vmatpush1.bf16.msra.mxu0 0
        %1189 = vmatprep.subr.bf16.mxu0 0
        %1190 = vmatpush1.bf16.msra.mxu0 0
        %1191 = vmatprep.mubr.bf16.mxu0 0
        %1192 = vmatmul.mubr.bf16.gmra.mrb[0].mxu0 %v1153
        %v1193 = vpop.f32.mrb[0].mxu0
        %v1194 = vadd.f32 0.0, %v1193
        %v1195 = vpop.f32.mrb[0].mxu0
        %v1196 = vpop.f32.mrb[0].mxu0
        %v1197 = vpop.f32.mrb[0].mxu0
        %1198 = vdwg.mxu0
        %1199 = vrot.lane.b32.xlu0 %v1022, 64
        %v1200 = vpop.permute.xlu0 %1199
        %v1202 = vsel %vm1026, %v1149, 0
        %v1205 = vsel %vm1155, %v1200, 0
        %1207 = vmatprep.subr.bf16.mxu0 0
        %1208 = vmatpush1.bf16.msra.mxu0 %v1205
        %1209 = vmatprep.subr.bf16.mxu0 0
        %1210 = vmatpush1.bf16.msra.mxu0 0
        %1211 = vmatprep.subr.bf16.mxu0 0
        %1212 = vmatpush1.bf16.msra.mxu0 0
        %1213 = vmatprep.subr.bf16.mxu0 0
        %1214 = vmatpush1.bf16.msra.mxu0 0
        %1215 = vmatprep.subr.bf16.mxu0 0
        %1216 = vmatpush1.bf16.msra.mxu0 0
        %1217 = vmatprep.subr.bf16.mxu0 0
        %1218 = vmatpush1.bf16.msra.mxu0 0
        %1219 = vmatprep.subr.bf16.mxu0 0
        %1220 = vmatpush1.bf16.msra.mxu0 0
        %1221 = vmatprep.subr.bf16.mxu0 0
        %1222 = vmatpush1.bf16.msra.mxu0 0
        %1223 = vmatprep.subr.bf16.mxu0 0
        %1224 = vmatpush1.bf16.msra.mxu0 0
        %1225 = vmatprep.subr.bf16.mxu0 0
        %1226 = vmatpush1.bf16.msra.mxu0 0
        %1227 = vmatprep.subr.bf16.mxu0 0
        %1228 = vmatpush1.bf16.msra.mxu0 0
        %1229 = vmatprep.subr.bf16.mxu0 0
        %1230 = vmatpush1.bf16.msra.mxu0 0
        %1231 = vmatprep.subr.bf16.mxu0 0
        %1232 = vmatpush1.bf16.msra.mxu0 0
        %1233 = vmatprep.subr.bf16.mxu0 0
        %1234 = vmatpush1.bf16.msra.mxu0 0
        %1235 = vmatprep.subr.bf16.mxu0 0
        %1236 = vmatpush1.bf16.msra.mxu0 0
        %1237 = vmatprep.subr.bf16.mxu0 0
        %1238 = vmatpush1.bf16.msra.mxu0 0
        %1239 = vmatprep.mubr.bf16.mxu0 0
        %1240 = vmatmul.mubr.bf16.gmra.mrb[0].mxu0 %v1202
        %v1241 = vpop.f32.mrb[0].mxu0
        %v1242 = vadd.f32 0.0, %v1241
        %v1243 = vpop.f32.mrb[0].mxu0
        %v1244 = vpop.f32.mrb[0].mxu0
        %v1245 = vpop.f32.mrb[0].mxu0
        %1246 = vdwg.mxu0
        %v1247 = vld [vmem:[%s884] sm:$0xff]
        %1248 = vrot.lane.b32.xlu0 %v1021, 120
        %v1249 = vpop.permute.xlu0 %1248
        %1250 = vrot.lane.b32.xlu0 %v1021, 88
        %v1251 = vpop.permute.xlu0 %1250
        %v1253 = vsel %vm1026, %v1249, 0
        %v1256 = vsel %vm1026, %v1251, 0
        %1258 = vmatprep.subr.bf16.mxu0 0
        %1259 = vmatpush1.bf16.xpose.msra.mxu0 %v1256
        %1260 = vmatprep.subr.bf16.mxu0 0
        %1261 = vmatpush1.bf16.xpose.msra.mxu0 0
        %1262 = vmatprep.subr.bf16.mxu0 0
        %1263 = vmatpush1.bf16.xpose.msra.mxu0 0
        %1264 = vmatprep.subr.bf16.mxu0 0
        %1265 = vmatpush1.bf16.xpose.msra.mxu0 0
        %1266 = vmatprep.subr.bf16.mxu0 0
        %1267 = vmatpush1.bf16.xpose.msra.mxu0 0
        %1268 = vmatprep.subr.bf16.mxu0 0
        %1269 = vmatpush1.bf16.xpose.msra.mxu0 0
        %1270 = vmatprep.subr.bf16.mxu0 0
        %1271 = vmatpush1.bf16.xpose.msra.mxu0 0
        %1272 = vmatprep.subr.bf16.mxu0 0
        %1273 = vmatpush1.bf16.xpose.msra.mxu0 0
        %1274 = vmatprep.subr.bf16.mxu0 0
        %1275 = vmatpush1.bf16.xpose.msra.mxu0 0
        %1276 = vmatprep.subr.bf16.mxu0 0
        %1277 = vmatpush1.bf16.xpose.msra.mxu0 0
        %1278 = vmatprep.subr.bf16.mxu0 0
        %1279 = vmatpush1.bf16.xpose.msra.mxu0 0
        %1280 = vmatprep.subr.bf16.mxu0 0
        %1281 = vmatpush1.bf16.xpose.msra.mxu0 0
        %1282 = vmatprep.subr.bf16.mxu0 0
        %1283 = vmatpush1.bf16.xpose.msra.mxu0 0
        %1284 = vmatprep.subr.bf16.mxu0 0
        %1285 = vmatpush1.bf16.xpose.msra.mxu0 0
        %1286 = vmatprep.subr.bf16.mxu0 0
        %1287 = vmatpush1.bf16.xpose.msra.mxu0 0
        %1288 = vmatprep.subr.bf16.mxu0 0
        %1289 = vmatpush1.bf16.xpose.msra.mxu0 0
        %1290 = vmatprep.mubr.bf16.mxu0 0
        %1291 = vmatmul.mubr.bf16.gmra.mrb[0].mxu0 %v1253
        %v1292 = vpop.f32.mrb[0].mxu0
        %v1293 = vadd.f32 0.0, %v1292
        %v1294 = vpop.f32.mrb[0].mxu0
        %v1295 = vpop.f32.mrb[0].mxu0
        %v1296 = vpop.f32.mrb[0].mxu0
        %1297 = vdwg.mxu0
        %1298 = vrot.lane.b32.xlu0 %v1022, 120
        %v1299 = vpop.permute.xlu0 %1298
        %1300 = vrot.lane.b32.xlu0 %v1022, 88
        %v1301 = vpop.permute.xlu0 %1300
        %v1303 = vsel %vm1026, %v1299, 0
        %v1306 = vsel %vm1026, %v1301, 0
        %1308 = vmatprep.subr.bf16.mxu0 0
        %1309 = vmatpush1.bf16.xpose.msra.mxu0 %v1306
        %1310 = vmatprep.subr.bf16.mxu0 0
        %1311 = vmatpush1.bf16.xpose.msra.mxu0 0
        %1312 = vmatprep.subr.bf16.mxu0 0
        %1313 = vmatpush1.bf16.xpose.msra.mxu0 0
        %1314 = vmatprep.subr.bf16.mxu0 0
        %1315 = vmatpush1.bf16.xpose.msra.mxu0 0
        %1316 = vmatprep.subr.bf16.mxu0 0
        %1317 = vmatpush1.bf16.xpose.msra.mxu0 0
        %1318 = vmatprep.subr.bf16.mxu0 0
        %1319 = vmatpush1.bf16.xpose.msra.mxu0 0
        %1320 = vmatprep.subr.bf16.mxu0 0
        %1321 = vmatpush1.bf16.xpose.msra.mxu0 0
        %1322 = vmatprep.subr.bf16.mxu0 0
        %1323 = vmatpush1.bf16.xpose.msra.mxu0 0
        %1324 = vmatprep.subr.bf16.mxu0 0
        %1325 = vmatpush1.bf16.xpose.msra.mxu0 0
        %1326 = vmatprep.subr.bf16.mxu0 0
        %1327 = vmatpush1.bf16.xpose.msra.mxu0 0
        %1328 = vmatprep.subr.bf16.mxu0 0
        %1329 = vmatpush1.bf16.xpose.msra.mxu0 0
        %1330 = vmatprep.subr.bf16.mxu0 0
        %1331 = vmatpush1.bf16.xpose.msra.mxu0 0
        %1332 = vmatprep.subr.bf16.mxu0 0
        %1333 = vmatpush1.bf16.xpose.msra.mxu0 0
        %1334 = vmatprep.subr.bf16.mxu0 0
        %1335 = vmatpush1.bf16.xpose.msra.mxu0 0
        %1336 = vmatprep.subr.bf16.mxu0 0
        %1337 = vmatpush1.bf16.xpose.msra.mxu0 0
        %1338 = vmatprep.subr.bf16.mxu0 0
        %1339 = vmatpush1.bf16.xpose.msra.mxu0 0
        %1340 = vmatprep.mubr.bf16.mxu0 0
        %1341 = vmatmul.mubr.bf16.gmra.mrb[0].mxu0 %v1303
        %v1342 = vpop.f32.mrb[0].mxu0
        %v1343 = vadd.f32 0.0, %v1342
        %v1344 = vpop.f32.mrb[0].mxu0
        %v1345 = vpop.f32.mrb[0].mxu0
        %v1346 = vpop.f32.mrb[0].mxu0
        %1347 = vdwg.mxu0
        %v1348 = vsel %vm1123, %v1293, -1e+30
        %v1349 = vsel %vm1123, %v1343, -1e+30
        %v1350 = vsel %vm1026, %v1348, -inf
        %1351 = vmax.xlane.f32.xlu0 %v1350
        %v1352 = vpop.xlane.xlu0 %1351
        %v1353 = vsel %vm1026, %v1349, -inf
        %1354 = vmax.xlane.f32.xlu0 %v1353
        %v1355 = vpop.xlane.xlu0 %1354
        %v1356 = vsub.f32 %v1348, %v1352
        %v1357 = vsub.f32 %v1349, %v1355
        %v1358 = vmul.f32 %v1356, 1.442695
        %v1359 = vpow.pop %v1358
        %v1360 = vmul.f32 %v1357, 1.442695
        %v1361 = vpow.pop %v1360
        %v1362 = vsel %vm1026, %v1359, 0.0
        %1363 = vadd.xlane.f32.xlu0 %v1362
        %v1364 = vpop.xlane.xlu0 %1363
        %v1365 = vsel %vm1026, %v1361, 0.0
        %1366 = vadd.xlane.f32.xlu0 %v1365
        %v1367 = vpop.xlane.xlu0 %1366
        %v1368 = vrcp.pop %v1364
        %v1369 = vrcp.pop %v1367
        %v1370 = vmul.f32 %v1359, %v1368
        %v1371 = vmul.f32 %v1361, %v1369
        %v1372 = vpack.c.bf16 %v1370, %v1370
        %v1373 = vpack.c.bf16 %v1371, %v1371
        %1374 = vrot.lane.b32.xlu0 %v1021, 56
        %v1375 = vpop.permute.xlu0 %1374
        %v1377 = vsel %vm1026, %v1372, 0
        %v1380 = vsel %vm1155, %v1375, 0
        %1382 = vmatprep.subr.bf16.mxu0 0
        %1383 = vmatpush1.bf16.msra.mxu0 %v1380
        %1384 = vmatprep.subr.bf16.mxu0 0
        %1385 = vmatpush1.bf16.msra.mxu0 0
        %1386 = vmatprep.subr.bf16.mxu0 0
        %1387 = vmatpush1.bf16.msra.mxu0 0
        %1388 = vmatprep.subr.bf16.mxu0 0
        %1389 = vmatpush1.bf16.msra.mxu0 0
        %1390 = vmatprep.subr.bf16.mxu0 0
        %1391 = vmatpush1.bf16.msra.mxu0 0
        %1392 = vmatprep.subr.bf16.mxu0 0
        %1393 = vmatpush1.bf16.msra.mxu0 0
        %1394 = vmatprep.subr.bf16.mxu0 0
        %1395 = vmatpush1.bf16.msra.mxu0 0
        %1396 = vmatprep.subr.bf16.mxu0 0
        %1397 = vmatpush1.bf16.msra.mxu0 0
        %1398 = vmatprep.subr.bf16.mxu0 0
        %1399 = vmatpush1.bf16.msra.mxu0 0
        %1400 = vmatprep.subr.bf16.mxu0 0
        %1401 = vmatpush1.bf16.msra.mxu0 0
        %1402 = vmatprep.subr.bf16.mxu0 0
        %1403 = vmatpush1.bf16.msra.mxu0 0
        %1404 = vmatprep.subr.bf16.mxu0 0
        %1405 = vmatpush1.bf16.msra.mxu0 0
        %1406 = vmatprep.subr.bf16.mxu0 0
        %1407 = vmatpush1.bf16.msra.mxu0 0
        %1408 = vmatprep.subr.bf16.mxu0 0
        %1409 = vmatpush1.bf16.msra.mxu0 0
        %1410 = vmatprep.subr.bf16.mxu0 0
        %1411 = vmatpush1.bf16.msra.mxu0 0
        %1412 = vmatprep.subr.bf16.mxu0 0
        %1413 = vmatpush1.bf16.msra.mxu0 0
        %1414 = vmatprep.mubr.bf16.mxu0 0
        %1415 = vmatmul.mubr.bf16.gmra.mrb[0].mxu0 %v1377
        %v1416 = vpop.f32.mrb[0].mxu0
        %v1417 = vadd.f32 0.0, %v1416
        %v1418 = vpop.f32.mrb[0].mxu0
        %v1419 = vpop.f32.mrb[0].mxu0
        %v1420 = vpop.f32.mrb[0].mxu0
        %1421 = vdwg.mxu0
        %1422 = vrot.lane.b32.xlu0 %v1022, 56
        %v1423 = vpop.permute.xlu0 %1422
        %v1425 = vsel %vm1026, %v1373, 0
        %v1428 = vsel %vm1155, %v1423, 0
        %1430 = vmatprep.subr.bf16.mxu0 0
        %1431 = vmatpush1.bf16.msra.mxu0 %v1428
        %1432 = vmatprep.subr.bf16.mxu0 0
        %1433 = vmatpush1.bf16.msra.mxu0 0
        %1434 = vmatprep.subr.bf16.mxu0 0
        %1435 = vmatpush1.bf16.msra.mxu0 0
        %1436 = vmatprep.subr.bf16.mxu0 0
        %1437 = vmatpush1.bf16.msra.mxu0 0
        %1438 = vmatprep.subr.bf16.mxu0 0
        %1439 = vmatpush1.bf16.msra.mxu0 0
        %1440 = vmatprep.subr.bf16.mxu0 0
        %1441 = vmatpush1.bf16.msra.mxu0 0
        %1442 = vmatprep.subr.bf16.mxu0 0
        %1443 = vmatpush1.bf16.msra.mxu0 0
        %1444 = vmatprep.subr.bf16.mxu0 0
        %1445 = vmatpush1.bf16.msra.mxu0 0
        %1446 = vmatprep.subr.bf16.mxu0 0
        %1447 = vmatpush1.bf16.msra.mxu0 0
        %1448 = vmatprep.subr.bf16.mxu0 0
        %1449 = vmatpush1.bf16.msra.mxu0 0
        %1450 = vmatprep.subr.bf16.mxu0 0
        %1451 = vmatpush1.bf16.msra.mxu0 0
        %1452 = vmatprep.subr.bf16.mxu0 0
        %1453 = vmatpush1.bf16.msra.mxu0 0
        %1454 = vmatprep.subr.bf16.mxu0 0
        %1455 = vmatpush1.bf16.msra.mxu0 0
        %1456 = vmatprep.subr.bf16.mxu0 0
        %1457 = vmatpush1.bf16.msra.mxu0 0
        %1458 = vmatprep.subr.bf16.mxu0 0
        %1459 = vmatpush1.bf16.msra.mxu0 0
        %1460 = vmatprep.subr.bf16.mxu0 0
        %1461 = vmatpush1.bf16.msra.mxu0 0
        %1462 = vmatprep.mubr.bf16.mxu0 0
        %1463 = vmatmul.mubr.bf16.gmra.mrb[0].mxu0 %v1425
        %v1464 = vpop.f32.mrb[0].mxu0
        %v1465 = vadd.f32 0.0, %v1464
        %v1466 = vpop.f32.mrb[0].mxu0
        %v1467 = vpop.f32.mrb[0].mxu0
        %v1468 = vpop.f32.mrb[0].mxu0
        %1469 = vdwg.mxu0
        %v1470 = vld [vmem:[%s884 + $0x8] sm:$0xff]
        %v1472 = vsel %vm1026, %v1417, 0
        %v1475 = vsel %vm1026, %v1465, 0
        %1477 = vmatprep.subr.mxu0 0.0
        %1478 = vmatpush1.msra.mxu0 %v1470
        %1479 = vmatprep.subr.mxu0 0.0
        %1480 = vmatpush1.msra.mxu0 0.0
        %1481 = vmatprep.subr.mxu0 0.0
        %1482 = vmatpush1.msra.mxu0 0.0
        %1483 = vmatprep.subr.mxu0 0.0
        %1484 = vmatpush1.msra.mxu0 0.0
        %1485 = vmatprep.subr.mxu0 0.0
        %1486 = vmatpush1.msra.mxu0 0.0
        %1487 = vmatprep.subr.mxu0 0.0
        %1488 = vmatpush1.msra.mxu0 0.0
        %1489 = vmatprep.subr.mxu0 0.0
        %1490 = vmatpush1.msra.mxu0 0.0
        %1491 = vmatprep.subr.mxu0 0.0
        %1492 = vmatpush1.msra.mxu0 0.0
        %1493 = vmatprep.subr.mxu0 0.0
        %1494 = vmatpush1.msra.mxu0 0.0
        %1495 = vmatprep.subr.mxu0 0.0
        %1496 = vmatpush1.msra.mxu0 0.0
        %1497 = vmatprep.subr.mxu0 0.0
        %1498 = vmatpush1.msra.mxu0 0.0
        %1499 = vmatprep.subr.mxu0 0.0
        %1500 = vmatpush1.msra.mxu0 0.0
        %1501 = vmatprep.subr.mxu0 0.0
        %1502 = vmatpush1.msra.mxu0 0.0
        %1503 = vmatprep.subr.mxu0 0.0
        %1504 = vmatpush1.msra.mxu0 0.0
        %1505 = vmatprep.subr.mxu0 0.0
        %1506 = vmatpush1.msra.mxu0 0.0
        %1507 = vmatprep.subr.mxu0 0.0
        %1508 = vmatpush1.msra.mxu0 0.0
        %1509 = vmatprep.subr.mxu0 0.0
        %1510 = vmatpush1.msra.mxu0 0.0
        %1511 = vmatprep.subr.mxu0 0.0
        %1512 = vmatpush1.msra.mxu0 0.0
        %1513 = vmatprep.subr.mxu0 0.0
        %1514 = vmatpush1.msra.mxu0 0.0
        %1515 = vmatprep.subr.mxu0 0.0
        %1516 = vmatpush1.msra.mxu0 0.0
        %1517 = vmatprep.subr.mxu0 0.0
        %1518 = vmatpush1.msra.mxu0 0.0
        %1519 = vmatprep.subr.mxu0 0.0
        %1520 = vmatpush1.msra.mxu0 0.0
        %1521 = vmatprep.subr.mxu0 0.0
        %1522 = vmatpush1.msra.mxu0 0.0
        %1523 = vmatprep.subr.mxu0 0.0
        %1524 = vmatpush1.msra.mxu0 0.0
        %1525 = vmatprep.subr.mxu0 0.0
        %1526 = vmatpush1.msra.mxu0 0.0
        %1527 = vmatprep.subr.mxu0 0.0
        %1528 = vmatpush1.msra.mxu0 0.0
        %1529 = vmatprep.subr.mxu0 0.0
        %1530 = vmatpush1.msra.mxu0 0.0
        %1531 = vmatprep.subr.mxu0 0.0
        %1532 = vmatpush1.msra.mxu0 0.0
        %1533 = vmatprep.subr.mxu0 0.0
        %1534 = vmatpush1.msra.mxu0 0.0
        %1535 = vmatprep.subr.mxu0 0.0
        %1536 = vmatpush1.msra.mxu0 0.0
        %1537 = vmatprep.subr.mxu0 0.0
        %1538 = vmatpush1.msra.mxu0 0.0
        %1539 = vmatprep.subr.mxu0 0.0
        %1540 = vmatpush1.msra.mxu0 0.0
        %1541 = vmatprep.mubr.f32.mxu0 0.0
        %1542 = vmatmul.mubr.f32.gmra.mrb[0].mxu0 %v1472
        %v1543 = vpop.f32.mrb[0].mxu0
        %v1544 = vadd.f32 0.0, %v1543
        %v1545 = vpop.f32.mrb[0].mxu0
        %1546 = vmatprep.mubr.f32.mxu0 0.0
        %1547 = vmatmul.mubr.f32.gmra.mrb[0].mxu0 %v1475
        %v1548 = vpop.f32.mrb[0].mxu0
        %v1549 = vadd.f32 0.0, %v1548
        %v1550 = vpop.f32.mrb[0].mxu0
        %1551 = vdwg.mxu0
        %v1553 = vsel %vm1026, %v1194, 0
        %v1556 = vsel %vm1026, %v1242, 0
        %1558 = vmatprep.subr.mxu0 0.0
        %1559 = vmatpush1.msra.mxu0 %v1247
        %1560 = vmatprep.subr.mxu0 0.0
        %1561 = vmatpush1.msra.mxu0 0.0
        %1562 = vmatprep.subr.mxu0 0.0
        %1563 = vmatpush1.msra.mxu0 0.0
        %1564 = vmatprep.subr.mxu0 0.0
        %1565 = vmatpush1.msra.mxu0 0.0
        %1566 = vmatprep.subr.mxu0 0.0
        %1567 = vmatpush1.msra.mxu0 0.0
        %1568 = vmatprep.subr.mxu0 0.0
        %1569 = vmatpush1.msra.mxu0 0.0
        %1570 = vmatprep.subr.mxu0 0.0
        %1571 = vmatpush1.msra.mxu0 0.0
        %1572 = vmatprep.subr.mxu0 0.0
        %1573 = vmatpush1.msra.mxu0 0.0
        %1574 = vmatprep.subr.mxu0 0.0
        %1575 = vmatpush1.msra.mxu0 0.0
        %1576 = vmatprep.subr.mxu0 0.0
        %1577 = vmatpush1.msra.mxu0 0.0
        %1578 = vmatprep.subr.mxu0 0.0
        %1579 = vmatpush1.msra.mxu0 0.0
        %1580 = vmatprep.subr.mxu0 0.0
        %1581 = vmatpush1.msra.mxu0 0.0
        %1582 = vmatprep.subr.mxu0 0.0
        %1583 = vmatpush1.msra.mxu0 0.0
        %1584 = vmatprep.subr.mxu0 0.0
        %1585 = vmatpush1.msra.mxu0 0.0
        %1586 = vmatprep.subr.mxu0 0.0
        %1587 = vmatpush1.msra.mxu0 0.0
        %1588 = vmatprep.subr.mxu0 0.0
        %1589 = vmatpush1.msra.mxu0 0.0
        %1590 = vmatprep.subr.mxu0 0.0
        %1591 = vmatpush1.msra.mxu0 0.0
        %1592 = vmatprep.subr.mxu0 0.0
        %1593 = vmatpush1.msra.mxu0 0.0
        %1594 = vmatprep.subr.mxu0 0.0
        %1595 = vmatpush1.msra.mxu0 0.0
        %1596 = vmatprep.subr.mxu0 0.0
        %1597 = vmatpush1.msra.mxu0 0.0
        %1598 = vmatprep.subr.mxu0 0.0
        %1599 = vmatpush1.msra.mxu0 0.0
        %1600 = vmatprep.subr.mxu0 0.0
        %1601 = vmatpush1.msra.mxu0 0.0
        %1602 = vmatprep.subr.mxu0 0.0
        %1603 = vmatpush1.msra.mxu0 0.0
        %1604 = vmatprep.subr.mxu0 0.0
        %1605 = vmatpush1.msra.mxu0 0.0
        %1606 = vmatprep.subr.mxu0 0.0
        %1607 = vmatpush1.msra.mxu0 0.0
        %1608 = vmatprep.subr.mxu0 0.0
        %1609 = vmatpush1.msra.mxu0 0.0
        %1610 = vmatprep.subr.mxu0 0.0
        %1611 = vmatpush1.msra.mxu0 0.0
        %1612 = vmatprep.subr.mxu0 0.0
        %1613 = vmatpush1.msra.mxu0 0.0
        %1614 = vmatprep.subr.mxu0 0.0
        %1615 = vmatpush1.msra.mxu0 0.0
        %1616 = vmatprep.subr.mxu0 0.0
        %1617 = vmatpush1.msra.mxu0 0.0
        %1618 = vmatprep.subr.mxu0 0.0
        %1619 = vmatpush1.msra.mxu0 0.0
        %1620 = vmatprep.subr.mxu0 0.0
        %1621 = vmatpush1.msra.mxu0 0.0
        %1622 = vmatprep.mubr.f32.mxu0 0.0
        %1623 = vmatmul.mubr.f32.gmra.mrb[0].mxu0 %v1553
        %v1624 = vpop.f32.mrb[0].mxu0
        %v1625 = vadd.f32 %v1544, %v1624
        %v1626 = vpop.f32.mrb[0].mxu0
        %1627 = vmatprep.mubr.f32.mxu0 0.0
        %1628 = vmatmul.mubr.f32.gmra.mrb[0].mxu0 %v1556
        %v1629 = vpop.f32.mrb[0].mxu0
        %v1630 = vadd.f32 %v1549, %v1629
        %v1631 = vpop.f32.mrb[0].mxu0
        %1632 = vdwg.mxu0
        %1633 = vrot.lane.b32.xlu0 %v1021, 112
        %v1634 = vpop.permute.xlu0 %1633
        %1635 = vrot.lane.b32.xlu0 %v1021, 80
        %v1636 = vpop.permute.xlu0 %1635
        %v1638 = vsel %vm1026, %v1634, 0
        %v1641 = vsel %vm1026, %v1636, 0
        %1643 = vmatprep.subr.bf16.mxu0 0
        %1644 = vmatpush1.bf16.xpose.msra.mxu0 %v1641
        %1645 = vmatprep.subr.bf16.mxu0 0
        %1646 = vmatpush1.bf16.xpose.msra.mxu0 0
        %1647 = vmatprep.subr.bf16.mxu0 0
        %1648 = vmatpush1.bf16.xpose.msra.mxu0 0
        %1649 = vmatprep.subr.bf16.mxu0 0
        %1650 = vmatpush1.bf16.xpose.msra.mxu0 0
        %1651 = vmatprep.subr.bf16.mxu0 0
        %1652 = vmatpush1.bf16.xpose.msra.mxu0 0
        %1653 = vmatprep.subr.bf16.mxu0 0
        %1654 = vmatpush1.bf16.xpose.msra.mxu0 0
        %1655 = vmatprep.subr.bf16.mxu0 0
        %1656 = vmatpush1.bf16.xpose.msra.mxu0 0
        %1657 = vmatprep.subr.bf16.mxu0 0
        %1658 = vmatpush1.bf16.xpose.msra.mxu0 0
        %1659 = vmatprep.subr.bf16.mxu0 0
        %1660 = vmatpush1.bf16.xpose.msra.mxu0 0
        %1661 = vmatprep.subr.bf16.mxu0 0
        %1662 = vmatpush1.bf16.xpose.msra.mxu0 0
        %1663 = vmatprep.subr.bf16.mxu0 0
        %1664 = vmatpush1.bf16.xpose.msra.mxu0 0
        %1665 = vmatprep.subr.bf16.mxu0 0
        %1666 = vmatpush1.bf16.xpose.msra.mxu0 0
        %1667 = vmatprep.subr.bf16.mxu0 0
        %1668 = vmatpush1.bf16.xpose.msra.mxu0 0
        %1669 = vmatprep.subr.bf16.mxu0 0
        %1670 = vmatpush1.bf16.xpose.msra.mxu0 0
        %1671 = vmatprep.subr.bf16.mxu0 0
        %1672 = vmatpush1.bf16.xpose.msra.mxu0 0
        %1673 = vmatprep.subr.bf16.mxu0 0
        %1674 = vmatpush1.bf16.xpose.msra.mxu0 0
        %1675 = vmatprep.mubr.bf16.mxu0 0
        %1676 = vmatmul.mubr.bf16.gmra.mrb[0].mxu0 %v1638
        %v1677 = vpop.f32.mrb[0].mxu0
        %v1678 = vadd.f32 0.0, %v1677
        %v1679 = vpop.f32.mrb[0].mxu0
        %v1680 = vpop.f32.mrb[0].mxu0
        %v1681 = vpop.f32.mrb[0].mxu0
        %1682 = vdwg.mxu0
        %1683 = vrot.lane.b32.xlu0 %v1022, 112
        %v1684 = vpop.permute.xlu0 %1683
        %1685 = vrot.lane.b32.xlu0 %v1022, 80
        %v1686 = vpop.permute.xlu0 %1685
        %v1688 = vsel %vm1026, %v1684, 0
        %v1691 = vsel %vm1026, %v1686, 0
        %1693 = vmatprep.subr.bf16.mxu0 0
        %1694 = vmatpush1.bf16.xpose.msra.mxu0 %v1691
        %1695 = vmatprep.subr.bf16.mxu0 0
        %1696 = vmatpush1.bf16.xpose.msra.mxu0 0
        %1697 = vmatprep.subr.bf16.mxu0 0
        %1698 = vmatpush1.bf16.xpose.msra.mxu0 0
        %1699 = vmatprep.subr.bf16.mxu0 0
        %1700 = vmatpush1.bf16.xpose.msra.mxu0 0
        %1701 = vmatprep.subr.bf16.mxu0 0
        %1702 = vmatpush1.bf16.xpose.msra.mxu0 0
        %1703 = vmatprep.subr.bf16.mxu0 0
        %1704 = vmatpush1.bf16.xpose.msra.mxu0 0
        %1705 = vmatprep.subr.bf16.mxu0 0
        %1706 = vmatpush1.bf16.xpose.msra.mxu0 0
        %1707 = vmatprep.subr.bf16.mxu0 0
        %1708 = vmatpush1.bf16.xpose.msra.mxu0 0
        %1709 = vmatprep.subr.bf16.mxu0 0
        %1710 = vmatpush1.bf16.xpose.msra.mxu0 0
        %1711 = vmatprep.subr.bf16.mxu0 0
        %1712 = vmatpush1.bf16.xpose.msra.mxu0 0
        %1713 = vmatprep.subr.bf16.mxu0 0
        %1714 = vmatpush1.bf16.xpose.msra.mxu0 0
        %1715 = vmatprep.subr.bf16.mxu0 0
        %1716 = vmatpush1.bf16.xpose.msra.mxu0 0
        %1717 = vmatprep.subr.bf16.mxu0 0
        %1718 = vmatpush1.bf16.xpose.msra.mxu0 0
        %1719 = vmatprep.subr.bf16.mxu0 0
        %1720 = vmatpush1.bf16.xpose.msra.mxu0 0
        %1721 = vmatprep.subr.bf16.mxu0 0
        %1722 = vmatpush1.bf16.xpose.msra.mxu0 0
        %1723 = vmatprep.subr.bf16.mxu0 0
        %1724 = vmatpush1.bf16.xpose.msra.mxu0 0
        %1725 = vmatprep.mubr.bf16.mxu0 0
        %1726 = vmatmul.mubr.bf16.gmra.mrb[0].mxu0 %v1688
        %v1727 = vpop.f32.mrb[0].mxu0
        %v1728 = vadd.f32 0.0, %v1727
        %v1729 = vpop.f32.mrb[0].mxu0
        %v1730 = vpop.f32.mrb[0].mxu0
        %v1731 = vpop.f32.mrb[0].mxu0
        %1732 = vdwg.mxu0
        %v1733 = vsel %vm1123, %v1678, -1e+30
        %v1734 = vsel %vm1123, %v1728, -1e+30
        %v1735 = vsel %vm1026, %v1733, -inf
        %1736 = vmax.xlane.f32.xlu0 %v1735
        %v1737 = vpop.xlane.xlu0 %1736
        %v1738 = vsel %vm1026, %v1734, -inf
        %1739 = vmax.xlane.f32.xlu0 %v1738
        %v1740 = vpop.xlane.xlu0 %1739
        %v1741 = vsub.f32 %v1733, %v1737
        %v1742 = vsub.f32 %v1734, %v1740
        %v1743 = vmul.f32 %v1741, 1.442695
        %v1744 = vpow.pop %v1743
        %v1745 = vmul.f32 %v1742, 1.442695
        %v1746 = vpow.pop %v1745
        %v1747 = vsel %vm1026, %v1744, 0.0
        %1748 = vadd.xlane.f32.xlu0 %v1747
        %v1749 = vpop.xlane.xlu0 %1748
        %v1750 = vsel %vm1026, %v1746, 0.0
        %1751 = vadd.xlane.f32.xlu0 %v1750
        %v1752 = vpop.xlane.xlu0 %1751
        %v1753 = vrcp.pop %v1749
        %v1754 = vrcp.pop %v1752
        %v1755 = vmul.f32 %v1744, %v1753
        %v1756 = vmul.f32 %v1746, %v1754
        %v1757 = vpack.c.bf16 %v1755, %v1755
        %v1758 = vpack.c.bf16 %v1756, %v1756
        %1759 = vrot.lane.b32.xlu0 %v1021, 48
        %v1760 = vpop.permute.xlu0 %1759
        %v1762 = vsel %vm1026, %v1757, 0
        %v1765 = vsel %vm1155, %v1760, 0
        %1767 = vmatprep.subr.bf16.mxu0 0
        %1768 = vmatpush1.bf16.msra.mxu0 %v1765
        %1769 = vmatprep.subr.bf16.mxu0 0
        %1770 = vmatpush1.bf16.msra.mxu0 0
        %1771 = vmatprep.subr.bf16.mxu0 0
        %1772 = vmatpush1.bf16.msra.mxu0 0
        %1773 = vmatprep.subr.bf16.mxu0 0
        %1774 = vmatpush1.bf16.msra.mxu0 0
        %1775 = vmatprep.subr.bf16.mxu0 0
        %1776 = vmatpush1.bf16.msra.mxu0 0
        %1777 = vmatprep.subr.bf16.mxu0 0
        %1778 = vmatpush1.bf16.msra.mxu0 0
        %1779 = vmatprep.subr.bf16.mxu0 0
        %1780 = vmatpush1.bf16.msra.mxu0 0
        %1781 = vmatprep.subr.bf16.mxu0 0
        %1782 = vmatpush1.bf16.msra.mxu0 0
        %1783 = vmatprep.subr.bf16.mxu0 0
        %1784 = vmatpush1.bf16.msra.mxu0 0
        %1785 = vmatprep.subr.bf16.mxu0 0
        %1786 = vmatpush1.bf16.msra.mxu0 0
        %1787 = vmatprep.subr.bf16.mxu0 0
        %1788 = vmatpush1.bf16.msra.mxu0 0
        %1789 = vmatprep.subr.bf16.mxu0 0
        %1790 = vmatpush1.bf16.msra.mxu0 0
        %1791 = vmatprep.subr.bf16.mxu0 0
        %1792 = vmatpush1.bf16.msra.mxu0 0
        %1793 = vmatprep.subr.bf16.mxu0 0
        %1794 = vmatpush1.bf16.msra.mxu0 0
        %1795 = vmatprep.subr.bf16.mxu0 0
        %1796 = vmatpush1.bf16.msra.mxu0 0
        %1797 = vmatprep.subr.bf16.mxu0 0
        %1798 = vmatpush1.bf16.msra.mxu0 0
        %1799 = vmatprep.mubr.bf16.mxu0 0
        %1800 = vmatmul.mubr.bf16.gmra.mrb[0].mxu0 %v1762
        %v1801 = vpop.f32.mrb[0].mxu0
        %v1802 = vadd.f32 0.0, %v1801
        %v1803 = vpop.f32.mrb[0].mxu0
        %v1804 = vpop.f32.mrb[0].mxu0
        %v1805 = vpop.f32.mrb[0].mxu0
        %1806 = vdwg.mxu0
        %1807 = vrot.lane.b32.xlu0 %v1022, 48
        %v1808 = vpop.permute.xlu0 %1807
        %v1810 = vsel %vm1026, %v1758, 0
        %v1813 = vsel %vm1155, %v1808, 0
        %1815 = vmatprep.subr.bf16.mxu0 0
        %1816 = vmatpush1.bf16.msra.mxu0 %v1813
        %1817 = vmatprep.subr.bf16.mxu0 0
        %1818 = vmatpush1.bf16.msra.mxu0 0
        %1819 = vmatprep.subr.bf16.mxu0 0
        %1820 = vmatpush1.bf16.msra.mxu0 0
        %1821 = vmatprep.subr.bf16.mxu0 0
        %1822 = vmatpush1.bf16.msra.mxu0 0
        %1823 = vmatprep.subr.bf16.mxu0 0
        %1824 = vmatpush1.bf16.msra.mxu0 0
        %1825 = vmatprep.subr.bf16.mxu0 0
        %1826 = vmatpush1.bf16.msra.mxu0 0
        %1827 = vmatprep.subr.bf16.mxu0 0
        %1828 = vmatpush1.bf16.msra.mxu0 0
        %1829 = vmatprep.subr.bf16.mxu0 0
        %1830 = vmatpush1.bf16.msra.mxu0 0
        %1831 = vmatprep.subr.bf16.mxu0 0
        %1832 = vmatpush1.bf16.msra.mxu0 0
        %1833 = vmatprep.subr.bf16.mxu0 0
        %1834 = vmatpush1.bf16.msra.mxu0 0
        %1835 = vmatprep.subr.bf16.mxu0 0
        %1836 = vmatpush1.bf16.msra.mxu0 0
        %1837 = vmatprep.subr.bf16.mxu0 0
        %1838 = vmatpush1.bf16.msra.mxu0 0
        %1839 = vmatprep.subr.bf16.mxu0 0
        %1840 = vmatpush1.bf16.msra.mxu0 0
        %1841 = vmatprep.subr.bf16.mxu0 0
        %1842 = vmatpush1.bf16.msra.mxu0 0
        %1843 = vmatprep.subr.bf16.mxu0 0
        %1844 = vmatpush1.bf16.msra.mxu0 0
        %1845 = vmatprep.subr.bf16.mxu0 0
        %1846 = vmatpush1.bf16.msra.mxu0 0
        %1847 = vmatprep.mubr.bf16.mxu0 0
        %1848 = vmatmul.mubr.bf16.gmra.mrb[0].mxu0 %v1810
        %v1849 = vpop.f32.mrb[0].mxu0
        %v1850 = vadd.f32 0.0, %v1849
        %v1851 = vpop.f32.mrb[0].mxu0
        %v1852 = vpop.f32.mrb[0].mxu0
        %v1853 = vpop.f32.mrb[0].mxu0
        %1854 = vdwg.mxu0
        %v1855 = vld [vmem:[%s884 + $0x10] sm:$0xff]
        %v1857 = vsel %vm1026, %v1802, 0
        %v1860 = vsel %vm1026, %v1850, 0
        %1862 = vmatprep.subr.mxu0 0.0
        %1863 = vmatpush1.msra.mxu0 %v1855
        %1864 = vmatprep.subr.mxu0 0.0
        %1865 = vmatpush1.msra.mxu0 0.0
        %1866 = vmatprep.subr.mxu0 0.0
        %1867 = vmatpush1.msra.mxu0 0.0
        %1868 = vmatprep.subr.mxu0 0.0
        %1869 = vmatpush1.msra.mxu0 0.0
        %1870 = vmatprep.subr.mxu0 0.0
        %1871 = vmatpush1.msra.mxu0 0.0
        %1872 = vmatprep.subr.mxu0 0.0
        %1873 = vmatpush1.msra.mxu0 0.0
        %1874 = vmatprep.subr.mxu0 0.0
        %1875 = vmatpush1.msra.mxu0 0.0
        %1876 = vmatprep.subr.mxu0 0.0
        %1877 = vmatpush1.msra.mxu0 0.0
        %1878 = vmatprep.subr.mxu0 0.0
        %1879 = vmatpush1.msra.mxu0 0.0
        %1880 = vmatprep.subr.mxu0 0.0
        %1881 = vmatpush1.msra.mxu0 0.0
        %1882 = vmatprep.subr.mxu0 0.0
        %1883 = vmatpush1.msra.mxu0 0.0
        %1884 = vmatprep.subr.mxu0 0.0
        %1885 = vmatpush1.msra.mxu0 0.0
        %1886 = vmatprep.subr.mxu0 0.0
        %1887 = vmatpush1.msra.mxu0 0.0
        %1888 = vmatprep.subr.mxu0 0.0
        %1889 = vmatpush1.msra.mxu0 0.0
        %1890 = vmatprep.subr.mxu0 0.0
        %1891 = vmatpush1.msra.mxu0 0.0
        %1892 = vmatprep.subr.mxu0 0.0
        %1893 = vmatpush1.msra.mxu0 0.0
        %1894 = vmatprep.subr.mxu0 0.0
        %1895 = vmatpush1.msra.mxu0 0.0
        %1896 = vmatprep.subr.mxu0 0.0
        %1897 = vmatpush1.msra.mxu0 0.0
        %1898 = vmatprep.subr.mxu0 0.0
        %1899 = vmatpush1.msra.mxu0 0.0
        %1900 = vmatprep.subr.mxu0 0.0
        %1901 = vmatpush1.msra.mxu0 0.0
        %1902 = vmatprep.subr.mxu0 0.0
        %1903 = vmatpush1.msra.mxu0 0.0
        %1904 = vmatprep.subr.mxu0 0.0
        %1905 = vmatpush1.msra.mxu0 0.0
        %1906 = vmatprep.subr.mxu0 0.0
        %1907 = vmatpush1.msra.mxu0 0.0
        %1908 = vmatprep.subr.mxu0 0.0
        %1909 = vmatpush1.msra.mxu0 0.0
        %1910 = vmatprep.subr.mxu0 0.0
        %1911 = vmatpush1.msra.mxu0 0.0
        %1912 = vmatprep.subr.mxu0 0.0
        %1913 = vmatpush1.msra.mxu0 0.0
        %1914 = vmatprep.subr.mxu0 0.0
        %1915 = vmatpush1.msra.mxu0 0.0
        %1916 = vmatprep.subr.mxu0 0.0
        %1917 = vmatpush1.msra.mxu0 0.0
        %1918 = vmatprep.subr.mxu0 0.0
        %1919 = vmatpush1.msra.mxu0 0.0
        %1920 = vmatprep.subr.mxu0 0.0
        %1921 = vmatpush1.msra.mxu0 0.0
        %1922 = vmatprep.subr.mxu0 0.0
        %1923 = vmatpush1.msra.mxu0 0.0
        %1924 = vmatprep.subr.mxu0 0.0
        %1925 = vmatpush1.msra.mxu0 0.0
        %1926 = vmatprep.mubr.f32.mxu0 0.0
        %1927 = vmatmul.mubr.f32.gmra.mrb[0].mxu0 %v1857
        %v1928 = vpop.f32.mrb[0].mxu0
        %v1929 = vadd.f32 0.0, %v1928
        %v1930 = vpop.f32.mrb[0].mxu0
        %1931 = vmatprep.mubr.f32.mxu0 0.0
        %1932 = vmatmul.mubr.f32.gmra.mrb[0].mxu0 %v1860
        %v1933 = vpop.f32.mrb[0].mxu0
        %v1934 = vadd.f32 0.0, %v1933
        %v1935 = vpop.f32.mrb[0].mxu0
        %1936 = vdwg.mxu0
        %v1937 = vadd.f32 %v1625, %v1929
        %v1938 = vadd.f32 %v1630, %v1934
        %1939 = vrot.lane.b32.xlu0 %v1021, 104
        %v1940 = vpop.permute.xlu0 %1939
        %1941 = vrot.lane.b32.xlu0 %v1021, 72
        %v1942 = vpop.permute.xlu0 %1941
        %v1944 = vsel %vm1026, %v1940, 0
        %v1947 = vsel %vm1026, %v1942, 0
        %1949 = vmatprep.subr.bf16.mxu0 0
        %1950 = vmatpush1.bf16.xpose.msra.mxu0 %v1947
        %1951 = vmatprep.subr.bf16.mxu0 0
        %1952 = vmatpush1.bf16.xpose.msra.mxu0 0
        %1953 = vmatprep.subr.bf16.mxu0 0
        %1954 = vmatpush1.bf16.xpose.msra.mxu0 0
        %1955 = vmatprep.subr.bf16.mxu0 0
        %1956 = vmatpush1.bf16.xpose.msra.mxu0 0
        %1957 = vmatprep.subr.bf16.mxu0 0
        %1958 = vmatpush1.bf16.xpose.msra.mxu0 0
        %1959 = vmatprep.subr.bf16.mxu0 0
        %1960 = vmatpush1.bf16.xpose.msra.mxu0 0
        %1961 = vmatprep.subr.bf16.mxu0 0
        %1962 = vmatpush1.bf16.xpose.msra.mxu0 0
        %1963 = vmatprep.subr.bf16.mxu0 0
        %1964 = vmatpush1.bf16.xpose.msra.mxu0 0
        %1965 = vmatprep.subr.bf16.mxu0 0
        %1966 = vmatpush1.bf16.xpose.msra.mxu0 0
        %1967 = vmatprep.subr.bf16.mxu0 0
        %1968 = vmatpush1.bf16.xpose.msra.mxu0 0
        %1969 = vmatprep.subr.bf16.mxu0 0
        %1970 = vmatpush1.bf16.xpose.msra.mxu0 0
        %1971 = vmatprep.subr.bf16.mxu0 0
        %1972 = vmatpush1.bf16.xpose.msra.mxu0 0
        %1973 = vmatprep.subr.bf16.mxu0 0
        %1974 = vmatpush1.bf16.xpose.msra.mxu0 0
        %1975 = vmatprep.subr.bf16.mxu0 0
        %1976 = vmatpush1.bf16.xpose.msra.mxu0 0
        %1977 = vmatprep.subr.bf16.mxu0 0
        %1978 = vmatpush1.bf16.xpose.msra.mxu0 0
        %1979 = vmatprep.subr.bf16.mxu0 0
        %1980 = vmatpush1.bf16.xpose.msra.mxu0 0
        %1981 = vmatprep.mubr.bf16.mxu0 0
        %1982 = vmatmul.mubr.bf16.gmra.mrb[0].mxu0 %v1944
        %v1983 = vpop.f32.mrb[0].mxu0
        %v1984 = vadd.f32 0.0, %v1983
        %v1985 = vpop.f32.mrb[0].mxu0
        %v1986 = vpop.f32.mrb[0].mxu0
        %v1987 = vpop.f32.mrb[0].mxu0
        %1988 = vdwg.mxu0
        %1989 = vrot.lane.b32.xlu0 %v1022, 104
        %v1990 = vpop.permute.xlu0 %1989
        %1991 = vrot.lane.b32.xlu0 %v1022, 72
        %v1992 = vpop.permute.xlu0 %1991
        %v1994 = vsel %vm1026, %v1990, 0
        %v1997 = vsel %vm1026, %v1992, 0
        %1999 = vmatprep.subr.bf16.mxu0 0
        %2000 = vmatpush1.bf16.xpose.msra.mxu0 %v1997
        %2001 = vmatprep.subr.bf16.mxu0 0
        %2002 = vmatpush1.bf16.xpose.msra.mxu0 0
        %2003 = vmatprep.subr.bf16.mxu0 0
        %2004 = vmatpush1.bf16.xpose.msra.mxu0 0
        %2005 = vmatprep.subr.bf16.mxu0 0
        %2006 = vmatpush1.bf16.xpose.msra.mxu0 0
        %2007 = vmatprep.subr.bf16.mxu0 0
        %2008 = vmatpush1.bf16.xpose.msra.mxu0 0
        %2009 = vmatprep.subr.bf16.mxu0 0
        %2010 = vmatpush1.bf16.xpose.msra.mxu0 0
        %2011 = vmatprep.subr.bf16.mxu0 0
        %2012 = vmatpush1.bf16.xpose.msra.mxu0 0
        %2013 = vmatprep.subr.bf16.mxu0 0
        %2014 = vmatpush1.bf16.xpose.msra.mxu0 0
        %2015 = vmatprep.subr.bf16.mxu0 0
        %2016 = vmatpush1.bf16.xpose.msra.mxu0 0
        %2017 = vmatprep.subr.bf16.mxu0 0
        %2018 = vmatpush1.bf16.xpose.msra.mxu0 0
        %2019 = vmatprep.subr.bf16.mxu0 0
        %2020 = vmatpush1.bf16.xpose.msra.mxu0 0
        %2021 = vmatprep.subr.bf16.mxu0 0
        %2022 = vmatpush1.bf16.xpose.msra.mxu0 0
        %2023 = vmatprep.subr.bf16.mxu0 0
        %2024 = vmatpush1.bf16.xpose.msra.mxu0 0
        %2025 = vmatprep.subr.bf16.mxu0 0
        %2026 = vmatpush1.bf16.xpose.msra.mxu0 0
        %2027 = vmatprep.subr.bf16.mxu0 0
        %2028 = vmatpush1.bf16.xpose.msra.mxu0 0
        %2029 = vmatprep.subr.bf16.mxu0 0
        %2030 = vmatpush1.bf16.xpose.msra.mxu0 0
        %2031 = vmatprep.mubr.bf16.mxu0 0
        %2032 = vmatmul.mubr.bf16.gmra.mrb[0].mxu0 %v1994
        %v2033 = vpop.f32.mrb[0].mxu0
        %v2034 = vadd.f32 0.0, %v2033
        %v2035 = vpop.f32.mrb[0].mxu0
        %v2036 = vpop.f32.mrb[0].mxu0
        %v2037 = vpop.f32.mrb[0].mxu0
        %2038 = vdwg.mxu0
        %v2039 = vsel %vm1123, %v1984, -1e+30
        %v2040 = vsel %vm1123, %v2034, -1e+30
        %v2041 = vsel %vm1026, %v2039, -inf
        %2042 = vmax.xlane.f32.xlu0 %v2041
        %v2043 = vpop.xlane.xlu0 %2042
        %v2044 = vsel %vm1026, %v2040, -inf
        %2045 = vmax.xlane.f32.xlu0 %v2044
        %v2046 = vpop.xlane.xlu0 %2045
        %v2047 = vsub.f32 %v2039, %v2043
        %v2048 = vsub.f32 %v2040, %v2046
        %v2049 = vmul.f32 %v2047, 1.442695
        %v2050 = vpow.pop %v2049
        %v2051 = vmul.f32 %v2048, 1.442695
        %v2052 = vpow.pop %v2051
        %v2053 = vsel %vm1026, %v2050, 0.0
        %2054 = vadd.xlane.f32.xlu0 %v2053
        %v2055 = vpop.xlane.xlu0 %2054
        %v2056 = vsel %vm1026, %v2052, 0.0
        %2057 = vadd.xlane.f32.xlu0 %v2056
        %v2058 = vpop.xlane.xlu0 %2057
        %v2059 = vrcp.pop %v2055
        %v2060 = vrcp.pop %v2058
        %v2061 = vmul.f32 %v2050, %v2059
        %v2062 = vmul.f32 %v2052, %v2060
        %v2063 = vpack.c.bf16 %v2061, %v2061
        %v2064 = vpack.c.bf16 %v2062, %v2062
        %2065 = vrot.lane.b32.xlu0 %v1021, 40
        %v2066 = vpop.permute.xlu0 %2065
        %v2068 = vsel %vm1026, %v2063, 0
        %v2071 = vsel %vm1155, %v2066, 0
        %2073 = vmatprep.subr.bf16.mxu0 0
        %2074 = vmatpush1.bf16.msra.mxu0 %v2071
        %2075 = vmatprep.subr.bf16.mxu0 0
        %2076 = vmatpush1.bf16.msra.mxu0 0
        %2077 = vmatprep.subr.bf16.mxu0 0
        %2078 = vmatpush1.bf16.msra.mxu0 0
        %2079 = vmatprep.subr.bf16.mxu0 0
        %2080 = vmatpush1.bf16.msra.mxu0 0
        %2081 = vmatprep.subr.bf16.mxu0 0
        %2082 = vmatpush1.bf16.msra.mxu0 0
        %2083 = vmatprep.subr.bf16.mxu0 0
        %2084 = vmatpush1.bf16.msra.mxu0 0
        %2085 = vmatprep.subr.bf16.mxu0 0
        %2086 = vmatpush1.bf16.msra.mxu0 0
        %2087 = vmatprep.subr.bf16.mxu0 0
        %2088 = vmatpush1.bf16.msra.mxu0 0
        %2089 = vmatprep.subr.bf16.mxu0 0
        %2090 = vmatpush1.bf16.msra.mxu0 0
        %2091 = vmatprep.subr.bf16.mxu0 0
        %2092 = vmatpush1.bf16.msra.mxu0 0
        %2093 = vmatprep.subr.bf16.mxu0 0
        %2094 = vmatpush1.bf16.msra.mxu0 0
        %2095 = vmatprep.subr.bf16.mxu0 0
        %2096 = vmatpush1.bf16.msra.mxu0 0
        %2097 = vmatprep.subr.bf16.mxu0 0
        %2098 = vmatpush1.bf16.msra.mxu0 0
        %2099 = vmatprep.subr.bf16.mxu0 0
        %2100 = vmatpush1.bf16.msra.mxu0 0
        %2101 = vmatprep.subr.bf16.mxu0 0
        %2102 = vmatpush1.bf16.msra.mxu0 0
        %2103 = vmatprep.subr.bf16.mxu0 0
        %2104 = vmatpush1.bf16.msra.mxu0 0
        %2105 = vmatprep.mubr.bf16.mxu0 0
        %2106 = vmatmul.mubr.bf16.gmra.mrb[0].mxu0 %v2068
        %v2107 = vpop.f32.mrb[0].mxu0
        %v2108 = vadd.f32 0.0, %v2107
        %v2109 = vpop.f32.mrb[0].mxu0
        %v2110 = vpop.f32.mrb[0].mxu0
        %v2111 = vpop.f32.mrb[0].mxu0
        %2112 = vdwg.mxu0
        %2113 = vrot.lane.b32.xlu0 %v1022, 40
        %v2114 = vpop.permute.xlu0 %2113
        %v2116 = vsel %vm1026, %v2064, 0
        %v2119 = vsel %vm1155, %v2114, 0
        %2121 = vmatprep.subr.bf16.mxu0 0
        %2122 = vmatpush1.bf16.msra.mxu0 %v2119
        %2123 = vmatprep.subr.bf16.mxu0 0
        %2124 = vmatpush1.bf16.msra.mxu0 0
        %2125 = vmatprep.subr.bf16.mxu0 0
        %2126 = vmatpush1.bf16.msra.mxu0 0
        %2127 = vmatprep.subr.bf16.mxu0 0
        %2128 = vmatpush1.bf16.msra.mxu0 0
        %2129 = vmatprep.subr.bf16.mxu0 0
        %2130 = vmatpush1.bf16.msra.mxu0 0
        %2131 = vmatprep.subr.bf16.mxu0 0
        %2132 = vmatpush1.bf16.msra.mxu0 0
        %2133 = vmatprep.subr.bf16.mxu0 0
        %2134 = vmatpush1.bf16.msra.mxu0 0
        %2135 = vmatprep.subr.bf16.mxu0 0
        %2136 = vmatpush1.bf16.msra.mxu0 0
        %2137 = vmatprep.subr.bf16.mxu0 0
        %2138 = vmatpush1.bf16.msra.mxu0 0
        %2139 = vmatprep.subr.bf16.mxu0 0
        %2140 = vmatpush1.bf16.msra.mxu0 0
        %2141 = vmatprep.subr.bf16.mxu0 0
        %2142 = vmatpush1.bf16.msra.mxu0 0
        %2143 = vmatprep.subr.bf16.mxu0 0
        %2144 = vmatpush1.bf16.msra.mxu0 0
        %2145 = vmatprep.subr.bf16.mxu0 0
        %2146 = vmatpush1.bf16.msra.mxu0 0
        %2147 = vmatprep.subr.bf16.mxu0 0
        %2148 = vmatpush1.bf16.msra.mxu0 0
        %2149 = vmatprep.subr.bf16.mxu0 0
        %2150 = vmatpush1.bf16.msra.mxu0 0
        %2151 = vmatprep.subr.bf16.mxu0 0
        %2152 = vmatpush1.bf16.msra.mxu0 0
        %2153 = vmatprep.mubr.bf16.mxu0 0
        %2154 = vmatmul.mubr.bf16.gmra.mrb[0].mxu0 %v2116
        %v2155 = vpop.f32.mrb[0].mxu0
        %v2156 = vadd.f32 0.0, %v2155
        %v2157 = vpop.f32.mrb[0].mxu0
        %v2158 = vpop.f32.mrb[0].mxu0
        %v2159 = vpop.f32.mrb[0].mxu0
        %2160 = vdwg.mxu0
        %v2161 = vld [vmem:[%s884 + $0x18] sm:$0xff]
        %v2163 = vsel %vm1026, %v2108, 0
        %v2166 = vsel %vm1026, %v2156, 0
        %2168 = vmatprep.subr.mxu0 0.0
        %2169 = vmatpush1.msra.mxu0 %v2161
        %2170 = vmatprep.subr.mxu0 0.0
        %2171 = vmatpush1.msra.mxu0 0.0
        %2172 = vmatprep.subr.mxu0 0.0
        %2173 = vmatpush1.msra.mxu0 0.0
        %2174 = vmatprep.subr.mxu0 0.0
        %2175 = vmatpush1.msra.mxu0 0.0
        %2176 = vmatprep.subr.mxu0 0.0
        %2177 = vmatpush1.msra.mxu0 0.0
        %2178 = vmatprep.subr.mxu0 0.0
        %2179 = vmatpush1.msra.mxu0 0.0
        %2180 = vmatprep.subr.mxu0 0.0
        %2181 = vmatpush1.msra.mxu0 0.0
        %2182 = vmatprep.subr.mxu0 0.0
        %2183 = vmatpush1.msra.mxu0 0.0
        %2184 = vmatprep.subr.mxu0 0.0
        %2185 = vmatpush1.msra.mxu0 0.0
        %2186 = vmatprep.subr.mxu0 0.0
        %2187 = vmatpush1.msra.mxu0 0.0
        %2188 = vmatprep.subr.mxu0 0.0
        %2189 = vmatpush1.msra.mxu0 0.0
        %2190 = vmatprep.subr.mxu0 0.0
        %2191 = vmatpush1.msra.mxu0 0.0
        %2192 = vmatprep.subr.mxu0 0.0
        %2193 = vmatpush1.msra.mxu0 0.0
        %2194 = vmatprep.subr.mxu0 0.0
        %2195 = vmatpush1.msra.mxu0 0.0
        %2196 = vmatprep.subr.mxu0 0.0
        %2197 = vmatpush1.msra.mxu0 0.0
        %2198 = vmatprep.subr.mxu0 0.0
        %2199 = vmatpush1.msra.mxu0 0.0
        %2200 = vmatprep.subr.mxu0 0.0
        %2201 = vmatpush1.msra.mxu0 0.0
        %2202 = vmatprep.subr.mxu0 0.0
        %2203 = vmatpush1.msra.mxu0 0.0
        %2204 = vmatprep.subr.mxu0 0.0
        %2205 = vmatpush1.msra.mxu0 0.0
        %2206 = vmatprep.subr.mxu0 0.0
        %2207 = vmatpush1.msra.mxu0 0.0
        %2208 = vmatprep.subr.mxu0 0.0
        %2209 = vmatpush1.msra.mxu0 0.0
        %2210 = vmatprep.subr.mxu0 0.0
        %2211 = vmatpush1.msra.mxu0 0.0
        %2212 = vmatprep.subr.mxu0 0.0
        %2213 = vmatpush1.msra.mxu0 0.0
        %2214 = vmatprep.subr.mxu0 0.0
        %2215 = vmatpush1.msra.mxu0 0.0
        %2216 = vmatprep.subr.mxu0 0.0
        %2217 = vmatpush1.msra.mxu0 0.0
        %2218 = vmatprep.subr.mxu0 0.0
        %2219 = vmatpush1.msra.mxu0 0.0
        %2220 = vmatprep.subr.mxu0 0.0
        %2221 = vmatpush1.msra.mxu0 0.0
        %2222 = vmatprep.subr.mxu0 0.0
        %2223 = vmatpush1.msra.mxu0 0.0
        %2224 = vmatprep.subr.mxu0 0.0
        %2225 = vmatpush1.msra.mxu0 0.0
        %2226 = vmatprep.subr.mxu0 0.0
        %2227 = vmatpush1.msra.mxu0 0.0
        %2228 = vmatprep.subr.mxu0 0.0
        %2229 = vmatpush1.msra.mxu0 0.0
        %2230 = vmatprep.subr.mxu0 0.0
        %2231 = vmatpush1.msra.mxu0 0.0
        %2232 = vmatprep.mubr.f32.mxu0 0.0
        %2233 = vmatmul.mubr.f32.gmra.mrb[0].mxu0 %v2163
        %v2234 = vpop.f32.mrb[0].mxu0
        %v2235 = vadd.f32 0.0, %v2234
        %v2236 = vpop.f32.mrb[0].mxu0
        %2237 = vmatprep.mubr.f32.mxu0 0.0
        %2238 = vmatmul.mubr.f32.gmra.mrb[0].mxu0 %v2166
        %v2239 = vpop.f32.mrb[0].mxu0
        %v2240 = vadd.f32 0.0, %v2239
        %v2241 = vpop.f32.mrb[0].mxu0
        %2242 = vdwg.mxu0
        %v2243 = vadd.f32 %v1937, %v2235
        %v2244 = vadd.f32 %v1938, %v2240
        %v2245 = vadd.f32 %v900, %v2243
        %v2246 = vadd.f32 %v901, %v2244
        %v2247 = vld [vmem:[%s741] sm:$0x1]
        %v2249 = vlaneseq
        %v2250 = vshrl.u32 %v2249, 7
        %v2251 = vsub.s32 0, %v2250
        %v2252 = vrot.slane %v2247, %v2251
        %v2254 = vadd.f32 %v2245, %v2252
        %v2255 = vadd.f32 %v2246, %v2252
        %v2256 = vld [vmem:[%s749] sm:$0x1]
        %v2257 = vld [vmem:[%s757] sm:$0x1]
        %v2258 = vsel %vm904, %v2254, 0.0
        %2259 = vadd.xlane.f32.xlu0 %v2258
        %v2260 = vpop.xlane.xlu0 %2259
        %v2261 = vsel %vm904, %v2255, 0.0
        %2262 = vadd.xlane.f32.xlu0 %v2261
        %v2263 = vpop.xlane.xlu0 %2262
        %v2264 = vmul.f32 %v2260, %v911
        %v2265 = vmul.f32 %v2263, %v911
        %v2266 = vsub.f32 %v2254, %v2264
        %v2267 = vsub.f32 %v2255, %v2265
        %v2268 = vmul.f32 %v2266, %v2266
        %v2269 = vmul.f32 %v2267, %v2267
        %v2270 = vsel %vm904, %v2268, 0.0
        %2271 = vadd.xlane.f32.xlu0 %v2270
        %v2272 = vpop.xlane.xlu0 %2271
        %v2273 = vsel %vm904, %v2269, 0.0
        %2274 = vadd.xlane.f32.xlu0 %v2273
        %v2275 = vpop.xlane.xlu0 %2274
        %v2276 = vmul.f32 %v2272, %v911
        %v2277 = vmul.f32 %v2275, %v911
        %v2278 = vadd.f32 %v2276, 1e-05
        %v2279 = vadd.f32 %v2277, 1e-05
        %v2280 = vrsqrt.pop %v2278
        %v2281 = vrsqrt.pop %v2279
        %v2282 = vmul.f32 %v2266, %v2280
        %v2283 = vmul.f32 %v2267, %v2281
        %v2285 = vlaneseq
        %v2286 = vshrl.u32 %v2285, 7
        %v2287 = vsub.s32 0, %v2286
        %v2288 = vrot.slane %v2256, %v2287
        %v2290 = vmul.f32 %v2282, %v2288
        %v2291 = vmul.f32 %v2283, %v2288
        %v2293 = vlaneseq
        %v2294 = vshrl.u32 %v2293, 7
        %v2295 = vsub.s32 0, %v2294
        %v2296 = vrot.slane %v2257, %v2295
        %v2298 = vadd.f32 %v2290, %v2296
        %v2299 = vadd.f32 %v2291, %v2296
        %v2300 = vpack.c.bf16 %v2299, %v2298
        %v2301 = vld [vmem:[%s766] sm:$0xf]
        %v2302 = vld [vmem:[%s766 + $0x4] sm:$0xf]
        %v2303 = vld [vmem:[%s766 + $0x8] sm:$0xf]
        %v2304 = vld [vmem:[%s766 + $0xc] sm:$0xf]
        %v2305 = vld [vmem:[%s774] sm:$0x1]
        %v2307 = vlaneseq
        %v2308 = vshrl.u32 %v2307, 7
        %v2309 = vsub.s32 0, %v2308
        %v2310 = vrot.slane %v2305, %v2309
        %v2316 = vunpack.c.l.b16 %v2301
        %v2317 = vunpack.c.l.b16 %v2302
        %v2318 = vunpack.c.l.b16 %v2303
        %v2319 = vunpack.c.l.b16 %v2304
        %v2320 = vpack.c.b16 %v2317, %v2316
        %v2321 = vpack.c.b16 %v2319, %v2318
        %v2325 = vsel %vm904, %v2300, 0
        %2327 = vmatprep.subr.bf16.mxu0 0
        %2328 = vmatpush1.bf16.msra.mxu0 %v2320
        %2329 = vmatprep.subr.bf16.mxu0 0
        %2330 = vmatpush1.bf16.msra.mxu0 %v2321
        %2331 = vmatprep.subr.bf16.mxu0 0
        %2332 = vmatpush1.bf16.msra.mxu0 0
        %2333 = vmatprep.subr.bf16.mxu0 0
        %2334 = vmatpush1.bf16.msra.mxu0 0
        %2335 = vmatprep.subr.bf16.mxu0 0
        %2336 = vmatpush1.bf16.msra.mxu0 0
        %2337 = vmatprep.subr.bf16.mxu0 0
        %2338 = vmatpush1.bf16.msra.mxu0 0
        %2339 = vmatprep.subr.bf16.mxu0 0
        %2340 = vmatpush1.bf16.msra.mxu0 0
        %2341 = vmatprep.subr.bf16.mxu0 0
        %2342 = vmatpush1.bf16.msra.mxu0 0
        %2343 = vmatprep.subr.bf16.mxu0 0
        %2344 = vmatpush1.bf16.msra.mxu0 0
        %2345 = vmatprep.subr.bf16.mxu0 0
        %2346 = vmatpush1.bf16.msra.mxu0 0
        %2347 = vmatprep.subr.bf16.mxu0 0
        %2348 = vmatpush1.bf16.msra.mxu0 0
        %2349 = vmatprep.subr.bf16.mxu0 0
        %2350 = vmatpush1.bf16.msra.mxu0 0
        %2351 = vmatprep.subr.bf16.mxu0 0
        %2352 = vmatpush1.bf16.msra.mxu0 0
        %2353 = vmatprep.subr.bf16.mxu0 0
        %2354 = vmatpush1.bf16.msra.mxu0 0
        %2355 = vmatprep.subr.bf16.mxu0 0
        %2356 = vmatpush1.bf16.msra.mxu0 0
        %2357 = vmatprep.subr.bf16.mxu0 0
        %2358 = vmatpush1.bf16.msra.mxu0 0
        %2359 = vmatprep.mubr.bf16.mxu0 0
        %2360 = vmatmul.mubr.bf16.gmra.mrb[0].mxu0 %v2325
        %v2361 = vpop.f32.mrb[0].mxu0
        %v2362 = vadd.f32 %v2310, %v2361
        %v2363 = vpop.f32.mrb[0].mxu0
        %v2364 = vpop.f32.mrb[0].mxu0
        %v2365 = vadd.f32 %v2310, %v2364
        %v2366 = vpop.f32.mrb[0].mxu0
        %2367 = vdwg.mxu0
        %v2368 = vmax.f32 %v2362, 0.0
        %v2369 = vmax.f32 %v2365, 0.0
        %v2370 = vpack.c.bf16 %v2369, %v2368
        %v2371 = vld [vmem:[%s889] sm:$0xf]
        %v2372 = vld [vmem:[%s889 + $0x4] sm:$0xf]
        %v2373 = vld [vmem:[%s889 + $0x8] sm:$0xf]
        %v2374 = vld [vmem:[%s889 + $0xc] sm:$0xf]
        %v2375 = vld [vmem:[%s889 + $0x10] sm:$0xf]
        %v2376 = vld [vmem:[%s889 + $0x14] sm:$0xf]
        %v2377 = vld [vmem:[%s889 + $0x18] sm:$0xf]
        %v2378 = vld [vmem:[%s889 + $0x1c] sm:$0xf]
        %v2379 = vld [vmem:[%s782] sm:$0x1]
        %v2381 = vlaneseq
        %v2382 = vshrl.u32 %v2381, 7
        %v2383 = vsub.s32 0, %v2382
        %v2384 = vrot.slane %v2379, %v2383
        %v2394 = vunpack.c.l.b16 %v2371
        %v2395 = vunpack.c.l.b16 %v2372
        %v2396 = vunpack.c.l.b16 %v2373
        %v2397 = vunpack.c.l.b16 %v2374
        %v2398 = vunpack.c.l.b16 %v2375
        %v2399 = vunpack.c.l.b16 %v2376
        %v2400 = vunpack.c.l.b16 %v2377
        %v2401 = vunpack.c.l.b16 %v2378
        %v2402 = vpack.c.b16 %v2395, %v2394
        %v2403 = vpack.c.b16 %v2397, %v2396
        %v2404 = vpack.c.b16 %v2399, %v2398
        %v2405 = vpack.c.b16 %v2401, %v2400
        %vm2410 = vcmask 523264
        %v2412 = vsel %vm2410, %v2370, 0
        %2414 = vmatprep.subr.bf16.mxu0 0
        %2415 = vmatpush1.bf16.msra.mxu0 %v2402
        %2416 = vmatprep.subr.bf16.mxu0 0
        %2417 = vmatpush1.bf16.msra.mxu0 %v2403
        %2418 = vmatprep.subr.bf16.mxu0 0
        %2419 = vmatpush1.bf16.msra.mxu0 %v2404
        %2420 = vmatprep.subr.bf16.mxu0 0
        %2421 = vmatpush1.bf16.msra.mxu0 %v2405
        %2422 = vmatprep.subr.bf16.mxu0 0
        %2423 = vmatpush1.bf16.msra.mxu0 0
        %2424 = vmatprep.subr.bf16.mxu0 0
        %2425 = vmatpush1.bf16.msra.mxu0 0
        %2426 = vmatprep.subr.bf16.mxu0 0
        %2427 = vmatpush1.bf16.msra.mxu0 0
        %2428 = vmatprep.subr.bf16.mxu0 0
        %2429 = vmatpush1.bf16.msra.mxu0 0
        %2430 = vmatprep.subr.bf16.mxu0 0
        %2431 = vmatpush1.bf16.msra.mxu0 0
        %2432 = vmatprep.subr.bf16.mxu0 0
        %2433 = vmatpush1.bf16.msra.mxu0 0
        %2434 = vmatprep.subr.bf16.mxu0 0
        %2435 = vmatpush1.bf16.msra.mxu0 0
        %2436 = vmatprep.subr.bf16.mxu0 0
        %2437 = vmatpush1.bf16.msra.mxu0 0
        %2438 = vmatprep.subr.bf16.mxu0 0
        %2439 = vmatpush1.bf16.msra.mxu0 0
        %2440 = vmatprep.subr.bf16.mxu0 0
        %2441 = vmatpush1.bf16.msra.mxu0 0
        %2442 = vmatprep.subr.bf16.mxu0 0
        %2443 = vmatpush1.bf16.msra.mxu0 0
        %2444 = vmatprep.subr.bf16.mxu0 0
        %2445 = vmatpush1.bf16.msra.mxu0 0
        %2446 = vmatprep.mubr.bf16.mxu0 0
        %2447 = vmatmul.mubr.bf16.gmra.mrb[0].mxu0 %v2412
        %v2448 = vpop.f32.mrb[0].mxu0
        %v2449 = vadd.f32 %v2384, %v2448
        %v2450 = vpop.f32.mrb[0].mxu0
        %v2451 = vpop.f32.mrb[0].mxu0
        %v2452 = vadd.f32 %v2384, %v2451
        %v2453 = vpop.f32.mrb[0].mxu0
        %2454 = vdwg.mxu0
        %v2455 = vadd.f32 %v2254, %v2449
        %v2456 = vadd.f32 %v2255, %v2452
        %2457 = vst.msk [vmem:[#allocation2] sm:$0xff] %vm904, %v2455
        %2458 = vst.msk [vmem:[#allocation2 + $0x8] sm:$0xff] %vm904, %v2456
        %p2459 = scmp.eq.s32.totalorder %s45, 1
        // Predicated region
        $region133: #{tpu_custom_call.1} parent=87 // pred_check
          %p2460 = pneg %p2459
        $region134: #{tpu_custom_call.1} parent=87 // pred_check_branch
          %2462 = sbr.rel (%p2460) target = $region136
        $region135: #{tpu_custom_call.1} parent=87 // pred_region
          %v2463 = vld [vmem:[%s13] sm:$0x1]
          %v2464 = vld [vmem:[%s14] sm:$0x1]
          %v2465 = vsel %vm904, %v2455, 0.0
          %2466 = vadd.xlane.f32.xlu0 %v2465
          %v2467 = vpop.xlane.xlu0 %2466
          %v2468 = vsel %vm904, %v2456, 0.0
          %2469 = vadd.xlane.f32.xlu0 %v2468
          %v2470 = vpop.xlane.xlu0 %2469
          %v2471 = vmul.f32 %v2467, %v911
          %v2472 = vmul.f32 %v2470, %v911
          %v2473 = vsub.f32 %v2455, %v2471
          %v2474 = vsub.f32 %v2456, %v2472
          %v2475 = vmul.f32 %v2473, %v2473
          %v2476 = vmul.f32 %v2474, %v2474
          %v2477 = vsel %vm904, %v2475, 0.0
          %2478 = vadd.xlane.f32.xlu0 %v2477
          %v2479 = vpop.xlane.xlu0 %2478
          %v2480 = vsel %vm904, %v2476, 0.0
          %2481 = vadd.xlane.f32.xlu0 %v2480
          %v2482 = vpop.xlane.xlu0 %2481
          %v2483 = vmul.f32 %v2479, %v911
          %v2484 = vmul.f32 %v2482, %v911
          %v2485 = vadd.f32 %v2483, 1e-05
          %v2486 = vadd.f32 %v2484, 1e-05
          %v2487 = vrsqrt.pop %v2485
          %v2488 = vrsqrt.pop %v2486
          %v2489 = vmul.f32 %v2473, %v2487
          %v2490 = vmul.f32 %v2474, %v2488
          %v2492 = vlaneseq
          %v2493 = vshrl.u32 %v2492, 7
          %v2494 = vsub.s32 0, %v2493
          %v2495 = vrot.slane %v2463, %v2494
          %v2497 = vmul.f32 %v2489, %v2495
          %v2498 = vmul.f32 %v2490, %v2495
          %v2500 = vlaneseq
          %v2501 = vshrl.u32 %v2500, 7
          %v2502 = vsub.s32 0, %v2501
          %v2503 = vrot.slane %v2464, %v2502
          %v2505 = vadd.f32 %v2497, %v2503
          %v2506 = vadd.f32 %v2498, %v2503
          %v2507 = vpack.c.bf16 %v2506, %v2505
          %v2508 = vld [vmem:[%s15] sm:$0xf]
          %v2509 = vld [vmem:[%s15 + $0x4] sm:$0xf]
          %v2510 = vld [vmem:[%s15 + $0x8] sm:$0xf]
          %v2511 = vld [vmem:[%s15 + $0xc] sm:$0xf]
          %v2512 = vld [vmem:[%s16] sm:$0x1]
          %v2514 = vlaneseq
          %v2515 = vshrl.u32 %v2514, 7
          %v2516 = vsub.s32 0, %v2515
          %v2517 = vrot.slane %v2512, %v2516
          %v2523 = vunpack.c.l.b16 %v2508
          %v2524 = vunpack.c.l.b16 %v2509
          %v2525 = vunpack.c.l.b16 %v2510
          %v2526 = vunpack.c.l.b16 %v2511
          %v2527 = vpack.c.b16 %v2524, %v2523
          %v2528 = vpack.c.b16 %v2526, %v2525
          %v2532 = vsel %vm904, %v2507, 0
          %2534 = vmatprep.subr.bf16.mxu0 0
          %2535 = vmatpush1.bf16.msra.mxu0 %v2527
          %2536 = vmatprep.subr.bf16.mxu0 0
          %2537 = vmatpush1.bf16.msra.mxu0 %v2528
          %2538 = vmatprep.subr.bf16.mxu0 0
          %2539 = vmatpush1.bf16.msra.mxu0 0
          %2540 = vmatprep.subr.bf16.mxu0 0
          %2541 = vmatpush1.bf16.msra.mxu0 0
          %2542 = vmatprep.subr.bf16.mxu0 0
          %2543 = vmatpush1.bf16.msra.mxu0 0
          %2544 = vmatprep.subr.bf16.mxu0 0
          %2545 = vmatpush1.bf16.msra.mxu0 0
          %2546 = vmatprep.subr.bf16.mxu0 0
          %2547 = vmatpush1.bf16.msra.mxu0 0
          %2548 = vmatprep.subr.bf16.mxu0 0
          %2549 = vmatpush1.bf16.msra.mxu0 0
          %2550 = vmatprep.subr.bf16.mxu0 0
          %2551 = vmatpush1.bf16.msra.mxu0 0
          %2552 = vmatprep.subr.bf16.mxu0 0
          %2553 = vmatpush1.bf16.msra.mxu0 0
          %2554 = vmatprep.subr.bf16.mxu0 0
          %2555 = vmatpush1.bf16.msra.mxu0 0
          %2556 = vmatprep.subr.bf16.mxu0 0
          %2557 = vmatpush1.bf16.msra.mxu0 0
          %2558 = vmatprep.subr.bf16.mxu0 0
          %2559 = vmatpush1.bf16.msra.mxu0 0
          %2560 = vmatprep.subr.bf16.mxu0 0
          %2561 = vmatpush1.bf16.msra.mxu0 0
          %2562 = vmatprep.subr.bf16.mxu0 0
          %2563 = vmatpush1.bf16.msra.mxu0 0
          %2564 = vmatprep.subr.bf16.mxu0 0
          %2565 = vmatpush1.bf16.msra.mxu0 0
          %2566 = vmatprep.mubr.bf16.mxu0 0
          %2567 = vmatmul.mubr.bf16.gmra.mrb[0].mxu0 %v2532
          %v2568 = vpop.f32.mrb[0].mxu0
          %v2569 = vadd.f32 %v2517, %v2568
          %v2570 = vpop.f32.mrb[0].mxu0
          %v2571 = vpop.f32.mrb[0].mxu0
          %v2572 = vadd.f32 %v2517, %v2571
          %v2573 = vpop.f32.mrb[0].mxu0
          %2574 = vdwg.mxu0
          %2575 = vst.msk [vmem:[#allocation20] sm:$0xff] %vm2410, %v2569
          %2576 = vst.msk [vmem:[#allocation20 + $0x8] sm:$0xff] %vm2410, %v2572
        $region136: #{tpu_custom_call.1} parent=87 // pred_fallthru
          _
        // Predicated region
        $region137: #{tpu_custom_call.1} parent=87 // pred_check
          %p2577 = pneg %p475
        $region138: #{tpu_custom_call.1} parent=87 // pred_check_branch
          %2579 = sbr.rel (%p2577) target = $region140
        $region139: #{tpu_custom_call.1} parent=87 // pred_region
          %s2581 = ssub.s32 256, 256
          %2582 = vsyncadd [#allocation5], %s2581
          %s2583 = sshll.u32 [#allocation20], 4
          %s2584 = int_to_ptr.vmem [resolvable:$true] %s2583
          %2589 = dma.vmem_to_hbm [thread:$0]  %s2584, 256, %s17, [#allocation5], 128, 128, 8
        $region140: #{tpu_custom_call.1} parent=87 // pred_fallthru
          _
        // Predicated region
        $region141: #{tpu_custom_call.1} parent=87 // pred_check
          %p2590 = pneg %p475
        $region142: #{tpu_custom_call.1} parent=87 // pred_check_branch
          %2592 = sbr.rel (%p2590) target = $region144
        $region143: #{tpu_custom_call.1} parent=87 // pred_region
          %2593 = dma.done [#allocation5], 256
        $region144: #{tpu_custom_call.1} parent=87 // pred_fallthru
          _
      $region88: #{tpu_custom_call.1} parent=5 // pred_fallthru
        _
      %p2594 = scmp.le.s32.totalorder 2, %s40
      // Predicated region
      $region145: #{tpu_custom_call.1} parent=5 // pred_check
        %p2595 = pneg %p2594
      $region146: #{tpu_custom_call.1} parent=5 // pred_check_branch
        %2597 = sbr.rel (%p2595) target = $region148
      $region147: #{tpu_custom_call.1} parent=5 // pred_region
        %s2598 = ssub.s32 %s40, 2
      $region148: #{tpu_custom_call.1} parent=5 // pred_fallthru
        _
    $region6: #{tpu_custom_call.1} parent=1 // loop_footer
      %s44 = sadd.s32 1, %s40
    $region7: #{tpu_custom_call.1} parent=1 // loop_footer_branch
      %39 = sbr.rel target = $region3
    $region8: #{tpu_custom_call.1} parent=1 // loop_exit
      _
    %2599 = vsyncpa [#allocation4], 1
    %s2600 = scalar_lea.sflag [#allocation4], 1
    %2601 = vsyncpa %s2600, 1
    %2602 = vsyncpa [#allocation7], 1
    %s2603 = scalar_lea.sflag [#allocation7], 1
    %2604 = vsyncpa %s2603, 1
    %2605 = vsyncpa [#allocation10], 1
    %s2606 = scalar_lea.sflag [#allocation10], 1
    %2607 = vsyncpa %s2606, 1
    %2608 = vsyncpa [#allocation13], 1
    %s2609 = scalar_lea.sflag [#allocation13], 1
    %2610 = vsyncpa %s2609, 1
    %2611 = vsyncpa [#allocation16], 1
    %s2612 = scalar_lea.sflag [#allocation16], 1
    %2613 = vsyncpa %s2612, 1
    %2614 = vsyncpa [#allocation19], 1
    %s2615 = scalar_lea.sflag [#allocation19], 1
    %2616 = vsyncpa %s2615, 1
    %2617 = vsyncpa [#allocation5], 1
    %s2618 = scalar_lea.sflag [#allocation5], 1
    %2619 = vsyncpa %s2618, 1

</llo_original>
